<compile_context>
chip_gen: v7x
topology: tpu7x:2x2x1
jax: 0.10.0
libtpu: 0.0.40
codegen_flags: <defaults>
</compile_context>

<pallas_src>
import numpy as np
import jax
import jax.numpy as jnp
from jax import lax
from jax.experimental import pallas as pl
from jax.experimental.pallas import tpu as pltpu

# ---- synthetic "small BERT" config (base_enc_hidden_size=768 scaled down) ----
VOCAB = 1000
MAX_POS = 128
D = 128           # hidden size
H = 2             # attention heads
DH = D // H       # head dim (64, lane-aligned slice width)
FFN = 256         # intermediate size
LAYERS = 2
LN_EPS = 1e-12    # BERT LayerNorm eps
ATTN_SCALE = 1.0 / float(np.sqrt(DH))

# Packed small-parameter layout: every offset is a multiple of 128 (lane-aligned slices).
_PARAM_SIZES = (
    ("bqkv", 3 * D), ("bo", D), ("b1", FFN), ("b2", D),
    ("ln1_g", D), ("ln1_b", D), ("ln2_g", D), ("ln2_b", D),
)
_PARAM_OFF = {}
_off = 0
for _n, _s in _PARAM_SIZES:
    _PARAM_OFF[_n] = (_off, _off + _s)
    _off += _s
P_PACK = _off                      # 1408 = 11 * 128


# --------------------------- fused encoder kernel -----------------------------

def _layernorm(x, g, b):
    mu = jnp.mean(x, axis=-1, keepdims=True)
    xc = x - mu
    var = jnp.mean(xc * xc, axis=-1, keepdims=True)
    return xc * lax.rsqrt(var + LN_EPS) * g + b


def _encoder_kernel(x_emb_ref, bias_ref, emb_ln_ref,
                    wqkv_ref, wo_ref, w1_ref, w2_ref, par_ref, o_ref):
    bias = bias_ref[...]                                             # [1, S] f32

    # embedding LayerNorm (emb_ln rows: 0 = gamma, 1 = beta)
    x = _layernorm(x_emb_ref[...], emb_ln_ref[0:1, :], emb_ln_ref[1:2, :])

    for l in range(LAYERS):            # static unroll; all weights VMEM-resident
        def par(name, _l=l):
            lo, hi = _PARAM_OFF[name]
            return par_ref[_l, :, lo:hi]                             # [1, size] f32

        # ---- fused QKV projection (ATTN_SCALE pre-folded into the Q slab) ----
        qkv = jnp.dot(x.astype(jnp.bfloat16), wqkv_ref[l],
                      preferred_element_type=jnp.float32) + par("bqkv")   # [S, 3D]

        # ---- multi-head attention; per-head partial WO dots accumulated in f32 ----
        attn = par("bo")                                             # [1, D] broadcast
        for h in range(H):                                           # static unroll
            q = qkv[:, h * DH:(h + 1) * DH].astype(jnp.bfloat16)
            k = qkv[:, D + h * DH:D + (h + 1) * DH].astype(jnp.bfloat16)
            v = qkv[:, 2 * D + h * DH:2 * D + (h + 1) * DH].astype(jnp.bfloat16)
            s = lax.dot_general(q, k, (((1,), (1,)), ((), ())),
                                preferred_element_type=jnp.float32)  # [S, S]
            s = s + bias                      # mask bias broadcast over query rows
            m = jnp.max(s, axis=-1, keepdims=True)
            e = jnp.exp(s - m)
            p = e * pl.reciprocal(jnp.sum(e, axis=-1, keepdims=True), approx=True)
            ctx = jnp.dot(p.astype(jnp.bfloat16), v,
                          preferred_element_type=jnp.float32)        # [S, DH]
            attn = attn + jnp.dot(ctx.astype(jnp.bfloat16),
                                  wo_ref[l, h * DH:(h + 1) * DH, :],
                                  preferred_element_type=jnp.float32)
        x = _layernorm(attn + x, par("ln1_g"), par("ln1_b"))

        # ---- FFN ----
        h1 = jnp.dot(x.astype(jnp.bfloat16), w1_ref[l],
                     preferred_element_type=jnp.float32) + par("b1")
        # TODO(synk): BERT uses exact erf-GELU; tanh approximation used here.
        h1 = jax.nn.gelu(h1, approximate=True)
        h2 = jnp.dot(h1.astype(jnp.bfloat16), w2_ref[l],
                     preferred_element_type=jnp.float32) + par("b2")
        x = _layernorm(h2 + x, par("ln2_g"), par("ln2_b"))

    o_ref[...] = x                                                   # [S, D], once


# --------------------------- model (glue + kernel) ----------------------------

def init_params(key):
    keys = iter(jax.random.split(key, 64))

    def nrm(shape):
        return 0.02 * jax.random.normal(next(keys), shape, jnp.float32)

    # fused QKV weight; fold attention scale 1/sqrt(DH) into the Q slab at init time
    wqkv = nrm((LAYERS, D, 3 * D))
    bqkv = nrm((LAYERS, 3 * D))
    wqkv = wqkv.at[:, :, :D].multiply(ATTN_SCALE)
    bqkv = bqkv.at[:, :D].multiply(ATTN_SCALE)

    small = {
        "bqkv": bqkv,
        "bo": nrm((LAYERS, D)),
        "b1": nrm((LAYERS, FFN)),
        "b2": nrm((LAYERS, D)),
        "ln1_g": jnp.ones((LAYERS, D), jnp.float32),
        "ln1_b": jnp.zeros((LAYERS, D), jnp.float32),
        "ln2_g": jnp.ones((LAYERS, D), jnp.float32),
        "ln2_b": jnp.zeros((LAYERS, D), jnp.float32),
    }
    # pack the tiny per-layer params into one [LAYERS, 1, P_PACK] slab (single DMA)
    packed = jnp.concatenate([small[n] for n, _ in _PARAM_SIZES],
                             axis=-1).reshape(LAYERS, 1, P_PACK)
    assert packed.shape[-1] == P_PACK and P_PACK % 128 == 0

    return {
        "word_emb": nrm((VOCAB, D)),
        "pos_emb": nrm((MAX_POS, D)),
        "type_emb": nrm((2, D)),
        "emb_ln": jnp.concatenate([jnp.ones((1, D), jnp.float32),
                                   jnp.zeros((1, D), jnp.float32)], axis=0),  # [2,D]
        "wqkv": wqkv.astype(jnp.bfloat16),             # [L, D, 3D]
        "wo": nrm((LAYERS, D, D)).astype(jnp.bfloat16),
        "w1": nrm((LAYERS, D, FFN)).astype(jnp.bfloat16),
        "w2": nrm((LAYERS, FFN, D)).astype(jnp.bfloat16),
        "params_packed": packed,                        # [L, 1, P_PACK] f32
    }


def bert_forward(params, token_ids, att_mask):
    S = token_ids.shape[0]
    # glue: embedding lookup (gather) + position + type embeddings
    x_emb = (params["word_emb"][token_ids]
             + params["pos_emb"][:S]
             + params["type_emb"][0][None, :])
    # mask bias hoisted out of the layer loop (layer-invariant), kept in f32
    mask_bias = (att_mask.astype(jnp.float32) - 1.0).reshape(1, S) * 10000.0

    vmem_specs = [pl.BlockSpec(memory_space=pltpu.MemorySpace.VMEM) for _ in range(8)]
    return pl.pallas_call(
        _encoder_kernel,
        out_shape=jax.ShapeDtypeStruct((S, D), jnp.float32),
        in_specs=vmem_specs,
        out_specs=pl.BlockSpec(memory_space=pltpu.MemorySpace.VMEM),
        compiler_params=pltpu.CompilerParams(
            vmem_limit_bytes=32 * 1024 * 1024,          # ample headroom on v5e/v6e/v7x
        ),
    )(x_emb, mask_bias, params["emb_ln"],
      params["wqkv"], params["wo"], params["w1"], params["w2"],
      params["params_packed"])


def spider_encoder_forward(params, token_ids, att_mask,
                           q_idx, col_idx, col_idx2, tab_idx, tab_idx2):
    plm = bert_forward(params, token_ids, att_mask)            # [S, D]

    # index_select-style gathers + 'avg' header summary: a few KB, pure jnp
    q_enc = plm[q_idx]
    col_enc = (plm[col_idx] + plm[col_idx2]) * 0.5
    tab_enc = (plm[tab_idx] + plm[tab_idx2]) * 0.5

    # rat_update: unsqueeze(1) then NoOpUpdate.forward_unbatched transposes (0,1)
    # -> shapes [1, n, D]
    return q_enc[None, :, :], col_enc[None, :, :], tab_enc[None, :, :]


# --------------------------- driver ------------------------------------------

if __name__ == "__main__":
    key = jax.random.PRNGKey(0)
    pkey, tkey = jax.random.split(key)
    params = init_params(pkey)

    # synthetic tokenization: question = [CLS] + 8 tokens + [SEP]
    q_len = 10                       # q_b
    col_lens = [3, 4, 3, 4]          # 4 columns
    tab_lens = [5, 5, 6]             # 3 tables
    S_raw = q_len + sum(col_lens) + sum(tab_lens)          # 40
    S = int(np.ceil(S_raw / 128) * 128)                    # lane-dense pad -> 128
    assert S <= MAX_POS

    real_ids = jax.random.randint(tkey, (S_raw,), 5, VOCAB, dtype=jnp.int32)
    token_ids = jnp.zeros((S,), jnp.int32).at[:S_raw].set(real_ids)
    att_mask = jnp.zeros((S,), jnp.int32).at[:S_raw].set(1)   # 1=keep, 0=pad

    # index bookkeeping, exactly as in the PyTorch forward
    q_b = q_len
    col_b = q_b + sum(col_lens)
    question_indexes = list(range(q_b))[1:-1]
    column_indexes = np.cumsum([q_b] + col_lens[:-1]).tolist()
    table_indexes = np.cumsum([col_b] + tab_lens[:-1]).tolist()
    column_indexes_2 = np.cumsum([q_b - 2] + col_lens).tolist()[1:]
    table_indexes_2 = np.cumsum([col_b - 2] + tab_lens).tolist()[1:]
    assert all(i2 >= i1 for i1, i2 in zip(column_indexes, column_indexes_2))
    assert all(i2 >= i1 for i1, i2 in zip(table_indexes, table_indexes_2))

    q_idx = jnp.asarray(question_indexes, jnp.int32)
    col_idx = jnp.asarray(column_indexes, jnp.int32)
    col_idx2 = jnp.asarray(column_indexes_2, jnp.int32)
    tab_idx = jnp.asarray(table_indexes, jnp.int32)
    tab_idx2 = jnp.asarray(table_indexes_2, jnp.int32)

    fwd = jax.jit(spider_encoder_forward)
    q_enc, c_enc, t_enc = fwd(params, token_ids, att_mask,
                              q_idx, col_idx, col_idx2, tab_idx, tab_idx2)
    jax.block_until_ready((q_enc, c_enc, t_enc))

    assert q_enc.shape == (1, len(question_indexes), D)
    assert c_enc.shape == (1, len(col_lens), D)
    assert t_enc.shape == (1, len(tab_lens), D)
    assert jnp.all(jnp.isfinite(q_enc)) and jnp.all(jnp.isfinite(c_enc)) \
        and jnp.all(jnp.isfinite(t_enc))

    print("KERNEL_OK")
</pallas_src>

<mosaic_0001>
module attributes {stable_mosaic.version = 11 : i64} {
  func.func @_encoder_kernel(%arg0: memref<128x128xf32, #tpu.memory_space<vmem>>, %arg1: memref<1x128xf32, #tpu.memory_space<vmem>>, %arg2: memref<2x128xf32, #tpu.memory_space<vmem>>, %arg3: memref<2x128x384xbf16, #tpu.memory_space<vmem>>, %arg4: memref<2x128x128xbf16, #tpu.memory_space<vmem>>, %arg5: memref<2x128x256xbf16, #tpu.memory_space<vmem>>, %arg6: memref<2x256x128xbf16, #tpu.memory_space<vmem>>, %arg7: memref<2x1x1408xf32, #tpu.memory_space<vmem>>, %arg8: memref<128x128xf32, #tpu.memory_space<vmem>>) attributes {dimension_semantics = [], scalar_prefetch = 0 : i64, scratch_operands = 0 : i64, tpu.core_type = #tpu.core_type<tc>} {
    %c0 = arith.constant 0 : index
    %c0_0 = arith.constant 0 : index
    %0 = vector.load %arg1[%c0, %c0_0] : memref<1x128xf32, #tpu.memory_space<vmem>>, vector<1x128xf32>
    %c0_1 = arith.constant 0 : index
    %c0_2 = arith.constant 0 : index
    %1 = vector.load %arg0[%c0_1, %c0_2] : memref<128x128xf32, #tpu.memory_space<vmem>>, vector<128x128xf32>
    %c0_3 = arith.constant 0 : index
    %c0_4 = arith.constant 0 : index
    %2 = vector.load %arg2[%c0_3, %c0_4] : memref<2x128xf32, #tpu.memory_space<vmem>>, vector<1x128xf32>
    %c1 = arith.constant 1 : index
    %c0_5 = arith.constant 0 : index
    %3 = vector.load %arg2[%c1, %c0_5] : memref<2x128xf32, #tpu.memory_space<vmem>>, vector<1x128xf32>
    %cst = arith.constant dense<0.000000e+00> : vector<128xf32>
    %4 = vector.multi_reduction <add>, %1, %cst [1] : vector<128x128xf32> to vector<128xf32>
    %5 = vector.shape_cast %4 : vector<128xf32> to vector<128x1xf32>
    %cst_6 = arith.constant 1.280000e+02 : f32
    %6 = vector.broadcast %cst_6 : f32 to vector<128x1xf32>
    %7 = arith.divf %5, %6 : vector<128x1xf32>
    %8 = vector.broadcast %7 : vector<128x1xf32> to vector<128x128xf32>
    %9 = arith.subf %1, %8 : vector<128x128xf32>
    %10 = arith.mulf %9, %9 : vector<128x128xf32>
    %cst_7 = arith.constant dense<0.000000e+00> : vector<128xf32>
    %11 = vector.multi_reduction <add>, %10, %cst_7 [1] : vector<128x128xf32> to vector<128xf32>
    %12 = vector.shape_cast %11 : vector<128xf32> to vector<128x1xf32>
    %cst_8 = arith.constant 1.280000e+02 : f32
    %13 = vector.broadcast %cst_8 : f32 to vector<128x1xf32>
    %14 = arith.divf %12, %13 : vector<128x1xf32>
    %cst_9 = arith.constant 9.99999996E-13 : f32
    %15 = vector.broadcast %cst_9 : f32 to vector<128x1xf32>
    %16 = arith.addf %14, %15 : vector<128x1xf32>
    %17 = math.rsqrt %16 : vector<128x1xf32>
    %18 = vector.broadcast %17 : vector<128x1xf32> to vector<128x128xf32>
    %19 = arith.mulf %9, %18 : vector<128x128xf32>
    %20 = vector.broadcast %2 : vector<1x128xf32> to vector<128x128xf32>
    %21 = arith.mulf %19, %20 : vector<128x128xf32>
    %22 = vector.broadcast %3 : vector<1x128xf32> to vector<128x128xf32>
    %23 = arith.addf %21, %22 : vector<128x128xf32>
    %24 = arith.truncf %23 : vector<128x128xf32> to vector<128x128xbf16>
    %c0_10 = arith.constant 0 : index
    %c0_11 = arith.constant 0 : index
    %c0_12 = arith.constant 0 : index
    %25 = vector.load %arg3[%c0_10, %c0_11, %c0_12] : memref<2x128x384xbf16, #tpu.memory_space<vmem>>, vector<1x128x384xbf16>
    %26 = vector.shape_cast %25 : vector<1x128x384xbf16> to vector<128x384xbf16>
    %cst_13 = arith.constant dense<0.000000e+00> : vector<128x384xf32>
    %27 = tpu.matmul %24, %26, %cst_13 {dimension_numbers = #tpu.dot_dimension_numbers<[1], [0], [0], [1], [0, 0, 1, 1], [], []>} : vector<128x128xbf16>, vector<128x384xbf16>, vector<128x384xf32> -> vector<128x384xf32>
    %c0_14 = arith.constant 0 : index
    %c0_15 = arith.constant 0 : index
    %c0_16 = arith.constant 0 : index
    %28 = vector.load %arg7[%c0_14, %c0_15, %c0_16] : memref<2x1x1408xf32, #tpu.memory_space<vmem>>, vector<1x1x384xf32>
    %29 = vector.shape_cast %28 : vector<1x1x384xf32> to vector<1x384xf32>
    %30 = vector.broadcast %29 : vector<1x384xf32> to vector<128x384xf32>
    %31 = arith.addf %27, %30 : vector<128x384xf32>
    %c0_17 = arith.constant 0 : index
    %c0_18 = arith.constant 0 : index
    %c384 = arith.constant 384 : index
    %32 = vector.load %arg7[%c0_17, %c0_18, %c384] : memref<2x1x1408xf32, #tpu.memory_space<vmem>>, vector<1x1x128xf32>
    %33 = vector.shape_cast %32 : vector<1x1x128xf32> to vector<1x128xf32>
    %34 = vector.extract_strided_slice %31 {offsets = [0, 0], sizes = [128, 64], strides = [1, 1]} : vector<128x384xf32> to vector<128x64xf32>
    %35 = arith.truncf %34 : vector<128x64xf32> to vector<128x64xbf16>
    %36 = vector.extract_strided_slice %31 {offsets = [0, 128], sizes = [128, 64], strides = [1, 1]} : vector<128x384xf32> to vector<128x64xf32>
    %37 = arith.truncf %36 : vector<128x64xf32> to vector<128x64xbf16>
    %38 = vector.extract_strided_slice %31 {offsets = [0, 256], sizes = [128, 64], strides = [1, 1]} : vector<128x384xf32> to vector<128x64xf32>
    %39 = arith.truncf %38 : vector<128x64xf32> to vector<128x64xbf16>
    %cst_19 = arith.constant dense<0.000000e+00> : vector<128x128xf32>
    %40 = tpu.matmul %35, %37, %cst_19 {dimension_numbers = #tpu.dot_dimension_numbers<[1], [1], [0], [0], [0, 0, 1, 0], [], []>} : vector<128x64xbf16>, vector<128x64xbf16>, vector<128x128xf32> -> vector<128x128xf32>
    %41 = vector.broadcast %0 : vector<1x128xf32> to vector<128x128xf32>
    %42 = arith.addf %40, %41 : vector<128x128xf32>
    %cst_20 = arith.constant dense<0xFF800000> : vector<128xf32>
    %43 = vector.multi_reduction <maximumf>, %42, %cst_20 [1] : vector<128x128xf32> to vector<128xf32>
    %44 = vector.shape_cast %43 : vector<128xf32> to vector<128x1xf32>
    %45 = vector.broadcast %44 : vector<128x1xf32> to vector<128x128xf32>
    %46 = arith.subf %42, %45 : vector<128x128xf32>
    %47 = math.exp %46 : vector<128x128xf32>
    %cst_21 = arith.constant dense<0.000000e+00> : vector<128xf32>
    %48 = vector.multi_reduction <add>, %47, %cst_21 [1] : vector<128x128xf32> to vector<128xf32>
    %49 = vector.shape_cast %48 : vector<128xf32> to vector<128x1xf32>
    %50 = tpu.reciprocal %49 {approx = true} : vector<128x1xf32> -> vector<128x1xf32>
    %51 = vector.broadcast %50 : vector<128x1xf32> to vector<128x128xf32>
    %52 = arith.mulf %47, %51 : vector<128x128xf32>
    %53 = arith.truncf %52 : vector<128x128xf32> to vector<128x128xbf16>
    %cst_22 = arith.constant dense<0.000000e+00> : vector<128x64xf32>
    %54 = tpu.matmul %53, %39, %cst_22 {dimension_numbers = #tpu.dot_dimension_numbers<[1], [0], [0], [1], [0, 0, 1, 1], [], []>} : vector<128x128xbf16>, vector<128x64xbf16>, vector<128x64xf32> -> vector<128x64xf32>
    %55 = arith.truncf %54 : vector<128x64xf32> to vector<128x64xbf16>
    %c0_23 = arith.constant 0 : index
    %c0_24 = arith.constant 0 : index
    %c0_25 = arith.constant 0 : index
    %56 = vector.load %arg4[%c0_23, %c0_24, %c0_25] : memref<2x128x128xbf16, #tpu.memory_space<vmem>>, vector<1x64x128xbf16>
    %57 = vector.shape_cast %56 : vector<1x64x128xbf16> to vector<64x128xbf16>
    %cst_26 = arith.constant dense<0.000000e+00> : vector<128x128xf32>
    %58 = tpu.matmul %55, %57, %cst_26 {dimension_numbers = #tpu.dot_dimension_numbers<[1], [0], [0], [1], [0, 0, 1, 1], [], []>} : vector<128x64xbf16>, vector<64x128xbf16>, vector<128x128xf32> -> vector<128x128xf32>
    %59 = vector.broadcast %33 : vector<1x128xf32> to vector<128x128xf32>
    %60 = arith.addf %59, %58 : vector<128x128xf32>
    %61 = vector.extract_strided_slice %31 {offsets = [0, 64], sizes = [128, 64], strides = [1, 1]} : vector<128x384xf32> to vector<128x64xf32>
    %62 = arith.truncf %61 : vector<128x64xf32> to vector<128x64xbf16>
    %63 = vector.extract_strided_slice %31 {offsets = [0, 192], sizes = [128, 64], strides = [1, 1]} : vector<128x384xf32> to vector<128x64xf32>
    %64 = arith.truncf %63 : vector<128x64xf32> to vector<128x64xbf16>
    %65 = vector.extract_strided_slice %31 {offsets = [0, 320], sizes = [128, 64], strides = [1, 1]} : vector<128x384xf32> to vector<128x64xf32>
    %66 = arith.truncf %65 : vector<128x64xf32> to vector<128x64xbf16>
    %cst_27 = arith.constant dense<0.000000e+00> : vector<128x128xf32>
    %67 = tpu.matmul %62, %64, %cst_27 {dimension_numbers = #tpu.dot_dimension_numbers<[1], [1], [0], [0], [0, 0, 1, 0], [], []>} : vector<128x64xbf16>, vector<128x64xbf16>, vector<128x128xf32> -> vector<128x128xf32>
    %68 = vector.broadcast %0 : vector<1x128xf32> to vector<128x128xf32>
    %69 = arith.addf %67, %68 : vector<128x128xf32>
    %cst_28 = arith.constant dense<0xFF800000> : vector<128xf32>
    %70 = vector.multi_reduction <maximumf>, %69, %cst_28 [1] : vector<128x128xf32> to vector<128xf32>
    %71 = vector.shape_cast %70 : vector<128xf32> to vector<128x1xf32>
    %72 = vector.broadcast %71 : vector<128x1xf32> to vector<128x128xf32>
    %73 = arith.subf %69, %72 : vector<128x128xf32>
    %74 = math.exp %73 : vector<128x128xf32>
    %cst_29 = arith.constant dense<0.000000e+00> : vector<128xf32>
    %75 = vector.multi_reduction <add>, %74, %cst_29 [1] : vector<128x128xf32> to vector<128xf32>
    %76 = vector.shape_cast %75 : vector<128xf32> to vector<128x1xf32>
    %77 = tpu.reciprocal %76 {approx = true} : vector<128x1xf32> -> vector<128x1xf32>
    %78 = vector.broadcast %77 : vector<128x1xf32> to vector<128x128xf32>
    %79 = arith.mulf %74, %78 : vector<128x128xf32>
    %80 = arith.truncf %79 : vector<128x128xf32> to vector<128x128xbf16>
    %cst_30 = arith.constant dense<0.000000e+00> : vector<128x64xf32>
    %81 = tpu.matmul %80, %66, %cst_30 {dimension_numbers = #tpu.dot_dimension_numbers<[1], [0], [0], [1], [0, 0, 1, 1], [], []>} : vector<128x128xbf16>, vector<128x64xbf16>, vector<128x64xf32> -> vector<128x64xf32>
    %82 = arith.truncf %81 : vector<128x64xf32> to vector<128x64xbf16>
    %c0_31 = arith.constant 0 : index
    %c64 = arith.constant 64 : index
    %c0_32 = arith.constant 0 : index
    %83 = vector.load %arg4[%c0_31, %c64, %c0_32] : memref<2x128x128xbf16, #tpu.memory_space<vmem>>, vector<1x64x128xbf16>
    %84 = vector.shape_cast %83 : vector<1x64x128xbf16> to vector<64x128xbf16>
    %cst_33 = arith.constant dense<0.000000e+00> : vector<128x128xf32>
    %85 = tpu.matmul %82, %84, %cst_33 {dimension_numbers = #tpu.dot_dimension_numbers<[1], [0], [0], [1], [0, 0, 1, 1], [], []>} : vector<128x64xbf16>, vector<64x128xbf16>, vector<128x128xf32> -> vector<128x128xf32>
    %86 = arith.addf %60, %85 : vector<128x128xf32>
    %87 = arith.addf %86, %23 : vector<128x128xf32>
    %c0_34 = arith.constant 0 : index
    %c0_35 = arith.constant 0 : index
    %c896 = arith.constant 896 : index
    %88 = vector.load %arg7[%c0_34, %c0_35, %c896] : memref<2x1x1408xf32, #tpu.memory_space<vmem>>, vector<1x1x128xf32>
    %89 = vector.shape_cast %88 : vector<1x1x128xf32> to vector<1x128xf32>
    %c0_36 = arith.constant 0 : index
    %c0_37 = arith.constant 0 : index
    %c1024 = arith.constant 1024 : index
    %90 = vector.load %arg7[%c0_36, %c0_37, %c1024] : memref<2x1x1408xf32, #tpu.memory_space<vmem>>, vector<1x1x128xf32>
    %91 = vector.shape_cast %90 : vector<1x1x128xf32> to vector<1x128xf32>
    %cst_38 = arith.constant dense<0.000000e+00> : vector<128xf32>
    %92 = vector.multi_reduction <add>, %87, %cst_38 [1] : vector<128x128xf32> to vector<128xf32>
    %93 = vector.shape_cast %92 : vector<128xf32> to vector<128x1xf32>
    %cst_39 = arith.constant 1.280000e+02 : f32
    %94 = vector.broadcast %cst_39 : f32 to vector<128x1xf32>
    %95 = arith.divf %93, %94 : vector<128x1xf32>
    %96 = vector.broadcast %95 : vector<128x1xf32> to vector<128x128xf32>
    %97 = arith.subf %87, %96 : vector<128x128xf32>
    %98 = arith.mulf %97, %97 : vector<128x128xf32>
    %cst_40 = arith.constant dense<0.000000e+00> : vector<128xf32>
    %99 = vector.multi_reduction <add>, %98, %cst_40 [1] : vector<128x128xf32> to vector<128xf32>
    %100 = vector.shape_cast %99 : vector<128xf32> to vector<128x1xf32>
    %cst_41 = arith.constant 1.280000e+02 : f32
    %101 = vector.broadcast %cst_41 : f32 to vector<128x1xf32>
    %102 = arith.divf %100, %101 : vector<128x1xf32>
    %cst_42 = arith.constant 9.99999996E-13 : f32
    %103 = vector.broadcast %cst_42 : f32 to vector<128x1xf32>
    %104 = arith.addf %102, %103 : vector<128x1xf32>
    %105 = math.rsqrt %104 : vector<128x1xf32>
    %106 = vector.broadcast %105 : vector<128x1xf32> to vector<128x128xf32>
    %107 = arith.mulf %97, %106 : vector<128x128xf32>
    %108 = vector.broadcast %89 : vector<1x128xf32> to vector<128x128xf32>
    %109 = arith.mulf %107, %108 : vector<128x128xf32>
    %110 = vector.broadcast %91 : vector<1x128xf32> to vector<128x128xf32>
    %111 = arith.addf %109, %110 : vector<128x128xf32>
    %112 = arith.truncf %111 : vector<128x128xf32> to vector<128x128xbf16>
    %c0_43 = arith.constant 0 : index
    %c0_44 = arith.constant 0 : index
    %c0_45 = arith.constant 0 : index
    %113 = vector.load %arg5[%c0_43, %c0_44, %c0_45] : memref<2x128x256xbf16, #tpu.memory_space<vmem>>, vector<1x128x256xbf16>
    %114 = vector.shape_cast %113 : vector<1x128x256xbf16> to vector<128x256xbf16>
    %cst_46 = arith.constant dense<0.000000e+00> : vector<128x256xf32>
    %115 = tpu.matmul %112, %114, %cst_46 {dimension_numbers = #tpu.dot_dimension_numbers<[1], [0], [0], [1], [0, 0, 1, 1], [], []>} : vector<128x128xbf16>, vector<128x256xbf16>, vector<128x256xf32> -> vector<128x256xf32>
    %c0_47 = arith.constant 0 : index
    %c0_48 = arith.constant 0 : index
    %c512 = arith.constant 512 : index
    %116 = vector.load %arg7[%c0_47, %c0_48, %c512] : memref<2x1x1408xf32, #tpu.memory_space<vmem>>, vector<1x1x256xf32>
    %117 = vector.shape_cast %116 : vector<1x1x256xf32> to vector<1x256xf32>
    %118 = vector.broadcast %117 : vector<1x256xf32> to vector<128x256xf32>
    %119 = arith.addf %115, %118 : vector<128x256xf32>
    %120 = arith.mulf %119, %119 : vector<128x256xf32>
    %121 = arith.mulf %119, %120 : vector<128x256xf32>
    %cst_49 = arith.constant 4.471500e-02 : f32
    %122 = vector.broadcast %cst_49 : f32 to vector<128x256xf32>
    %123 = arith.mulf %122, %121 : vector<128x256xf32>
    %124 = arith.addf %119, %123 : vector<128x256xf32>
    %cst_50 = arith.constant 0.797884583 : f32
    %125 = vector.broadcast %cst_50 : f32 to vector<128x256xf32>
    %126 = arith.mulf %125, %124 : vector<128x256xf32>
    %127 = math.tanh %126 : vector<128x256xf32>
    %cst_51 = arith.constant 1.000000e+00 : f32
    %128 = vector.broadcast %cst_51 : f32 to vector<128x256xf32>
    %129 = arith.addf %128, %127 : vector<128x256xf32>
    %cst_52 = arith.constant 5.000000e-01 : f32
    %130 = vector.broadcast %cst_52 : f32 to vector<128x256xf32>
    %131 = arith.mulf %130, %129 : vector<128x256xf32>
    %132 = arith.mulf %119, %131 : vector<128x256xf32>
    %133 = arith.truncf %132 : vector<128x256xf32> to vector<128x256xbf16>
    %c0_53 = arith.constant 0 : index
    %c0_54 = arith.constant 0 : index
    %c0_55 = arith.constant 0 : index
    %134 = vector.load %arg6[%c0_53, %c0_54, %c0_55] : memref<2x256x128xbf16, #tpu.memory_space<vmem>>, vector<1x256x128xbf16>
    %135 = vector.shape_cast %134 : vector<1x256x128xbf16> to vector<256x128xbf16>
    %cst_56 = arith.constant dense<0.000000e+00> : vector<128x128xf32>
    %136 = tpu.matmul %133, %135, %cst_56 {dimension_numbers = #tpu.dot_dimension_numbers<[1], [0], [0], [1], [0, 0, 1, 1], [], []>} : vector<128x256xbf16>, vector<256x128xbf16>, vector<128x128xf32> -> vector<128x128xf32>
    %c0_57 = arith.constant 0 : index
    %c0_58 = arith.constant 0 : index
    %c768 = arith.constant 768 : index
    %137 = vector.load %arg7[%c0_57, %c0_58, %c768] : memref<2x1x1408xf32, #tpu.memory_space<vmem>>, vector<1x1x128xf32>
    %138 = vector.shape_cast %137 : vector<1x1x128xf32> to vector<1x128xf32>
    %139 = vector.broadcast %138 : vector<1x128xf32> to vector<128x128xf32>
    %140 = arith.addf %136, %139 : vector<128x128xf32>
    %141 = arith.addf %140, %111 : vector<128x128xf32>
    %c0_59 = arith.constant 0 : index
    %c0_60 = arith.constant 0 : index
    %c1152 = arith.constant 1152 : index
    %142 = vector.load %arg7[%c0_59, %c0_60, %c1152] : memref<2x1x1408xf32, #tpu.memory_space<vmem>>, vector<1x1x128xf32>
    %143 = vector.shape_cast %142 : vector<1x1x128xf32> to vector<1x128xf32>
    %c0_61 = arith.constant 0 : index
    %c0_62 = arith.constant 0 : index
    %c1280 = arith.constant 1280 : index
    %144 = vector.load %arg7[%c0_61, %c0_62, %c1280] : memref<2x1x1408xf32, #tpu.memory_space<vmem>>, vector<1x1x128xf32>
    %145 = vector.shape_cast %144 : vector<1x1x128xf32> to vector<1x128xf32>
    %cst_63 = arith.constant dense<0.000000e+00> : vector<128xf32>
    %146 = vector.multi_reduction <add>, %141, %cst_63 [1] : vector<128x128xf32> to vector<128xf32>
    %147 = vector.shape_cast %146 : vector<128xf32> to vector<128x1xf32>
    %cst_64 = arith.constant 1.280000e+02 : f32
    %148 = vector.broadcast %cst_64 : f32 to vector<128x1xf32>
    %149 = arith.divf %147, %148 : vector<128x1xf32>
    %150 = vector.broadcast %149 : vector<128x1xf32> to vector<128x128xf32>
    %151 = arith.subf %141, %150 : vector<128x128xf32>
    %152 = arith.mulf %151, %151 : vector<128x128xf32>
    %cst_65 = arith.constant dense<0.000000e+00> : vector<128xf32>
    %153 = vector.multi_reduction <add>, %152, %cst_65 [1] : vector<128x128xf32> to vector<128xf32>
    %154 = vector.shape_cast %153 : vector<128xf32> to vector<128x1xf32>
    %cst_66 = arith.constant 1.280000e+02 : f32
    %155 = vector.broadcast %cst_66 : f32 to vector<128x1xf32>
    %156 = arith.divf %154, %155 : vector<128x1xf32>
    %cst_67 = arith.constant 9.99999996E-13 : f32
    %157 = vector.broadcast %cst_67 : f32 to vector<128x1xf32>
    %158 = arith.addf %156, %157 : vector<128x1xf32>
    %159 = math.rsqrt %158 : vector<128x1xf32>
    %160 = vector.broadcast %159 : vector<128x1xf32> to vector<128x128xf32>
    %161 = arith.mulf %151, %160 : vector<128x128xf32>
    %162 = vector.broadcast %143 : vector<1x128xf32> to vector<128x128xf32>
    %163 = arith.mulf %161, %162 : vector<128x128xf32>
    %164 = vector.broadcast %145 : vector<1x128xf32> to vector<128x128xf32>
    %165 = arith.addf %163, %164 : vector<128x128xf32>
    %166 = arith.truncf %165 : vector<128x128xf32> to vector<128x128xbf16>
    %c1_68 = arith.constant 1 : index
    %c0_69 = arith.constant 0 : index
    %c0_70 = arith.constant 0 : index
    %167 = vector.load %arg3[%c1_68, %c0_69, %c0_70] : memref<2x128x384xbf16, #tpu.memory_space<vmem>>, vector<1x128x384xbf16>
    %168 = vector.shape_cast %167 : vector<1x128x384xbf16> to vector<128x384xbf16>
    %cst_71 = arith.constant dense<0.000000e+00> : vector<128x384xf32>
    %169 = tpu.matmul %166, %168, %cst_71 {dimension_numbers = #tpu.dot_dimension_numbers<[1], [0], [0], [1], [0, 0, 1, 1], [], []>} : vector<128x128xbf16>, vector<128x384xbf16>, vector<128x384xf32> -> vector<128x384xf32>
    %c1_72 = arith.constant 1 : index
    %c0_73 = arith.constant 0 : index
    %c0_74 = arith.constant 0 : index
    %170 = vector.load %arg7[%c1_72, %c0_73, %c0_74] : memref<2x1x1408xf32, #tpu.memory_space<vmem>>, vector<1x1x384xf32>
    %171 = vector.shape_cast %170 : vector<1x1x384xf32> to vector<1x384xf32>
    %172 = vector.broadcast %171 : vector<1x384xf32> to vector<128x384xf32>
    %173 = arith.addf %169, %172 : vector<128x384xf32>
    %c1_75 = arith.constant 1 : index
    %c0_76 = arith.constant 0 : index
    %c384_77 = arith.constant 384 : index
    %174 = vector.load %arg7[%c1_75, %c0_76, %c384_77] : memref<2x1x1408xf32, #tpu.memory_space<vmem>>, vector<1x1x128xf32>
    %175 = vector.shape_cast %174 : vector<1x1x128xf32> to vector<1x128xf32>
    %176 = vector.extract_strided_slice %173 {offsets = [0, 0], sizes = [128, 64], strides = [1, 1]} : vector<128x384xf32> to vector<128x64xf32>
    %177 = arith.truncf %176 : vector<128x64xf32> to vector<128x64xbf16>
    %178 = vector.extract_strided_slice %173 {offsets = [0, 128], sizes = [128, 64], strides = [1, 1]} : vector<128x384xf32> to vector<128x64xf32>
    %179 = arith.truncf %178 : vector<128x64xf32> to vector<128x64xbf16>
    %180 = vector.extract_strided_slice %173 {offsets = [0, 256], sizes = [128, 64], strides = [1, 1]} : vector<128x384xf32> to vector<128x64xf32>
    %181 = arith.truncf %180 : vector<128x64xf32> to vector<128x64xbf16>
    %cst_78 = arith.constant dense<0.000000e+00> : vector<128x128xf32>
    %182 = tpu.matmul %177, %179, %cst_78 {dimension_numbers = #tpu.dot_dimension_numbers<[1], [1], [0], [0], [0, 0, 1, 0], [], []>} : vector<128x64xbf16>, vector<128x64xbf16>, vector<128x128xf32> -> vector<128x128xf32>
    %183 = vector.broadcast %0 : vector<1x128xf32> to vector<128x128xf32>
    %184 = arith.addf %182, %183 : vector<128x128xf32>
    %cst_79 = arith.constant dense<0xFF800000> : vector<128xf32>
    %185 = vector.multi_reduction <maximumf>, %184, %cst_79 [1] : vector<128x128xf32> to vector<128xf32>
    %186 = vector.shape_cast %185 : vector<128xf32> to vector<128x1xf32>
    %187 = vector.broadcast %186 : vector<128x1xf32> to vector<128x128xf32>
    %188 = arith.subf %184, %187 : vector<128x128xf32>
    %189 = math.exp %188 : vector<128x128xf32>
    %cst_80 = arith.constant dense<0.000000e+00> : vector<128xf32>
    %190 = vector.multi_reduction <add>, %189, %cst_80 [1] : vector<128x128xf32> to vector<128xf32>
    %191 = vector.shape_cast %190 : vector<128xf32> to vector<128x1xf32>
    %192 = tpu.reciprocal %191 {approx = true} : vector<128x1xf32> -> vector<128x1xf32>
    %193 = vector.broadcast %192 : vector<128x1xf32> to vector<128x128xf32>
    %194 = arith.mulf %189, %193 : vector<128x128xf32>
    %195 = arith.truncf %194 : vector<128x128xf32> to vector<128x128xbf16>
    %cst_81 = arith.constant dense<0.000000e+00> : vector<128x64xf32>
    %196 = tpu.matmul %195, %181, %cst_81 {dimension_numbers = #tpu.dot_dimension_numbers<[1], [0], [0], [1], [0, 0, 1, 1], [], []>} : vector<128x128xbf16>, vector<128x64xbf16>, vector<128x64xf32> -> vector<128x64xf32>
    %197 = arith.truncf %196 : vector<128x64xf32> to vector<128x64xbf16>
    %c1_82 = arith.constant 1 : index
    %c0_83 = arith.constant 0 : index
    %c0_84 = arith.constant 0 : index
    %198 = vector.load %arg4[%c1_82, %c0_83, %c0_84] : memref<2x128x128xbf16, #tpu.memory_space<vmem>>, vector<1x64x128xbf16>
    %199 = vector.shape_cast %198 : vector<1x64x128xbf16> to vector<64x128xbf16>
    %cst_85 = arith.constant dense<0.000000e+00> : vector<128x128xf32>
    %200 = tpu.matmul %197, %199, %cst_85 {dimension_numbers = #tpu.dot_dimension_numbers<[1], [0], [0], [1], [0, 0, 1, 1], [], []>} : vector<128x64xbf16>, vector<64x128xbf16>, vector<128x128xf32> -> vector<128x128xf32>
    %201 = vector.broadcast %175 : vector<1x128xf32> to vector<128x128xf32>
    %202 = arith.addf %201, %200 : vector<128x128xf32>
    %203 = vector.extract_strided_slice %173 {offsets = [0, 64], sizes = [128, 64], strides = [1, 1]} : vector<128x384xf32> to vector<128x64xf32>
    %204 = arith.truncf %203 : vector<128x64xf32> to vector<128x64xbf16>
    %205 = vector.extract_strided_slice %173 {offsets = [0, 192], sizes = [128, 64], strides = [1, 1]} : vector<128x384xf32> to vector<128x64xf32>
    %206 = arith.truncf %205 : vector<128x64xf32> to vector<128x64xbf16>
    %207 = vector.extract_strided_slice %173 {offsets = [0, 320], sizes = [128, 64], strides = [1, 1]} : vector<128x384xf32> to vector<128x64xf32>
    %208 = arith.truncf %207 : vector<128x64xf32> to vector<128x64xbf16>
    %cst_86 = arith.constant dense<0.000000e+00> : vector<128x128xf32>
    %209 = tpu.matmul %204, %206, %cst_86 {dimension_numbers = #tpu.dot_dimension_numbers<[1], [1], [0], [0], [0, 0, 1, 0], [], []>} : vector<128x64xbf16>, vector<128x64xbf16>, vector<128x128xf32> -> vector<128x128xf32>
    %210 = vector.broadcast %0 : vector<1x128xf32> to vector<128x128xf32>
    %211 = arith.addf %209, %210 : vector<128x128xf32>
    %cst_87 = arith.constant dense<0xFF800000> : vector<128xf32>
    %212 = vector.multi_reduction <maximumf>, %211, %cst_87 [1] : vector<128x128xf32> to vector<128xf32>
    %213 = vector.shape_cast %212 : vector<128xf32> to vector<128x1xf32>
    %214 = vector.broadcast %213 : vector<128x1xf32> to vector<128x128xf32>
    %215 = arith.subf %211, %214 : vector<128x128xf32>
    %216 = math.exp %215 : vector<128x128xf32>
    %cst_88 = arith.constant dense<0.000000e+00> : vector<128xf32>
    %217 = vector.multi_reduction <add>, %216, %cst_88 [1] : vector<128x128xf32> to vector<128xf32>
    %218 = vector.shape_cast %217 : vector<128xf32> to vector<128x1xf32>
    %219 = tpu.reciprocal %218 {approx = true} : vector<128x1xf32> -> vector<128x1xf32>
    %220 = vector.broadcast %219 : vector<128x1xf32> to vector<128x128xf32>
    %221 = arith.mulf %216, %220 : vector<128x128xf32>
    %222 = arith.truncf %221 : vector<128x128xf32> to vector<128x128xbf16>
    %cst_89 = arith.constant dense<0.000000e+00> : vector<128x64xf32>
    %223 = tpu.matmul %222, %208, %cst_89 {dimension_numbers = #tpu.dot_dimension_numbers<[1], [0], [0], [1], [0, 0, 1, 1], [], []>} : vector<128x128xbf16>, vector<128x64xbf16>, vector<128x64xf32> -> vector<128x64xf32>
    %224 = arith.truncf %223 : vector<128x64xf32> to vector<128x64xbf16>
    %c1_90 = arith.constant 1 : index
    %c64_91 = arith.constant 64 : index
    %c0_92 = arith.constant 0 : index
    %225 = vector.load %arg4[%c1_90, %c64_91, %c0_92] : memref<2x128x128xbf16, #tpu.memory_space<vmem>>, vector<1x64x128xbf16>
    %226 = vector.shape_cast %225 : vector<1x64x128xbf16> to vector<64x128xbf16>
    %cst_93 = arith.constant dense<0.000000e+00> : vector<128x128xf32>
    %227 = tpu.matmul %224, %226, %cst_93 {dimension_numbers = #tpu.dot_dimension_numbers<[1], [0], [0], [1], [0, 0, 1, 1], [], []>} : vector<128x64xbf16>, vector<64x128xbf16>, vector<128x128xf32> -> vector<128x128xf32>
    %228 = arith.addf %202, %227 : vector<128x128xf32>
    %229 = arith.addf %228, %165 : vector<128x128xf32>
    %c1_94 = arith.constant 1 : index
    %c0_95 = arith.constant 0 : index
    %c896_96 = arith.constant 896 : index
    %230 = vector.load %arg7[%c1_94, %c0_95, %c896_96] : memref<2x1x1408xf32, #tpu.memory_space<vmem>>, vector<1x1x128xf32>
    %231 = vector.shape_cast %230 : vector<1x1x128xf32> to vector<1x128xf32>
    %c1_97 = arith.constant 1 : index
    %c0_98 = arith.constant 0 : index
    %c1024_99 = arith.constant 1024 : index
    %232 = vector.load %arg7[%c1_97, %c0_98, %c1024_99] : memref<2x1x1408xf32, #tpu.memory_space<vmem>>, vector<1x1x128xf32>
    %233 = vector.shape_cast %232 : vector<1x1x128xf32> to vector<1x128xf32>
    %cst_100 = arith.constant dense<0.000000e+00> : vector<128xf32>
    %234 = vector.multi_reduction <add>, %229, %cst_100 [1] : vector<128x128xf32> to vector<128xf32>
    %235 = vector.shape_cast %234 : vector<128xf32> to vector<128x1xf32>
    %cst_101 = arith.constant 1.280000e+02 : f32
    %236 = vector.broadcast %cst_101 : f32 to vector<128x1xf32>
    %237 = arith.divf %235, %236 : vector<128x1xf32>
    %238 = vector.broadcast %237 : vector<128x1xf32> to vector<128x128xf32>
    %239 = arith.subf %229, %238 : vector<128x128xf32>
    %240 = arith.mulf %239, %239 : vector<128x128xf32>
    %cst_102 = arith.constant dense<0.000000e+00> : vector<128xf32>
    %241 = vector.multi_reduction <add>, %240, %cst_102 [1] : vector<128x128xf32> to vector<128xf32>
    %242 = vector.shape_cast %241 : vector<128xf32> to vector<128x1xf32>
    %cst_103 = arith.constant 1.280000e+02 : f32
    %243 = vector.broadcast %cst_103 : f32 to vector<128x1xf32>
    %244 = arith.divf %242, %243 : vector<128x1xf32>
    %cst_104 = arith.constant 9.99999996E-13 : f32
    %245 = vector.broadcast %cst_104 : f32 to vector<128x1xf32>
    %246 = arith.addf %244, %245 : vector<128x1xf32>
    %247 = math.rsqrt %246 : vector<128x1xf32>
    %248 = vector.broadcast %247 : vector<128x1xf32> to vector<128x128xf32>
    %249 = arith.mulf %239, %248 : vector<128x128xf32>
    %250 = vector.broadcast %231 : vector<1x128xf32> to vector<128x128xf32>
    %251 = arith.mulf %249, %250 : vector<128x128xf32>
    %252 = vector.broadcast %233 : vector<1x128xf32> to vector<128x128xf32>
    %253 = arith.addf %251, %252 : vector<128x128xf32>
    %254 = arith.truncf %253 : vector<128x128xf32> to vector<128x128xbf16>
    %c1_105 = arith.constant 1 : index
    %c0_106 = arith.constant 0 : index
    %c0_107 = arith.constant 0 : index
    %255 = vector.load %arg5[%c1_105, %c0_106, %c0_107] : memref<2x128x256xbf16, #tpu.memory_space<vmem>>, vector<1x128x256xbf16>
    %256 = vector.shape_cast %255 : vector<1x128x256xbf16> to vector<128x256xbf16>
    %cst_108 = arith.constant dense<0.000000e+00> : vector<128x256xf32>
    %257 = tpu.matmul %254, %256, %cst_108 {dimension_numbers = #tpu.dot_dimension_numbers<[1], [0], [0], [1], [0, 0, 1, 1], [], []>} : vector<128x128xbf16>, vector<128x256xbf16>, vector<128x256xf32> -> vector<128x256xf32>
    %c1_109 = arith.constant 1 : index
    %c0_110 = arith.constant 0 : index
    %c512_111 = arith.constant 512 : index
    %258 = vector.load %arg7[%c1_109, %c0_110, %c512_111] : memref<2x1x1408xf32, #tpu.memory_space<vmem>>, vector<1x1x256xf32>
    %259 = vector.shape_cast %258 : vector<1x1x256xf32> to vector<1x256xf32>
    %260 = vector.broadcast %259 : vector<1x256xf32> to vector<128x256xf32>
    %261 = arith.addf %257, %260 : vector<128x256xf32>
    %262 = arith.mulf %261, %261 : vector<128x256xf32>
    %263 = arith.mulf %261, %262 : vector<128x256xf32>
    %cst_112 = arith.constant 4.471500e-02 : f32
    %264 = vector.broadcast %cst_112 : f32 to vector<128x256xf32>
    %265 = arith.mulf %264, %263 : vector<128x256xf32>
    %266 = arith.addf %261, %265 : vector<128x256xf32>
    %cst_113 = arith.constant 0.797884583 : f32
    %267 = vector.broadcast %cst_113 : f32 to vector<128x256xf32>
    %268 = arith.mulf %267, %266 : vector<128x256xf32>
    %269 = math.tanh %268 : vector<128x256xf32>
    %cst_114 = arith.constant 1.000000e+00 : f32
    %270 = vector.broadcast %cst_114 : f32 to vector<128x256xf32>
    %271 = arith.addf %270, %269 : vector<128x256xf32>
    %cst_115 = arith.constant 5.000000e-01 : f32
    %272 = vector.broadcast %cst_115 : f32 to vector<128x256xf32>
    %273 = arith.mulf %272, %271 : vector<128x256xf32>
    %274 = arith.mulf %261, %273 : vector<128x256xf32>
    %275 = arith.truncf %274 : vector<128x256xf32> to vector<128x256xbf16>
    %c1_116 = arith.constant 1 : index
    %c0_117 = arith.constant 0 : index
    %c0_118 = arith.constant 0 : index
    %276 = vector.load %arg6[%c1_116, %c0_117, %c0_118] : memref<2x256x128xbf16, #tpu.memory_space<vmem>>, vector<1x256x128xbf16>
    %277 = vector.shape_cast %276 : vector<1x256x128xbf16> to vector<256x128xbf16>
    %cst_119 = arith.constant dense<0.000000e+00> : vector<128x128xf32>
    %278 = tpu.matmul %275, %277, %cst_119 {dimension_numbers = #tpu.dot_dimension_numbers<[1], [0], [0], [1], [0, 0, 1, 1], [], []>} : vector<128x256xbf16>, vector<256x128xbf16>, vector<128x128xf32> -> vector<128x128xf32>
    %c1_120 = arith.constant 1 : index
    %c0_121 = arith.constant 0 : index
    %c768_122 = arith.constant 768 : index
    %279 = vector.load %arg7[%c1_120, %c0_121, %c768_122] : memref<2x1x1408xf32, #tpu.memory_space<vmem>>, vector<1x1x128xf32>
    %280 = vector.shape_cast %279 : vector<1x1x128xf32> to vector<1x128xf32>
    %281 = vector.broadcast %280 : vector<1x128xf32> to vector<128x128xf32>
    %282 = arith.addf %278, %281 : vector<128x128xf32>
    %283 = arith.addf %282, %253 : vector<128x128xf32>
    %c1_123 = arith.constant 1 : index
    %c0_124 = arith.constant 0 : index
    %c1152_125 = arith.constant 1152 : index
    %284 = vector.load %arg7[%c1_123, %c0_124, %c1152_125] : memref<2x1x1408xf32, #tpu.memory_space<vmem>>, vector<1x1x128xf32>
    %285 = vector.shape_cast %284 : vector<1x1x128xf32> to vector<1x128xf32>
    %c1_126 = arith.constant 1 : index
    %c0_127 = arith.constant 0 : index
    %c1280_128 = arith.constant 1280 : index
    %286 = vector.load %arg7[%c1_126, %c0_127, %c1280_128] : memref<2x1x1408xf32, #tpu.memory_space<vmem>>, vector<1x1x128xf32>
    %287 = vector.shape_cast %286 : vector<1x1x128xf32> to vector<1x128xf32>
    %cst_129 = arith.constant dense<0.000000e+00> : vector<128xf32>
    %288 = vector.multi_reduction <add>, %283, %cst_129 [1] : vector<128x128xf32> to vector<128xf32>
    %289 = vector.shape_cast %288 : vector<128xf32> to vector<128x1xf32>
    %cst_130 = arith.constant 1.280000e+02 : f32
    %290 = vector.broadcast %cst_130 : f32 to vector<128x1xf32>
    %291 = arith.divf %289, %290 : vector<128x1xf32>
    %292 = vector.broadcast %291 : vector<128x1xf32> to vector<128x128xf32>
    %293 = arith.subf %283, %292 : vector<128x128xf32>
    %294 = arith.mulf %293, %293 : vector<128x128xf32>
    %cst_131 = arith.constant dense<0.000000e+00> : vector<128xf32>
    %295 = vector.multi_reduction <add>, %294, %cst_131 [1] : vector<128x128xf32> to vector<128xf32>
    %296 = vector.shape_cast %295 : vector<128xf32> to vector<128x1xf32>
    %cst_132 = arith.constant 1.280000e+02 : f32
    %297 = vector.broadcast %cst_132 : f32 to vector<128x1xf32>
    %298 = arith.divf %296, %297 : vector<128x1xf32>
    %cst_133 = arith.constant 9.99999996E-13 : f32
    %299 = vector.broadcast %cst_133 : f32 to vector<128x1xf32>
    %300 = arith.addf %298, %299 : vector<128x1xf32>
    %301 = math.rsqrt %300 : vector<128x1xf32>
    %302 = vector.broadcast %301 : vector<128x1xf32> to vector<128x128xf32>
    %303 = arith.mulf %293, %302 : vector<128x128xf32>
    %304 = vector.broadcast %285 : vector<1x128xf32> to vector<128x128xf32>
    %305 = arith.mulf %303, %304 : vector<128x128xf32>
    %306 = vector.broadcast %287 : vector<1x128xf32> to vector<128x128xf32>
    %307 = arith.addf %305, %306 : vector<128x128xf32>
    %c0_134 = arith.constant 0 : index
    %c0_135 = arith.constant 0 : index
    %308 = vector.load %arg8[%c0_134, %c0_135] : memref<128x128xf32, #tpu.memory_space<vmem>>, vector<128x128xf32>
    tpu.vector_store %arg8[%c0_134, %c0_135], %307 {strides = array<i32>} : memref<128x128xf32, #tpu.memory_space<vmem>>, vector<128x128xf32>,
    return
  }
}

</mosaic_0001>

<llo_original>
// kernel: spider_encoder_forward.1
$region0: #{spider_encoder_forward.1}
  #allocation0 [shape = 'u32[]', space=smem, size = 0x4, offset = 0x4, fixed_abs, tag = 'smem constant byte address 0x4 - core index']
  #allocation1 [shape = 'u32[144,128]{1,0:T(1,128)}', space=vmem, size = 0x12000, scoped, tag = 'internal scratch']
  %s0 = inlined_call_operand.vmem [shape: f32[128,128], index: 0, kind: input, shape index: {}]
  %s1 = inlined_call_operand.vmem [shape: f32[1,128], index: 1, kind: input, shape index: {}]
  %s2 = inlined_call_operand.vmem [shape: f32[2,128], index: 2, kind: input, shape index: {}]
  %s3 = inlined_call_operand.vmem [shape: bf16[2,128,384], index: 3, kind: input, shape index: {}]
  %s4 = inlined_call_operand.vmem [shape: bf16[2,128,128], index: 4, kind: input, shape index: {}]
  %s5 = inlined_call_operand.vmem [shape: bf16[2,128,256], index: 5, kind: input, shape index: {}]
  %s6 = inlined_call_operand.vmem [shape: bf16[2,256,128], index: 6, kind: input, shape index: {}]
  %s7 = inlined_call_operand.vmem [shape: f32[2,1,1408], index: 7, kind: input, shape index: {}]
  %s8 = inlined_call_operand.vmem [shape: f32[128,128], index: 8, kind: output, shape index: {}]
  %s9 = sld [smem:[#allocation0]]
  $region42: #{spider_encoder_forward.1} parent=0
    _
  %s11 = ssub.s32 1, %s9
  %s12 = scalar_select 0, %s11, %s9
  // Predicated region
  $region2: #{spider_encoder_forward.1} parent=0 // pred_check
    _
  $region3: #{spider_encoder_forward.1} parent=0 // pred_check_branch
    %14 = sbr.rel (0) target = $region5
  $region4: #{spider_encoder_forward.1} parent=0 // pred_region
    _
  $region5: #{spider_encoder_forward.1} parent=0 // pred_fallthru
    _
  // Predicated region
  $region6: #{spider_encoder_forward.1} parent=0 // pred_check
    _
  $region7: #{spider_encoder_forward.1} parent=0 // pred_check_branch
    %16 = sbr.rel (0) target = $region9
  $region8: #{spider_encoder_forward.1} parent=0 // pred_region
    _
  $region9: #{spider_encoder_forward.1} parent=0 // pred_fallthru
    _
  // Predicated region
  $region10: #{spider_encoder_forward.1} parent=0 // pred_check
    _
  $region11: #{spider_encoder_forward.1} parent=0 // pred_check_branch
    %18 = sbr.rel (0) target = $region13
  $region12: #{spider_encoder_forward.1} parent=0 // pred_region
    _
  $region13: #{spider_encoder_forward.1} parent=0 // pred_fallthru
    _
  // Predicated region
  $region14: #{spider_encoder_forward.1} parent=0 // pred_check
    _
  $region15: #{spider_encoder_forward.1} parent=0 // pred_check_branch
    %20 = sbr.rel (0) target = $region17
  $region16: #{spider_encoder_forward.1} parent=0 // pred_region
    _
  $region17: #{spider_encoder_forward.1} parent=0 // pred_fallthru
    _
  // Predicated region
  $region18: #{spider_encoder_forward.1} parent=0 // pred_check
    _
  $region19: #{spider_encoder_forward.1} parent=0 // pred_check_branch
    %22 = sbr.rel (0) target = $region21
  $region20: #{spider_encoder_forward.1} parent=0 // pred_region
    _
  $region21: #{spider_encoder_forward.1} parent=0 // pred_fallthru
    _
  // Predicated region
  $region22: #{spider_encoder_forward.1} parent=0 // pred_check
    _
  $region23: #{spider_encoder_forward.1} parent=0 // pred_check_branch
    %24 = sbr.rel (0) target = $region25
  $region24: #{spider_encoder_forward.1} parent=0 // pred_region
    _
  $region25: #{spider_encoder_forward.1} parent=0 // pred_fallthru
    _
  // Predicated region
  $region26: #{spider_encoder_forward.1} parent=0 // pred_check
    _
  $region27: #{spider_encoder_forward.1} parent=0 // pred_check_branch
    %26 = sbr.rel (0) target = $region29
  $region28: #{spider_encoder_forward.1} parent=0 // pred_region
    _
  $region29: #{spider_encoder_forward.1} parent=0 // pred_fallthru
    _
  // Predicated region
  $region30: #{spider_encoder_forward.1} parent=0 // pred_check
    _
  $region31: #{spider_encoder_forward.1} parent=0 // pred_check_branch
    %28 = sbr.rel (0) target = $region33
  $region32: #{spider_encoder_forward.1} parent=0 // pred_region
    _
  $region33: #{spider_encoder_forward.1} parent=0 // pred_fallthru
    _
  %v30 = vld [vmem:[%s1] sm:$0x1]
  %v31 = vld [vmem:[%s0] sm:$0xff]
  %v32 = vld [vmem:[%s0 + $0x8] sm:$0xff]
  %v33 = vld [vmem:[%s0 + $0x10] sm:$0xff]
  %v34 = vld [vmem:[%s0 + $0x18] sm:$0xff]
  %v35 = vld [vmem:[%s0 + $0x20] sm:$0xff]
  %v36 = vld [vmem:[%s0 + $0x28] sm:$0xff]
  %v37 = vld [vmem:[%s0 + $0x30] sm:$0xff]
  %v38 = vld [vmem:[%s0 + $0x38] sm:$0xff]
  %v39 = vld [vmem:[%s0 + $0x40] sm:$0xff]
  %v40 = vld [vmem:[%s0 + $0x48] sm:$0xff]
  %v41 = vld [vmem:[%s0 + $0x50] sm:$0xff]
  %v42 = vld [vmem:[%s0 + $0x58] sm:$0xff]
  %v43 = vld [vmem:[%s0 + $0x60] sm:$0xff]
  %v44 = vld [vmem:[%s0 + $0x68] sm:$0xff]
  %v45 = vld [vmem:[%s0 + $0x70] sm:$0xff]
  %v46 = vld [vmem:[%s0 + $0x78] sm:$0xff]
  %v47 = vld [vmem:[%s2] sm:$0x1]
  %v48 = vld [vmem:[%s2 + $0x1] sm:$0x1]
  %49 = vadd.xlane.f32.xlu0 %v31
  %v50 = vpop.xlane.xlu0 %49
  %51 = vadd.xlane.f32.xlu0 %v32
  %v52 = vpop.xlane.xlu0 %51
  %53 = vadd.xlane.f32.xlu0 %v33
  %v54 = vpop.xlane.xlu0 %53
  %55 = vadd.xlane.f32.xlu0 %v34
  %v56 = vpop.xlane.xlu0 %55
  %57 = vadd.xlane.f32.xlu0 %v35
  %v58 = vpop.xlane.xlu0 %57
  %59 = vadd.xlane.f32.xlu0 %v36
  %v60 = vpop.xlane.xlu0 %59
  %61 = vadd.xlane.f32.xlu0 %v37
  %v62 = vpop.xlane.xlu0 %61
  %63 = vadd.xlane.f32.xlu0 %v38
  %v64 = vpop.xlane.xlu0 %63
  %65 = vadd.xlane.f32.xlu0 %v39
  %v66 = vpop.xlane.xlu0 %65
  %67 = vadd.xlane.f32.xlu0 %v40
  %v68 = vpop.xlane.xlu0 %67
  %69 = vadd.xlane.f32.xlu0 %v41
  %v70 = vpop.xlane.xlu0 %69
  %71 = vadd.xlane.f32.xlu0 %v42
  %v72 = vpop.xlane.xlu0 %71
  %73 = vadd.xlane.f32.xlu0 %v43
  %v74 = vpop.xlane.xlu0 %73
  %75 = vadd.xlane.f32.xlu0 %v44
  %v76 = vpop.xlane.xlu0 %75
  %77 = vadd.xlane.f32.xlu0 %v45
  %v78 = vpop.xlane.xlu0 %77
  %79 = vadd.xlane.f32.xlu0 %v46
  %v80 = vpop.xlane.xlu0 %79
  %v81 = vrcp.pop 128.0
  %v82 = vmul.f32 %v50, %v81
  %v83 = vmul.f32 %v52, %v81
  %v84 = vmul.f32 %v54, %v81
  %v85 = vmul.f32 %v56, %v81
  %v86 = vmul.f32 %v58, %v81
  %v87 = vmul.f32 %v60, %v81
  %v88 = vmul.f32 %v62, %v81
  %v89 = vmul.f32 %v64, %v81
  %v90 = vmul.f32 %v66, %v81
  %v91 = vmul.f32 %v68, %v81
  %v92 = vmul.f32 %v70, %v81
  %v93 = vmul.f32 %v72, %v81
  %v94 = vmul.f32 %v74, %v81
  %v95 = vmul.f32 %v76, %v81
  %v96 = vmul.f32 %v78, %v81
  %v97 = vmul.f32 %v80, %v81
  %v98 = vsub.f32 %v31, %v82
  %v99 = vsub.f32 %v32, %v83
  %v100 = vsub.f32 %v33, %v84
  %v101 = vsub.f32 %v34, %v85
  %v102 = vsub.f32 %v35, %v86
  %v103 = vsub.f32 %v36, %v87
  %v104 = vsub.f32 %v37, %v88
  %v105 = vsub.f32 %v38, %v89
  %v106 = vsub.f32 %v39, %v90
  %v107 = vsub.f32 %v40, %v91
  %v108 = vsub.f32 %v41, %v92
  %v109 = vsub.f32 %v42, %v93
  %v110 = vsub.f32 %v43, %v94
  %v111 = vsub.f32 %v44, %v95
  %v112 = vsub.f32 %v45, %v96
  %v113 = vsub.f32 %v46, %v97
  %v114 = vmul.f32 %v98, %v98
  %v115 = vmul.f32 %v99, %v99
  %v116 = vmul.f32 %v100, %v100
  %v117 = vmul.f32 %v101, %v101
  %v118 = vmul.f32 %v102, %v102
  %v119 = vmul.f32 %v103, %v103
  %v120 = vmul.f32 %v104, %v104
  %v121 = vmul.f32 %v105, %v105
  %v122 = vmul.f32 %v106, %v106
  %v123 = vmul.f32 %v107, %v107
  %v124 = vmul.f32 %v108, %v108
  %v125 = vmul.f32 %v109, %v109
  %v126 = vmul.f32 %v110, %v110
  %v127 = vmul.f32 %v111, %v111
  %v128 = vmul.f32 %v112, %v112
  %v129 = vmul.f32 %v113, %v113
  %130 = vadd.xlane.f32.xlu0 %v114
  %v131 = vpop.xlane.xlu0 %130
  %132 = vadd.xlane.f32.xlu0 %v115
  %v133 = vpop.xlane.xlu0 %132
  %134 = vadd.xlane.f32.xlu0 %v116
  %v135 = vpop.xlane.xlu0 %134
  %136 = vadd.xlane.f32.xlu0 %v117
  %v137 = vpop.xlane.xlu0 %136
  %138 = vadd.xlane.f32.xlu0 %v118
  %v139 = vpop.xlane.xlu0 %138
  %140 = vadd.xlane.f32.xlu0 %v119
  %v141 = vpop.xlane.xlu0 %140
  %142 = vadd.xlane.f32.xlu0 %v120
  %v143 = vpop.xlane.xlu0 %142
  %144 = vadd.xlane.f32.xlu0 %v121
  %v145 = vpop.xlane.xlu0 %144
  %146 = vadd.xlane.f32.xlu0 %v122
  %v147 = vpop.xlane.xlu0 %146
  %148 = vadd.xlane.f32.xlu0 %v123
  %v149 = vpop.xlane.xlu0 %148
  %150 = vadd.xlane.f32.xlu0 %v124
  %v151 = vpop.xlane.xlu0 %150
  %152 = vadd.xlane.f32.xlu0 %v125
  %v153 = vpop.xlane.xlu0 %152
  %154 = vadd.xlane.f32.xlu0 %v126
  %v155 = vpop.xlane.xlu0 %154
  %156 = vadd.xlane.f32.xlu0 %v127
  %v157 = vpop.xlane.xlu0 %156
  %158 = vadd.xlane.f32.xlu0 %v128
  %v159 = vpop.xlane.xlu0 %158
  %160 = vadd.xlane.f32.xlu0 %v129
  %v161 = vpop.xlane.xlu0 %160
  %v162 = vmul.f32 %v131, %v81
  %v163 = vmul.f32 %v133, %v81
  %v164 = vmul.f32 %v135, %v81
  %v165 = vmul.f32 %v137, %v81
  %v166 = vmul.f32 %v139, %v81
  %v167 = vmul.f32 %v141, %v81
  %v168 = vmul.f32 %v143, %v81
  %v169 = vmul.f32 %v145, %v81
  %v170 = vmul.f32 %v147, %v81
  %v171 = vmul.f32 %v149, %v81
  %v172 = vmul.f32 %v151, %v81
  %v173 = vmul.f32 %v153, %v81
  %v174 = vmul.f32 %v155, %v81
  %v175 = vmul.f32 %v157, %v81
  %v176 = vmul.f32 %v159, %v81
  %v177 = vmul.f32 %v161, %v81
  %v178 = vadd.f32 %v162, 1e-12
  %v179 = vadd.f32 %v163, 1e-12
  %v180 = vadd.f32 %v164, 1e-12
  %v181 = vadd.f32 %v165, 1e-12
  %v182 = vadd.f32 %v166, 1e-12
  %v183 = vadd.f32 %v167, 1e-12
  %v184 = vadd.f32 %v168, 1e-12
  %v185 = vadd.f32 %v169, 1e-12
  %v186 = vadd.f32 %v170, 1e-12
  %v187 = vadd.f32 %v171, 1e-12
  %v188 = vadd.f32 %v172, 1e-12
  %v189 = vadd.f32 %v173, 1e-12
  %v190 = vadd.f32 %v174, 1e-12
  %v191 = vadd.f32 %v175, 1e-12
  %v192 = vadd.f32 %v176, 1e-12
  %v193 = vadd.f32 %v177, 1e-12
  %v194 = vrsqrt.pop %v178
  %v195 = vrsqrt.pop %v179
  %v196 = vrsqrt.pop %v180
  %v197 = vrsqrt.pop %v181
  %v198 = vrsqrt.pop %v182
  %v199 = vrsqrt.pop %v183
  %v200 = vrsqrt.pop %v184
  %v201 = vrsqrt.pop %v185
  %v202 = vrsqrt.pop %v186
  %v203 = vrsqrt.pop %v187
  %v204 = vrsqrt.pop %v188
  %v205 = vrsqrt.pop %v189
  %v206 = vrsqrt.pop %v190
  %v207 = vrsqrt.pop %v191
  %v208 = vrsqrt.pop %v192
  %v209 = vrsqrt.pop %v193
  %v210 = vmul.f32 %v98, %v194
  %v211 = vmul.f32 %v99, %v195
  %v212 = vmul.f32 %v100, %v196
  %v213 = vmul.f32 %v101, %v197
  %v214 = vmul.f32 %v102, %v198
  %v215 = vmul.f32 %v103, %v199
  %v216 = vmul.f32 %v104, %v200
  %v217 = vmul.f32 %v105, %v201
  %v218 = vmul.f32 %v106, %v202
  %v219 = vmul.f32 %v107, %v203
  %v220 = vmul.f32 %v108, %v204
  %v221 = vmul.f32 %v109, %v205
  %v222 = vmul.f32 %v110, %v206
  %v223 = vmul.f32 %v111, %v207
  %v224 = vmul.f32 %v112, %v208
  %v225 = vmul.f32 %v113, %v209
  %v226 = vlaneseq
  %v227 = vshrl.u32 %v226, 7
  %v228 = vsub.s32 0, %v227
  %v229 = vrot.slane %v47, %v228
  %v230 = vmul.f32 %v210, %v229
  %v231 = vmul.f32 %v211, %v229
  %v232 = vmul.f32 %v212, %v229
  %v233 = vmul.f32 %v213, %v229
  %v234 = vmul.f32 %v214, %v229
  %v235 = vmul.f32 %v215, %v229
  %v236 = vmul.f32 %v216, %v229
  %v237 = vmul.f32 %v217, %v229
  %v238 = vmul.f32 %v218, %v229
  %v239 = vmul.f32 %v219, %v229
  %v240 = vmul.f32 %v220, %v229
  %v241 = vmul.f32 %v221, %v229
  %v242 = vmul.f32 %v222, %v229
  %v243 = vmul.f32 %v223, %v229
  %v244 = vmul.f32 %v224, %v229
  %v245 = vmul.f32 %v225, %v229
  %v246 = vlaneseq
  %v247 = vshrl.u32 %v246, 7
  %v248 = vsub.s32 0, %v247
  %v249 = vrot.slane %v48, %v248
  %v250 = vadd.f32 %v230, %v249
  %v251 = vadd.f32 %v231, %v249
  %v252 = vadd.f32 %v232, %v249
  %v253 = vadd.f32 %v233, %v249
  %v254 = vadd.f32 %v234, %v249
  %v255 = vadd.f32 %v235, %v249
  %v256 = vadd.f32 %v236, %v249
  %v257 = vadd.f32 %v237, %v249
  %v258 = vadd.f32 %v238, %v249
  %v259 = vadd.f32 %v239, %v249
  %v260 = vadd.f32 %v240, %v249
  %v261 = vadd.f32 %v241, %v249
  %v262 = vadd.f32 %v242, %v249
  %v263 = vadd.f32 %v243, %v249
  %v264 = vadd.f32 %v244, %v249
  %v265 = vadd.f32 %v245, %v249
  %v266 = vpack.c.bf16 %v251, %v250
  %v267 = vpack.c.bf16 %v253, %v252
  %v268 = vpack.c.bf16 %v255, %v254
  %v269 = vpack.c.bf16 %v257, %v256
  %v270 = vpack.c.bf16 %v259, %v258
  %v271 = vpack.c.bf16 %v261, %v260
  %v272 = vpack.c.bf16 %v263, %v262
  %v273 = vpack.c.bf16 %v265, %v264
  %v274 = vld [vmem:[%s3] sm:$0xff]
  %v275 = vld [vmem:[%s3 + $0x8] sm:$0xf]
  %v276 = vld [vmem:[%s3 + $0xc] sm:$0xff]
  %v277 = vld [vmem:[%s3 + $0x14] sm:$0xf]
  %v278 = vld [vmem:[%s3 + $0x18] sm:$0xff]
  %v279 = vld [vmem:[%s3 + $0x20] sm:$0xf]
  %v280 = vld [vmem:[%s3 + $0x24] sm:$0xff]
  %v281 = vld [vmem:[%s3 + $0x2c] sm:$0xf]
  %v282 = vld [vmem:[%s3 + $0x30] sm:$0xff]
  %v283 = vld [vmem:[%s3 + $0x38] sm:$0xf]
  %v284 = vld [vmem:[%s3 + $0x3c] sm:$0xff]
  %v285 = vld [vmem:[%s3 + $0x44] sm:$0xf]
  %v286 = vld [vmem:[%s3 + $0x48] sm:$0xff]
  %v287 = vld [vmem:[%s3 + $0x50] sm:$0xf]
  %v288 = vld [vmem:[%s3 + $0x54] sm:$0xff]
  %v289 = vld [vmem:[%s3 + $0x5c] sm:$0xf]
  %v290 = vld [vmem:[%s3 + $0x60] sm:$0xff]
  %v291 = vld [vmem:[%s3 + $0x68] sm:$0xf]
  %v292 = vld [vmem:[%s3 + $0x6c] sm:$0xff]
  %v293 = vld [vmem:[%s3 + $0x74] sm:$0xf]
  %v294 = vld [vmem:[%s3 + $0x78] sm:$0xff]
  %v295 = vld [vmem:[%s3 + $0x80] sm:$0xf]
  %v296 = vld [vmem:[%s3 + $0x84] sm:$0xff]
  %v297 = vld [vmem:[%s3 + $0x8c] sm:$0xf]
  %v298 = vld [vmem:[%s3 + $0x90] sm:$0xff]
  %v299 = vld [vmem:[%s3 + $0x98] sm:$0xf]
  %v300 = vld [vmem:[%s3 + $0x9c] sm:$0xff]
  %v301 = vld [vmem:[%s3 + $0xa4] sm:$0xf]
  %v302 = vld [vmem:[%s3 + $0xa8] sm:$0xff]
  %v303 = vld [vmem:[%s3 + $0xb0] sm:$0xf]
  %v304 = vld [vmem:[%s3 + $0xb4] sm:$0xff]
  %v305 = vld [vmem:[%s3 + $0xbc] sm:$0xf]
  %v306 = vld [vmem:[%s7] sm:$0x7]
  %v308 = vlaneseq
  %v309 = vshrl.u32 %v308, 7
  %v310 = vsub.s32 0, %v309
  %v311 = vrot.slane %v306, %v310
  %v312 = vlaneseq
  %v313 = vshrl.u32 %v312, 7
  %v314 = vsub.s32 1, %v313
  %v315 = vrot.slane %v306, %v314
  %v316 = vlaneseq
  %v317 = vshrl.u32 %v316, 7
  %v318 = vsub.s32 2, %v317
  %v319 = vrot.slane %v306, %v318
  %v355 = vunpack.c.l.b16 %v274
  %v356 = vunpack.c.h.b16 %v274
  %v357 = vunpack.c.l.b16 %v275
  %v358 = vunpack.c.l.b16 %v276
  %v359 = vunpack.c.h.b16 %v276
  %v360 = vunpack.c.l.b16 %v277
  %v361 = vunpack.c.l.b16 %v278
  %v362 = vunpack.c.h.b16 %v278
  %v363 = vunpack.c.l.b16 %v279
  %v364 = vunpack.c.l.b16 %v280
  %v365 = vunpack.c.h.b16 %v280
  %v366 = vunpack.c.l.b16 %v281
  %v367 = vunpack.c.l.b16 %v282
  %v368 = vunpack.c.h.b16 %v282
  %v369 = vunpack.c.l.b16 %v283
  %v370 = vunpack.c.l.b16 %v284
  %v371 = vunpack.c.h.b16 %v284
  %v372 = vunpack.c.l.b16 %v285
  %v373 = vunpack.c.l.b16 %v286
  %v374 = vunpack.c.h.b16 %v286
  %v375 = vunpack.c.l.b16 %v287
  %v376 = vunpack.c.l.b16 %v288
  %v377 = vunpack.c.h.b16 %v288
  %v378 = vunpack.c.l.b16 %v289
  %v379 = vunpack.c.l.b16 %v290
  %v380 = vunpack.c.h.b16 %v290
  %v381 = vunpack.c.l.b16 %v291
  %v382 = vunpack.c.l.b16 %v292
  %v383 = vunpack.c.h.b16 %v292
  %v384 = vunpack.c.l.b16 %v293
  %v385 = vunpack.c.l.b16 %v294
  %v386 = vunpack.c.h.b16 %v294
  %v387 = vunpack.c.l.b16 %v295
  %v388 = vunpack.c.l.b16 %v296
  %v389 = vunpack.c.h.b16 %v296
  %v390 = vunpack.c.l.b16 %v297
  %v391 = vunpack.c.l.b16 %v298
  %v392 = vunpack.c.h.b16 %v298
  %v393 = vunpack.c.l.b16 %v299
  %v394 = vunpack.c.l.b16 %v300
  %v395 = vunpack.c.h.b16 %v300
  %v396 = vunpack.c.l.b16 %v301
  %v397 = vunpack.c.l.b16 %v302
  %v398 = vunpack.c.h.b16 %v302
  %v399 = vunpack.c.l.b16 %v303
  %v400 = vunpack.c.l.b16 %v304
  %v401 = vunpack.c.h.b16 %v304
  %v402 = vunpack.c.l.b16 %v305
  %v403 = vpack.c.b16 %v358, %v355
  %v404 = vpack.c.b16 %v359, %v356
  %v405 = vpack.c.b16 %v360, %v357
  %v406 = vpack.c.b16 %v364, %v361
  %v407 = vpack.c.b16 %v365, %v362
  %v408 = vpack.c.b16 %v366, %v363
  %v409 = vpack.c.b16 %v370, %v367
  %v410 = vpack.c.b16 %v371, %v368
  %v411 = vpack.c.b16 %v372, %v369
  %v412 = vpack.c.b16 %v376, %v373
  %v413 = vpack.c.b16 %v377, %v374
  %v414 = vpack.c.b16 %v378, %v375
  %v415 = vpack.c.b16 %v382, %v379
  %v416 = vpack.c.b16 %v383, %v380
  %v417 = vpack.c.b16 %v384, %v381
  %v418 = vpack.c.b16 %v388, %v385
  %v419 = vpack.c.b16 %v389, %v386
  %v420 = vpack.c.b16 %v390, %v387
  %v421 = vpack.c.b16 %v394, %v391
  %v422 = vpack.c.b16 %v395, %v392
  %v423 = vpack.c.b16 %v396, %v393
  %v424 = vpack.c.b16 %v400, %v397
  %v425 = vpack.c.b16 %v401, %v398
  %v426 = vpack.c.b16 %v402, %v399
  %451 = vmatprep.subr.bf16.mxu0 %v404
  %452 = vmatpush1.bf16.msra.mxu0 %v403
  %453 = vmatprep.subr.bf16.mxu0 %v407
  %454 = vmatpush1.bf16.msra.mxu0 %v406
  %455 = vmatprep.subr.bf16.mxu0 %v410
  %456 = vmatpush1.bf16.msra.mxu0 %v409
  %457 = vmatprep.subr.bf16.mxu0 %v413
  %458 = vmatpush1.bf16.msra.mxu0 %v412
  %459 = vmatprep.subr.bf16.mxu0 %v416
  %460 = vmatpush1.bf16.msra.mxu0 %v415
  %461 = vmatprep.subr.bf16.mxu0 %v419
  %462 = vmatpush1.bf16.msra.mxu0 %v418
  %463 = vmatprep.subr.bf16.mxu0 %v422
  %464 = vmatpush1.bf16.msra.mxu0 %v421
  %465 = vmatprep.subr.bf16.mxu0 %v425
  %466 = vmatpush1.bf16.msra.mxu0 %v424
  %467 = vmatprep.subr.bf16.mxu0 0
  %468 = vmatpush1.bf16.msra.mxu0 0
  %469 = vmatprep.subr.bf16.mxu0 0
  %470 = vmatpush1.bf16.msra.mxu0 0
  %471 = vmatprep.subr.bf16.mxu0 0
  %472 = vmatpush1.bf16.msra.mxu0 0
  %473 = vmatprep.subr.bf16.mxu0 0
  %474 = vmatpush1.bf16.msra.mxu0 0
  %475 = vmatprep.subr.bf16.mxu0 0
  %476 = vmatpush1.bf16.msra.mxu0 0
  %477 = vmatprep.subr.bf16.mxu0 0
  %478 = vmatpush1.bf16.msra.mxu0 0
  %479 = vmatprep.subr.bf16.mxu0 0
  %480 = vmatpush1.bf16.msra.mxu0 0
  %481 = vmatprep.subr.bf16.mxu0 0
  %482 = vmatpush1.bf16.msra.mxu0 0
  %483 = vmatprep.mubr.bf16.mxu0 0
  %484 = vmatmul.mubr.bf16.gmra.mrb[0].mxu0 %v266
  %v485 = vpop.f32.mrb[0].mxu0
  %v486 = vadd.f32 %v311, %v485
  %v487 = vpop.f32.mrb[0].mxu0
  %v488 = vadd.f32 %v315, %v487
  %v489 = vpop.f32.mrb[0].mxu0
  %v490 = vadd.f32 %v311, %v489
  %v491 = vpop.f32.mrb[0].mxu0
  %v492 = vadd.f32 %v315, %v491
  %493 = vmatprep.mubr.bf16.mxu0 0
  %494 = vmatmul.mubr.bf16.gmra.mrb[0].mxu0 %v267
  %v495 = vpop.f32.mrb[0].mxu0
  %v496 = vadd.f32 %v311, %v495
  %v497 = vpop.f32.mrb[0].mxu0
  %v498 = vadd.f32 %v315, %v497
  %v499 = vpop.f32.mrb[0].mxu0
  %v500 = vadd.f32 %v311, %v499
  %v501 = vpop.f32.mrb[0].mxu0
  %v502 = vadd.f32 %v315, %v501
  %503 = vmatprep.mubr.bf16.mxu0 0
  %504 = vmatmul.mubr.bf16.gmra.mrb[0].mxu0 %v268
  %v505 = vpop.f32.mrb[0].mxu0
  %v506 = vadd.f32 %v311, %v505
  %v507 = vpop.f32.mrb[0].mxu0
  %v508 = vadd.f32 %v315, %v507
  %v509 = vpop.f32.mrb[0].mxu0
  %v510 = vadd.f32 %v311, %v509
  %v511 = vpop.f32.mrb[0].mxu0
  %v512 = vadd.f32 %v315, %v511
  %513 = vmatprep.mubr.bf16.mxu0 0
  %514 = vmatmul.mubr.bf16.gmra.mrb[0].mxu0 %v269
  %v515 = vpop.f32.mrb[0].mxu0
  %v516 = vadd.f32 %v311, %v515
  %v517 = vpop.f32.mrb[0].mxu0
  %v518 = vadd.f32 %v315, %v517
  %v519 = vpop.f32.mrb[0].mxu0
  %v520 = vadd.f32 %v311, %v519
  %v521 = vpop.f32.mrb[0].mxu0
  %v522 = vadd.f32 %v315, %v521
  %523 = vmatprep.mubr.bf16.mxu0 0
  %524 = vmatmul.mubr.bf16.gmra.mrb[0].mxu0 %v270
  %v525 = vpop.f32.mrb[0].mxu0
  %v526 = vadd.f32 %v311, %v525
  %v527 = vpop.f32.mrb[0].mxu0
  %v528 = vadd.f32 %v315, %v527
  %v529 = vpop.f32.mrb[0].mxu0
  %v530 = vadd.f32 %v311, %v529
  %v531 = vpop.f32.mrb[0].mxu0
  %v532 = vadd.f32 %v315, %v531
  %533 = vmatprep.mubr.bf16.mxu0 0
  %534 = vmatmul.mubr.bf16.gmra.mrb[0].mxu0 %v271
  %v535 = vpop.f32.mrb[0].mxu0
  %v536 = vadd.f32 %v311, %v535
  %v537 = vpop.f32.mrb[0].mxu0
  %v538 = vadd.f32 %v315, %v537
  %v539 = vpop.f32.mrb[0].mxu0
  %v540 = vadd.f32 %v311, %v539
  %v541 = vpop.f32.mrb[0].mxu0
  %v542 = vadd.f32 %v315, %v541
  %543 = vmatprep.mubr.bf16.mxu0 0
  %544 = vmatmul.mubr.bf16.gmra.mrb[0].mxu0 %v272
  %v545 = vpop.f32.mrb[0].mxu0
  %v546 = vadd.f32 %v311, %v545
  %v547 = vpop.f32.mrb[0].mxu0
  %v548 = vadd.f32 %v315, %v547
  %v549 = vpop.f32.mrb[0].mxu0
  %v550 = vadd.f32 %v311, %v549
  %v551 = vpop.f32.mrb[0].mxu0
  %v552 = vadd.f32 %v315, %v551
  %553 = vmatprep.mubr.bf16.mxu0 0
  %554 = vmatmul.mubr.bf16.gmra.mrb[0].mxu0 %v273
  %v555 = vpop.f32.mrb[0].mxu0
  %v556 = vadd.f32 %v311, %v555
  %v557 = vpop.f32.mrb[0].mxu0
  %v558 = vadd.f32 %v315, %v557
  %v559 = vpop.f32.mrb[0].mxu0
  %v560 = vadd.f32 %v311, %v559
  %v561 = vpop.f32.mrb[0].mxu0
  %v562 = vadd.f32 %v315, %v561
  %563 = vdwg.mxu0
  %564 = vmatprep.subr.bf16.mxu0 0
  %565 = vmatpush1.bf16.msra.mxu0 %v405
  %566 = vmatprep.subr.bf16.mxu0 0
  %567 = vmatpush1.bf16.msra.mxu0 %v408
  %568 = vmatprep.subr.bf16.mxu0 0
  %569 = vmatpush1.bf16.msra.mxu0 %v411
  %570 = vmatprep.subr.bf16.mxu0 0
  %571 = vmatpush1.bf16.msra.mxu0 %v414
  %572 = vmatprep.subr.bf16.mxu0 0
  %573 = vmatpush1.bf16.msra.mxu0 %v417
  %574 = vmatprep.subr.bf16.mxu0 0
  %575 = vmatpush1.bf16.msra.mxu0 %v420
  %576 = vmatprep.subr.bf16.mxu0 0
  %577 = vmatpush1.bf16.msra.mxu0 %v423
  %578 = vmatprep.subr.bf16.mxu0 0
  %579 = vmatpush1.bf16.msra.mxu0 %v426
  %580 = vmatprep.subr.bf16.mxu0 0
  %581 = vmatpush1.bf16.msra.mxu0 0
  %582 = vmatprep.subr.bf16.mxu0 0
  %583 = vmatpush1.bf16.msra.mxu0 0
  %584 = vmatprep.subr.bf16.mxu0 0
  %585 = vmatpush1.bf16.msra.mxu0 0
  %586 = vmatprep.subr.bf16.mxu0 0
  %587 = vmatpush1.bf16.msra.mxu0 0
  %588 = vmatprep.subr.bf16.mxu0 0
  %589 = vmatpush1.bf16.msra.mxu0 0
  %590 = vmatprep.subr.bf16.mxu0 0
  %591 = vmatpush1.bf16.msra.mxu0 0
  %592 = vmatprep.subr.bf16.mxu0 0
  %593 = vmatpush1.bf16.msra.mxu0 0
  %594 = vmatprep.subr.bf16.mxu0 0
  %595 = vmatpush1.bf16.msra.mxu0 0
  %596 = vmatprep.mubr.bf16.mxu0 0
  %597 = vmatmul.mubr.bf16.gmra.mrb[0].mxu0 %v266
  %v598 = vpop.f32.mrb[0].mxu0
  %v599 = vadd.f32 %v319, %v598
  %v600 = vpop.f32.mrb[0].mxu0
  %v601 = vpop.f32.mrb[0].mxu0
  %v602 = vadd.f32 %v319, %v601
  %v603 = vpop.f32.mrb[0].mxu0
  %604 = vmatprep.mubr.bf16.mxu0 0
  %605 = vmatmul.mubr.bf16.gmra.mrb[0].mxu0 %v267
  %v606 = vpop.f32.mrb[0].mxu0
  %v607 = vadd.f32 %v319, %v606
  %v608 = vpop.f32.mrb[0].mxu0
  %v609 = vpop.f32.mrb[0].mxu0
  %v610 = vadd.f32 %v319, %v609
  %v611 = vpop.f32.mrb[0].mxu0
  %612 = vmatprep.mubr.bf16.mxu0 0
  %613 = vmatmul.mubr.bf16.gmra.mrb[0].mxu0 %v268
  %v614 = vpop.f32.mrb[0].mxu0
  %v615 = vadd.f32 %v319, %v614
  %v616 = vpop.f32.mrb[0].mxu0
  %v617 = vpop.f32.mrb[0].mxu0
  %v618 = vadd.f32 %v319, %v617
  %v619 = vpop.f32.mrb[0].mxu0
  %620 = vmatprep.mubr.bf16.mxu0 0
  %621 = vmatmul.mubr.bf16.gmra.mrb[0].mxu0 %v269
  %v622 = vpop.f32.mrb[0].mxu0
  %v623 = vadd.f32 %v319, %v622
  %v624 = vpop.f32.mrb[0].mxu0
  %v625 = vpop.f32.mrb[0].mxu0
  %v626 = vadd.f32 %v319, %v625
  %v627 = vpop.f32.mrb[0].mxu0
  %628 = vmatprep.mubr.bf16.mxu0 0
  %629 = vmatmul.mubr.bf16.gmra.mrb[0].mxu0 %v270
  %v630 = vpop.f32.mrb[0].mxu0
  %v631 = vadd.f32 %v319, %v630
  %v632 = vpop.f32.mrb[0].mxu0
  %v633 = vpop.f32.mrb[0].mxu0
  %v634 = vadd.f32 %v319, %v633
  %v635 = vpop.f32.mrb[0].mxu0
  %636 = vmatprep.mubr.bf16.mxu0 0
  %637 = vmatmul.mubr.bf16.gmra.mrb[0].mxu0 %v271
  %v638 = vpop.f32.mrb[0].mxu0
  %v639 = vadd.f32 %v319, %v638
  %v640 = vpop.f32.mrb[0].mxu0
  %v641 = vpop.f32.mrb[0].mxu0
  %v642 = vadd.f32 %v319, %v641
  %v643 = vpop.f32.mrb[0].mxu0
  %644 = vmatprep.mubr.bf16.mxu0 0
  %645 = vmatmul.mubr.bf16.gmra.mrb[0].mxu0 %v272
  %v646 = vpop.f32.mrb[0].mxu0
  %v647 = vadd.f32 %v319, %v646
  %v648 = vpop.f32.mrb[0].mxu0
  %v649 = vpop.f32.mrb[0].mxu0
  %v650 = vadd.f32 %v319, %v649
  %v651 = vpop.f32.mrb[0].mxu0
  %652 = vmatprep.mubr.bf16.mxu0 0
  %653 = vmatmul.mubr.bf16.gmra.mrb[0].mxu0 %v273
  %v654 = vpop.f32.mrb[0].mxu0
  %v655 = vadd.f32 %v319, %v654
  %v656 = vpop.f32.mrb[0].mxu0
  %v657 = vpop.f32.mrb[0].mxu0
  %v658 = vadd.f32 %v319, %v657
  %v659 = vpop.f32.mrb[0].mxu0
  %660 = vdwg.mxu0
  %v661 = vld [vmem:[%s7 + $0x3] sm:$0x1]
  %v662 = vpack.c.bf16 %v490, %v486
  %v663 = vpack.c.bf16 %v500, %v496
  %v664 = vpack.c.bf16 %v510, %v506
  %v665 = vpack.c.bf16 %v520, %v516
  %v666 = vpack.c.bf16 %v530, %v526
  %v667 = vpack.c.bf16 %v540, %v536
  %v668 = vpack.c.bf16 %v550, %v546
  %v669 = vpack.c.bf16 %v560, %v556
  %v670 = vpack.c.bf16 %v492, %v488
  %v671 = vpack.c.bf16 %v502, %v498
  %v672 = vpack.c.bf16 %v512, %v508
  %v673 = vpack.c.bf16 %v522, %v518
  %v674 = vpack.c.bf16 %v532, %v528
  %v675 = vpack.c.bf16 %v542, %v538
  %v676 = vpack.c.bf16 %v552, %v548
  %v677 = vpack.c.bf16 %v562, %v558
  %v678 = vpack.c.bf16 %v602, %v599
  %v679 = vpack.c.bf16 %v610, %v607
  %v680 = vpack.c.bf16 %v618, %v615
  %v681 = vpack.c.bf16 %v626, %v623
  %v682 = vpack.c.bf16 %v634, %v631
  %v683 = vpack.c.bf16 %v642, %v639
  %v684 = vpack.c.bf16 %v650, %v647
  %v685 = vpack.c.bf16 %v658, %v655
  %v687 = vlaneseq
  %v688 = vshrl.u32 %v687, 7
  %v689 = vsub.s32 0, %v688
  %v690 = vrot.slane %v30, %v689
  %vm692 = vcmask 523264
  %v694 = vsel %vm692, %v662, 0
  %v697 = vsel %vm692, %v663, 0
  %v700 = vsel %vm692, %v664, 0
  %v703 = vsel %vm692, %v665, 0
  %v706 = vsel %vm692, %v666, 0
  %v709 = vsel %vm692, %v667, 0
  %v712 = vsel %vm692, %v668, 0
  %v715 = vsel %vm692, %v669, 0
  %v718 = vsel %vm692, %v670, 0
  %v721 = vsel %vm692, %v671, 0
  %v724 = vsel %vm692, %v672, 0
  %v727 = vsel %vm692, %v673, 0
  %v730 = vsel %vm692, %v674, 0
  %v733 = vsel %vm692, %v675, 0
  %v736 = vsel %vm692, %v676, 0
  %v739 = vsel %vm692, %v677, 0
  %741 = vmatprep.subr.bf16.mxu0 0
  %742 = vmatpush1.bf16.xpose.msra.mxu0 %v718
  %743 = vmatprep.subr.bf16.mxu0 0
  %744 = vmatpush1.bf16.xpose.msra.mxu0 %v721
  %745 = vmatprep.subr.bf16.mxu0 0
  %746 = vmatpush1.bf16.xpose.msra.mxu0 %v724
  %747 = vmatprep.subr.bf16.mxu0 0
  %748 = vmatpush1.bf16.xpose.msra.mxu0 %v727
  %749 = vmatprep.subr.bf16.mxu0 0
  %750 = vmatpush1.bf16.xpose.msra.mxu0 %v730
  %751 = vmatprep.subr.bf16.mxu0 0
  %752 = vmatpush1.bf16.xpose.msra.mxu0 %v733
  %753 = vmatprep.subr.bf16.mxu0 0
  %754 = vmatpush1.bf16.xpose.msra.mxu0 %v736
  %755 = vmatprep.subr.bf16.mxu0 0
  %756 = vmatpush1.bf16.xpose.msra.mxu0 %v739
  %757 = vmatprep.subr.bf16.mxu0 0
  %758 = vmatpush1.bf16.xpose.msra.mxu0 0
  %759 = vmatprep.subr.bf16.mxu0 0
  %760 = vmatpush1.bf16.xpose.msra.mxu0 0
  %761 = vmatprep.subr.bf16.mxu0 0
  %762 = vmatpush1.bf16.xpose.msra.mxu0 0
  %763 = vmatprep.subr.bf16.mxu0 0
  %764 = vmatpush1.bf16.xpose.msra.mxu0 0
  %765 = vmatprep.subr.bf16.mxu0 0
  %766 = vmatpush1.bf16.xpose.msra.mxu0 0
  %767 = vmatprep.subr.bf16.mxu0 0
  %768 = vmatpush1.bf16.xpose.msra.mxu0 0
  %769 = vmatprep.subr.bf16.mxu0 0
  %770 = vmatpush1.bf16.xpose.msra.mxu0 0
  %771 = vmatprep.subr.bf16.mxu0 0
  %772 = vmatpush1.bf16.xpose.msra.mxu0 0
  %773 = vmatprep.mubr.bf16.mxu0 0
  %774 = vmatmul.mubr.bf16.gmra.mrb[0].mxu0 %v694
  %v775 = vpop.f32.mrb[0].mxu0
  %v776 = vadd.f32 %v690, %v775
  %v777 = vpop.f32.mrb[0].mxu0
  %v778 = vpop.f32.mrb[0].mxu0
  %v779 = vadd.f32 %v690, %v778
  %v780 = vpop.f32.mrb[0].mxu0
  %781 = vmatprep.mubr.bf16.mxu0 0
  %782 = vmatmul.mubr.bf16.gmra.mrb[0].mxu0 %v697
  %v783 = vpop.f32.mrb[0].mxu0
  %v784 = vadd.f32 %v690, %v783
  %v785 = vpop.f32.mrb[0].mxu0
  %v786 = vpop.f32.mrb[0].mxu0
  %v787 = vadd.f32 %v690, %v786
  %v788 = vpop.f32.mrb[0].mxu0
  %789 = vmatprep.mubr.bf16.mxu0 0
  %790 = vmatmul.mubr.bf16.gmra.mrb[0].mxu0 %v700
  %v791 = vpop.f32.mrb[0].mxu0
  %v792 = vadd.f32 %v690, %v791
  %v793 = vpop.f32.mrb[0].mxu0
  %v794 = vpop.f32.mrb[0].mxu0
  %v795 = vadd.f32 %v690, %v794
  %v796 = vpop.f32.mrb[0].mxu0
  %797 = vmatprep.mubr.bf16.mxu0 0
  %798 = vmatmul.mubr.bf16.gmra.mrb[0].mxu0 %v703
  %v799 = vpop.f32.mrb[0].mxu0
  %v800 = vadd.f32 %v690, %v799
  %v801 = vpop.f32.mrb[0].mxu0
  %v802 = vpop.f32.mrb[0].mxu0
  %v803 = vadd.f32 %v690, %v802
  %v804 = vpop.f32.mrb[0].mxu0
  %805 = vmatprep.mubr.bf16.mxu0 0
  %806 = vmatmul.mubr.bf16.gmra.mrb[0].mxu0 %v706
  %v807 = vpop.f32.mrb[0].mxu0
  %v808 = vadd.f32 %v690, %v807
  %v809 = vpop.f32.mrb[0].mxu0
  %v810 = vpop.f32.mrb[0].mxu0
  %v811 = vadd.f32 %v690, %v810
  %v812 = vpop.f32.mrb[0].mxu0
  %813 = vmatprep.mubr.bf16.mxu0 0
  %814 = vmatmul.mubr.bf16.gmra.mrb[0].mxu0 %v709
  %v815 = vpop.f32.mrb[0].mxu0
  %v816 = vadd.f32 %v690, %v815
  %v817 = vpop.f32.mrb[0].mxu0
  %v818 = vpop.f32.mrb[0].mxu0
  %v819 = vadd.f32 %v690, %v818
  %v820 = vpop.f32.mrb[0].mxu0
  %821 = vmatprep.mubr.bf16.mxu0 0
  %822 = vmatmul.mubr.bf16.gmra.mrb[0].mxu0 %v712
  %v823 = vpop.f32.mrb[0].mxu0
  %v824 = vadd.f32 %v690, %v823
  %v825 = vpop.f32.mrb[0].mxu0
  %v826 = vpop.f32.mrb[0].mxu0
  %v827 = vadd.f32 %v690, %v826
  %v828 = vpop.f32.mrb[0].mxu0
  %829 = vmatprep.mubr.bf16.mxu0 0
  %830 = vmatmul.mubr.bf16.gmra.mrb[0].mxu0 %v715
  %v831 = vpop.f32.mrb[0].mxu0
  %v832 = vadd.f32 %v690, %v831
  %v833 = vpop.f32.mrb[0].mxu0
  %v834 = vpop.f32.mrb[0].mxu0
  %v835 = vadd.f32 %v690, %v834
  %v836 = vpop.f32.mrb[0].mxu0
  %837 = vdwg.mxu0
  %838 = vmax.xlane.f32.xlu0 %v776
  %v839 = vpop.xlane.xlu0 %838
  %840 = vmax.xlane.f32.xlu0 %v779
  %v841 = vpop.xlane.xlu0 %840
  %842 = vmax.xlane.f32.xlu0 %v784
  %v843 = vpop.xlane.xlu0 %842
  %844 = vmax.xlane.f32.xlu0 %v787
  %v845 = vpop.xlane.xlu0 %844
  %846 = vmax.xlane.f32.xlu0 %v792
  %v847 = vpop.xlane.xlu0 %846
  %848 = vmax.xlane.f32.xlu0 %v795
  %v849 = vpop.xlane.xlu0 %848
  %850 = vmax.xlane.f32.xlu0 %v800
  %v851 = vpop.xlane.xlu0 %850
  %852 = vmax.xlane.f32.xlu0 %v803
  %v853 = vpop.xlane.xlu0 %852
  %854 = vmax.xlane.f32.xlu0 %v808
  %v855 = vpop.xlane.xlu0 %854
  %856 = vmax.xlane.f32.xlu0 %v811
  %v857 = vpop.xlane.xlu0 %856
  %858 = vmax.xlane.f32.xlu0 %v816
  %v859 = vpop.xlane.xlu0 %858
  %860 = vmax.xlane.f32.xlu0 %v819
  %v861 = vpop.xlane.xlu0 %860
  %862 = vmax.xlane.f32.xlu0 %v824
  %v863 = vpop.xlane.xlu0 %862
  %864 = vmax.xlane.f32.xlu0 %v827
  %v865 = vpop.xlane.xlu0 %864
  %866 = vmax.xlane.f32.xlu0 %v832
  %v867 = vpop.xlane.xlu0 %866
  %868 = vmax.xlane.f32.xlu0 %v835
  %v869 = vpop.xlane.xlu0 %868
  %v870 = vsub.f32 %v776, %v839
  %v871 = vsub.f32 %v779, %v841
  %v872 = vsub.f32 %v784, %v843
  %v873 = vsub.f32 %v787, %v845
  %v874 = vsub.f32 %v792, %v847
  %v875 = vsub.f32 %v795, %v849
  %v876 = vsub.f32 %v800, %v851
  %v877 = vsub.f32 %v803, %v853
  %v878 = vsub.f32 %v808, %v855
  %v879 = vsub.f32 %v811, %v857
  %v880 = vsub.f32 %v816, %v859
  %v881 = vsub.f32 %v819, %v861
  %v882 = vsub.f32 %v824, %v863
  %v883 = vsub.f32 %v827, %v865
  %v884 = vsub.f32 %v832, %v867
  %v885 = vsub.f32 %v835, %v869
  %v886 = vmul.f32 %v870, 1.442695
  %v887 = vpow.pop %v886
  %v888 = vmul.f32 %v871, 1.442695
  %v889 = vpow.pop %v888
  %v890 = vmul.f32 %v872, 1.442695
  %v891 = vpow.pop %v890
  %v892 = vmul.f32 %v873, 1.442695
  %v893 = vpow.pop %v892
  %v894 = vmul.f32 %v874, 1.442695
  %v895 = vpow.pop %v894
  %v896 = vmul.f32 %v875, 1.442695
  %v897 = vpow.pop %v896
  %v898 = vmul.f32 %v876, 1.442695
  %v899 = vpow.pop %v898
  %v900 = vmul.f32 %v877, 1.442695
  %v901 = vpow.pop %v900
  %v902 = vmul.f32 %v878, 1.442695
  %v903 = vpow.pop %v902
  %v904 = vmul.f32 %v879, 1.442695
  %v905 = vpow.pop %v904
  %v906 = vmul.f32 %v880, 1.442695
  %v907 = vpow.pop %v906
  %v908 = vmul.f32 %v881, 1.442695
  %v909 = vpow.pop %v908
  %v910 = vmul.f32 %v882, 1.442695
  %v911 = vpow.pop %v910
  %v912 = vmul.f32 %v883, 1.442695
  %v913 = vpow.pop %v912
  %v914 = vmul.f32 %v884, 1.442695
  %v915 = vpow.pop %v914
  %v916 = vmul.f32 %v885, 1.442695
  %v917 = vpow.pop %v916
  %918 = vadd.xlane.f32.xlu0 %v887
  %v919 = vpop.xlane.xlu0 %918
  %920 = vadd.xlane.f32.xlu0 %v889
  %v921 = vpop.xlane.xlu0 %920
  %922 = vadd.xlane.f32.xlu0 %v891
  %v923 = vpop.xlane.xlu0 %922
  %924 = vadd.xlane.f32.xlu0 %v893
  %v925 = vpop.xlane.xlu0 %924
  %926 = vadd.xlane.f32.xlu0 %v895
  %v927 = vpop.xlane.xlu0 %926
  %928 = vadd.xlane.f32.xlu0 %v897
  %v929 = vpop.xlane.xlu0 %928
  %930 = vadd.xlane.f32.xlu0 %v899
  %v931 = vpop.xlane.xlu0 %930
  %932 = vadd.xlane.f32.xlu0 %v901
  %v933 = vpop.xlane.xlu0 %932
  %934 = vadd.xlane.f32.xlu0 %v903
  %v935 = vpop.xlane.xlu0 %934
  %936 = vadd.xlane.f32.xlu0 %v905
  %v937 = vpop.xlane.xlu0 %936
  %938 = vadd.xlane.f32.xlu0 %v907
  %v939 = vpop.xlane.xlu0 %938
  %940 = vadd.xlane.f32.xlu0 %v909
  %v941 = vpop.xlane.xlu0 %940
  %942 = vadd.xlane.f32.xlu0 %v911
  %v943 = vpop.xlane.xlu0 %942
  %944 = vadd.xlane.f32.xlu0 %v913
  %v945 = vpop.xlane.xlu0 %944
  %946 = vadd.xlane.f32.xlu0 %v915
  %v947 = vpop.xlane.xlu0 %946
  %948 = vadd.xlane.f32.xlu0 %v917
  %v949 = vpop.xlane.xlu0 %948
  %v950 = vrcp.pop %v919
  %v951 = vrcp.pop %v921
  %v952 = vrcp.pop %v923
  %v953 = vrcp.pop %v925
  %v954 = vrcp.pop %v927
  %v955 = vrcp.pop %v929
  %v956 = vrcp.pop %v931
  %v957 = vrcp.pop %v933
  %v958 = vrcp.pop %v935
  %v959 = vrcp.pop %v937
  %v960 = vrcp.pop %v939
  %v961 = vrcp.pop %v941
  %v962 = vrcp.pop %v943
  %v963 = vrcp.pop %v945
  %v964 = vrcp.pop %v947
  %v965 = vrcp.pop %v949
  %v966 = vmul.f32 %v887, %v950
  %v967 = vmul.f32 %v889, %v951
  %v968 = vmul.f32 %v891, %v952
  %v969 = vmul.f32 %v893, %v953
  %v970 = vmul.f32 %v895, %v954
  %v971 = vmul.f32 %v897, %v955
  %v972 = vmul.f32 %v899, %v956
  %v973 = vmul.f32 %v901, %v957
  %v974 = vmul.f32 %v903, %v958
  %v975 = vmul.f32 %v905, %v959
  %v976 = vmul.f32 %v907, %v960
  %v977 = vmul.f32 %v909, %v961
  %v978 = vmul.f32 %v911, %v962
  %v979 = vmul.f32 %v913, %v963
  %v980 = vmul.f32 %v915, %v964
  %v981 = vmul.f32 %v917, %v965
  %v982 = vpack.c.bf16 %v967, %v966
  %v983 = vpack.c.bf16 %v969, %v968
  %v984 = vpack.c.bf16 %v971, %v970
  %v985 = vpack.c.bf16 %v973, %v972
  %v986 = vpack.c.bf16 %v975, %v974
  %v987 = vpack.c.bf16 %v977, %v976
  %v988 = vpack.c.bf16 %v979, %v978
  %v989 = vpack.c.bf16 %v981, %v980
  %990 = vmatprep.subr.bf16.mxu0 0
  %991 = vmatpush1.bf16.msra.mxu0 %v678
  %992 = vmatprep.subr.bf16.mxu0 0
  %993 = vmatpush1.bf16.msra.mxu0 %v679
  %994 = vmatprep.subr.bf16.mxu0 0
  %995 = vmatpush1.bf16.msra.mxu0 %v680
  %996 = vmatprep.subr.bf16.mxu0 0
  %997 = vmatpush1.bf16.msra.mxu0 %v681
  %998 = vmatprep.subr.bf16.mxu0 0
  %999 = vmatpush1.bf16.msra.mxu0 %v682
  %1000 = vmatprep.subr.bf16.mxu0 0
  %1001 = vmatpush1.bf16.msra.mxu0 %v683
  %1002 = vmatprep.subr.bf16.mxu0 0
  %1003 = vmatpush1.bf16.msra.mxu0 %v684
  %1004 = vmatprep.subr.bf16.mxu0 0
  %1005 = vmatpush1.bf16.msra.mxu0 %v685
  %1006 = vmatprep.subr.bf16.mxu0 0
  %1007 = vmatpush1.bf16.msra.mxu0 0
  %1008 = vmatprep.subr.bf16.mxu0 0
  %1009 = vmatpush1.bf16.msra.mxu0 0
  %1010 = vmatprep.subr.bf16.mxu0 0
  %1011 = vmatpush1.bf16.msra.mxu0 0
  %1012 = vmatprep.subr.bf16.mxu0 0
  %1013 = vmatpush1.bf16.msra.mxu0 0
  %1014 = vmatprep.subr.bf16.mxu0 0
  %1015 = vmatpush1.bf16.msra.mxu0 0
  %1016 = vmatprep.subr.bf16.mxu0 0
  %1017 = vmatpush1.bf16.msra.mxu0 0
  %1018 = vmatprep.subr.bf16.mxu0 0
  %1019 = vmatpush1.bf16.msra.mxu0 0
  %1020 = vmatprep.subr.bf16.mxu0 0
  %1021 = vmatpush1.bf16.msra.mxu0 0
  %1022 = vmatprep.mubr.bf16.mxu0 0
  %1023 = vmatmul.mubr.bf16.gmra.mrb[0].mxu0 %v982
  %v1024 = vpop.f32.mrb[0].mxu0
  %v1025 = vadd.f32 0.0, %v1024
  %v1026 = vpop.f32.mrb[0].mxu0
  %v1027 = vpop.f32.mrb[0].mxu0
  %v1028 = vadd.f32 0.0, %v1027
  %v1029 = vpop.f32.mrb[0].mxu0
  %1030 = vmatprep.mubr.bf16.mxu0 0
  %1031 = vmatmul.mubr.bf16.gmra.mrb[0].mxu0 %v983
  %v1032 = vpop.f32.mrb[0].mxu0
  %v1033 = vadd.f32 0.0, %v1032
  %v1034 = vpop.f32.mrb[0].mxu0
  %v1035 = vpop.f32.mrb[0].mxu0
  %v1036 = vadd.f32 0.0, %v1035
  %v1037 = vpop.f32.mrb[0].mxu0
  %1038 = vmatprep.mubr.bf16.mxu0 0
  %1039 = vmatmul.mubr.bf16.gmra.mrb[0].mxu0 %v984
  %v1040 = vpop.f32.mrb[0].mxu0
  %v1041 = vadd.f32 0.0, %v1040
  %v1042 = vpop.f32.mrb[0].mxu0
  %v1043 = vpop.f32.mrb[0].mxu0
  %v1044 = vadd.f32 0.0, %v1043
  %v1045 = vpop.f32.mrb[0].mxu0
  %1046 = vmatprep.mubr.bf16.mxu0 0
  %1047 = vmatmul.mubr.bf16.gmra.mrb[0].mxu0 %v985
  %v1048 = vpop.f32.mrb[0].mxu0
  %v1049 = vadd.f32 0.0, %v1048
  %v1050 = vpop.f32.mrb[0].mxu0
  %v1051 = vpop.f32.mrb[0].mxu0
  %v1052 = vadd.f32 0.0, %v1051
  %v1053 = vpop.f32.mrb[0].mxu0
  %1054 = vmatprep.mubr.bf16.mxu0 0
  %1055 = vmatmul.mubr.bf16.gmra.mrb[0].mxu0 %v986
  %v1056 = vpop.f32.mrb[0].mxu0
  %v1057 = vadd.f32 0.0, %v1056
  %v1058 = vpop.f32.mrb[0].mxu0
  %v1059 = vpop.f32.mrb[0].mxu0
  %v1060 = vadd.f32 0.0, %v1059
  %v1061 = vpop.f32.mrb[0].mxu0
  %1062 = vmatprep.mubr.bf16.mxu0 0
  %1063 = vmatmul.mubr.bf16.gmra.mrb[0].mxu0 %v987
  %v1064 = vpop.f32.mrb[0].mxu0
  %v1065 = vadd.f32 0.0, %v1064
  %v1066 = vpop.f32.mrb[0].mxu0
  %v1067 = vpop.f32.mrb[0].mxu0
  %v1068 = vadd.f32 0.0, %v1067
  %v1069 = vpop.f32.mrb[0].mxu0
  %1070 = vmatprep.mubr.bf16.mxu0 0
  %1071 = vmatmul.mubr.bf16.gmra.mrb[0].mxu0 %v988
  %v1072 = vpop.f32.mrb[0].mxu0
  %v1073 = vadd.f32 0.0, %v1072
  %v1074 = vpop.f32.mrb[0].mxu0
  %v1075 = vpop.f32.mrb[0].mxu0
  %v1076 = vadd.f32 0.0, %v1075
  %v1077 = vpop.f32.mrb[0].mxu0
  %1078 = vmatprep.mubr.bf16.mxu0 0
  %1079 = vmatmul.mubr.bf16.gmra.mrb[0].mxu0 %v989
  %v1080 = vpop.f32.mrb[0].mxu0
  %v1081 = vadd.f32 0.0, %v1080
  %v1082 = vpop.f32.mrb[0].mxu0
  %v1083 = vpop.f32.mrb[0].mxu0
  %v1084 = vadd.f32 0.0, %v1083
  %v1085 = vpop.f32.mrb[0].mxu0
  %1086 = vdwg.mxu0
  %v1087 = vpack.c.bf16 %v1028, %v1025
  %v1088 = vpack.c.bf16 %v1036, %v1033
  %v1089 = vpack.c.bf16 %v1044, %v1041
  %v1090 = vpack.c.bf16 %v1052, %v1049
  %v1091 = vpack.c.bf16 %v1060, %v1057
  %v1092 = vpack.c.bf16 %v1068, %v1065
  %v1093 = vpack.c.bf16 %v1076, %v1073
  %v1094 = vpack.c.bf16 %v1084, %v1081
  %v1095 = vld [vmem:[%s4] sm:$0xf]
  %v1096 = vld [vmem:[%s4 + $0x4] sm:$0xf]
  %v1097 = vld [vmem:[%s4 + $0x8] sm:$0xf]
  %v1098 = vld [vmem:[%s4 + $0xc] sm:$0xf]
  %v1099 = vld [vmem:[%s4 + $0x10] sm:$0xf]
  %v1100 = vld [vmem:[%s4 + $0x14] sm:$0xf]
  %v1101 = vld [vmem:[%s4 + $0x18] sm:$0xf]
  %v1102 = vld [vmem:[%s4 + $0x1c] sm:$0xf]
  %v1111 = vunpack.c.l.b16 %v1095
  %v1112 = vunpack.c.l.b16 %v1096
  %v1113 = vunpack.c.l.b16 %v1097
  %v1114 = vunpack.c.l.b16 %v1098
  %v1115 = vunpack.c.l.b16 %v1099
  %v1116 = vunpack.c.l.b16 %v1100
  %v1117 = vunpack.c.l.b16 %v1101
  %v1118 = vunpack.c.l.b16 %v1102
  %v1119 = vpack.c.b16 %v1112, %v1111
  %v1120 = vpack.c.b16 %v1114, %v1113
  %v1121 = vpack.c.b16 %v1116, %v1115
  %v1122 = vpack.c.b16 %v1118, %v1117
  %v1128 = vsel %vm692, %v1087, 0
  %v1131 = vsel %vm692, %v1088, 0
  %v1134 = vsel %vm692, %v1089, 0
  %v1137 = vsel %vm692, %v1090, 0
  %v1140 = vsel %vm692, %v1091, 0
  %v1143 = vsel %vm692, %v1092, 0
  %v1146 = vsel %vm692, %v1093, 0
  %v1149 = vsel %vm692, %v1094, 0
  %1151 = vmatprep.subr.bf16.mxu0 0
  %1152 = vmatpush1.bf16.msra.mxu0 %v1119
  %1153 = vmatprep.subr.bf16.mxu0 0
  %1154 = vmatpush1.bf16.msra.mxu0 %v1120
  %1155 = vmatprep.subr.bf16.mxu0 0
  %1156 = vmatpush1.bf16.msra.mxu0 %v1121
  %1157 = vmatprep.subr.bf16.mxu0 0
  %1158 = vmatpush1.bf16.msra.mxu0 %v1122
  %1159 = vmatprep.subr.bf16.mxu0 0
  %1160 = vmatpush1.bf16.msra.mxu0 0
  %1161 = vmatprep.subr.bf16.mxu0 0
  %1162 = vmatpush1.bf16.msra.mxu0 0
  %1163 = vmatprep.subr.bf16.mxu0 0
  %1164 = vmatpush1.bf16.msra.mxu0 0
  %1165 = vmatprep.subr.bf16.mxu0 0
  %1166 = vmatpush1.bf16.msra.mxu0 0
  %1167 = vmatprep.subr.bf16.mxu0 0
  %1168 = vmatpush1.bf16.msra.mxu0 0
  %1169 = vmatprep.subr.bf16.mxu0 0
  %1170 = vmatpush1.bf16.msra.mxu0 0
  %1171 = vmatprep.subr.bf16.mxu0 0
  %1172 = vmatpush1.bf16.msra.mxu0 0
  %1173 = vmatprep.subr.bf16.mxu0 0
  %1174 = vmatpush1.bf16.msra.mxu0 0
  %1175 = vmatprep.subr.bf16.mxu0 0
  %1176 = vmatpush1.bf16.msra.mxu0 0
  %1177 = vmatprep.subr.bf16.mxu0 0
  %1178 = vmatpush1.bf16.msra.mxu0 0
  %1179 = vmatprep.subr.bf16.mxu0 0
  %1180 = vmatpush1.bf16.msra.mxu0 0
  %1181 = vmatprep.subr.bf16.mxu0 0
  %1182 = vmatpush1.bf16.msra.mxu0 0
  %1183 = vmatprep.mubr.bf16.mxu0 0
  %1184 = vmatmul.mubr.bf16.gmra.mrb[0].mxu0 %v1128
  %v1185 = vpop.f32.mrb[0].mxu0
  %v1186 = vadd.f32 0.0, %v1185
  %v1187 = vpop.f32.mrb[0].mxu0
  %v1188 = vpop.f32.mrb[0].mxu0
  %v1189 = vadd.f32 0.0, %v1188
  %v1190 = vpop.f32.mrb[0].mxu0
  %1191 = vmatprep.mubr.bf16.mxu0 0
  %1192 = vmatmul.mubr.bf16.gmra.mrb[0].mxu0 %v1131
  %v1193 = vpop.f32.mrb[0].mxu0
  %v1194 = vadd.f32 0.0, %v1193
  %v1195 = vpop.f32.mrb[0].mxu0
  %v1196 = vpop.f32.mrb[0].mxu0
  %v1197 = vadd.f32 0.0, %v1196
  %v1198 = vpop.f32.mrb[0].mxu0
  %1199 = vmatprep.mubr.bf16.mxu0 0
  %1200 = vmatmul.mubr.bf16.gmra.mrb[0].mxu0 %v1134
  %v1201 = vpop.f32.mrb[0].mxu0
  %v1202 = vadd.f32 0.0, %v1201
  %v1203 = vpop.f32.mrb[0].mxu0
  %v1204 = vpop.f32.mrb[0].mxu0
  %v1205 = vadd.f32 0.0, %v1204
  %v1206 = vpop.f32.mrb[0].mxu0
  %1207 = vmatprep.mubr.bf16.mxu0 0
  %1208 = vmatmul.mubr.bf16.gmra.mrb[0].mxu0 %v1137
  %v1209 = vpop.f32.mrb[0].mxu0
  %v1210 = vadd.f32 0.0, %v1209
  %v1211 = vpop.f32.mrb[0].mxu0
  %v1212 = vpop.f32.mrb[0].mxu0
  %v1213 = vadd.f32 0.0, %v1212
  %v1214 = vpop.f32.mrb[0].mxu0
  %1215 = vmatprep.mubr.bf16.mxu0 0
  %1216 = vmatmul.mubr.bf16.gmra.mrb[0].mxu0 %v1140
  %v1217 = vpop.f32.mrb[0].mxu0
  %v1218 = vadd.f32 0.0, %v1217
  %v1219 = vpop.f32.mrb[0].mxu0
  %v1220 = vpop.f32.mrb[0].mxu0
  %v1221 = vadd.f32 0.0, %v1220
  %v1222 = vpop.f32.mrb[0].mxu0
  %1223 = vmatprep.mubr.bf16.mxu0 0
  %1224 = vmatmul.mubr.bf16.gmra.mrb[0].mxu0 %v1143
  %v1225 = vpop.f32.mrb[0].mxu0
  %v1226 = vadd.f32 0.0, %v1225
  %v1227 = vpop.f32.mrb[0].mxu0
  %v1228 = vpop.f32.mrb[0].mxu0
  %v1229 = vadd.f32 0.0, %v1228
  %v1230 = vpop.f32.mrb[0].mxu0
  %1231 = vmatprep.mubr.bf16.mxu0 0
  %1232 = vmatmul.mubr.bf16.gmra.mrb[0].mxu0 %v1146
  %v1233 = vpop.f32.mrb[0].mxu0
  %v1234 = vadd.f32 0.0, %v1233
  %v1235 = vpop.f32.mrb[0].mxu0
  %v1236 = vpop.f32.mrb[0].mxu0
  %v1237 = vadd.f32 0.0, %v1236
  %v1238 = vpop.f32.mrb[0].mxu0
  %1239 = vmatprep.mubr.bf16.mxu0 0
  %1240 = vmatmul.mubr.bf16.gmra.mrb[0].mxu0 %v1149
  %v1241 = vpop.f32.mrb[0].mxu0
  %v1242 = vadd.f32 0.0, %v1241
  %v1243 = vpop.f32.mrb[0].mxu0
  %v1244 = vpop.f32.mrb[0].mxu0
  %v1245 = vadd.f32 0.0, %v1244
  %v1246 = vpop.f32.mrb[0].mxu0
  %1247 = vdwg.mxu0
  %v1249 = vlaneseq
  %v1250 = vshrl.u32 %v1249, 7
  %v1251 = vsub.s32 0, %v1250
  %v1252 = vrot.slane %v661, %v1251
  %v1254 = vadd.f32 %v1252, %v1186
  %v1255 = vadd.f32 %v1252, %v1189
  %v1256 = vadd.f32 %v1252, %v1194
  %v1257 = vadd.f32 %v1252, %v1197
  %v1258 = vadd.f32 %v1252, %v1202
  %v1259 = vadd.f32 %v1252, %v1205
  %v1260 = vadd.f32 %v1252, %v1210
  %v1261 = vadd.f32 %v1252, %v1213
  %v1262 = vadd.f32 %v1252, %v1218
  %v1263 = vadd.f32 %v1252, %v1221
  %v1264 = vadd.f32 %v1252, %v1226
  %v1265 = vadd.f32 %v1252, %v1229
  %v1266 = vadd.f32 %v1252, %v1234
  %v1267 = vadd.f32 %v1252, %v1237
  %v1268 = vadd.f32 %v1252, %v1242
  %v1269 = vadd.f32 %v1252, %v1245
  %1278 = vrot.lane.b32.xlu0 %v662, 64
  %v1279 = vpop.permute.xlu0 %1278
  %1280 = vrot.lane.b32.xlu0 %v663, 64
  %v1281 = vpop.permute.xlu0 %1280
  %1282 = vrot.lane.b32.xlu0 %v664, 64
  %v1283 = vpop.permute.xlu0 %1282
  %1284 = vrot.lane.b32.xlu0 %v665, 64
  %v1285 = vpop.permute.xlu0 %1284
  %1286 = vrot.lane.b32.xlu0 %v666, 64
  %v1287 = vpop.permute.xlu0 %1286
  %1288 = vrot.lane.b32.xlu0 %v667, 64
  %v1289 = vpop.permute.xlu0 %1288
  %1290 = vrot.lane.b32.xlu0 %v668, 64
  %v1291 = vpop.permute.xlu0 %1290
  %1292 = vrot.lane.b32.xlu0 %v669, 64
  %v1293 = vpop.permute.xlu0 %1292
  %1302 = vrot.lane.b32.xlu0 %v670, 64
  %v1303 = vpop.permute.xlu0 %1302
  %1304 = vrot.lane.b32.xlu0 %v671, 64
  %v1305 = vpop.permute.xlu0 %1304
  %1306 = vrot.lane.b32.xlu0 %v672, 64
  %v1307 = vpop.permute.xlu0 %1306
  %1308 = vrot.lane.b32.xlu0 %v673, 64
  %v1309 = vpop.permute.xlu0 %1308
  %1310 = vrot.lane.b32.xlu0 %v674, 64
  %v1311 = vpop.permute.xlu0 %1310
  %1312 = vrot.lane.b32.xlu0 %v675, 64
  %v1313 = vpop.permute.xlu0 %1312
  %1314 = vrot.lane.b32.xlu0 %v676, 64
  %v1315 = vpop.permute.xlu0 %1314
  %1316 = vrot.lane.b32.xlu0 %v677, 64
  %v1317 = vpop.permute.xlu0 %1316
  %v1319 = vsel %vm692, %v1279, 0
  %v1322 = vsel %vm692, %v1281, 0
  %v1325 = vsel %vm692, %v1283, 0
  %v1328 = vsel %vm692, %v1285, 0
  %v1331 = vsel %vm692, %v1287, 0
  %v1334 = vsel %vm692, %v1289, 0
  %v1337 = vsel %vm692, %v1291, 0
  %v1340 = vsel %vm692, %v1293, 0
  %v1343 = vsel %vm692, %v1303, 0
  %v1346 = vsel %vm692, %v1305, 0
  %v1349 = vsel %vm692, %v1307, 0
  %v1352 = vsel %vm692, %v1309, 0
  %v1355 = vsel %vm692, %v1311, 0
  %v1358 = vsel %vm692, %v1313, 0
  %v1361 = vsel %vm692, %v1315, 0
  %v1364 = vsel %vm692, %v1317, 0
  %1366 = vmatprep.subr.bf16.mxu0 0
  %1367 = vmatpush1.bf16.xpose.msra.mxu0 %v1343
  %1368 = vmatprep.subr.bf16.mxu0 0
  %1369 = vmatpush1.bf16.xpose.msra.mxu0 %v1346
  %1370 = vmatprep.subr.bf16.mxu0 0
  %1371 = vmatpush1.bf16.xpose.msra.mxu0 %v1349
  %1372 = vmatprep.subr.bf16.mxu0 0
  %1373 = vmatpush1.bf16.xpose.msra.mxu0 %v1352
  %1374 = vmatprep.subr.bf16.mxu0 0
  %1375 = vmatpush1.bf16.xpose.msra.mxu0 %v1355
  %1376 = vmatprep.subr.bf16.mxu0 0
  %1377 = vmatpush1.bf16.xpose.msra.mxu0 %v1358
  %1378 = vmatprep.subr.bf16.mxu0 0
  %1379 = vmatpush1.bf16.xpose.msra.mxu0 %v1361
  %1380 = vmatprep.subr.bf16.mxu0 0
  %1381 = vmatpush1.bf16.xpose.msra.mxu0 %v1364
  %1382 = vmatprep.subr.bf16.mxu0 0
  %1383 = vmatpush1.bf16.xpose.msra.mxu0 0
  %1384 = vmatprep.subr.bf16.mxu0 0
  %1385 = vmatpush1.bf16.xpose.msra.mxu0 0
  %1386 = vmatprep.subr.bf16.mxu0 0
  %1387 = vmatpush1.bf16.xpose.msra.mxu0 0
  %1388 = vmatprep.subr.bf16.mxu0 0
  %1389 = vmatpush1.bf16.xpose.msra.mxu0 0
  %1390 = vmatprep.subr.bf16.mxu0 0
  %1391 = vmatpush1.bf16.xpose.msra.mxu0 0
  %1392 = vmatprep.subr.bf16.mxu0 0
  %1393 = vmatpush1.bf16.xpose.msra.mxu0 0
  %1394 = vmatprep.subr.bf16.mxu0 0
  %1395 = vmatpush1.bf16.xpose.msra.mxu0 0
  %1396 = vmatprep.subr.bf16.mxu0 0
  %1397 = vmatpush1.bf16.xpose.msra.mxu0 0
  %1398 = vmatprep.mubr.bf16.mxu0 0
  %1399 = vmatmul.mubr.bf16.gmra.mrb[0].mxu0 %v1319
  %v1400 = vpop.f32.mrb[0].mxu0
  %v1401 = vadd.f32 %v690, %v1400
  %v1402 = vpop.f32.mrb[0].mxu0
  %v1403 = vpop.f32.mrb[0].mxu0
  %v1404 = vadd.f32 %v690, %v1403
  %v1405 = vpop.f32.mrb[0].mxu0
  %1406 = vmatprep.mubr.bf16.mxu0 0
  %1407 = vmatmul.mubr.bf16.gmra.mrb[0].mxu0 %v1322
  %v1408 = vpop.f32.mrb[0].mxu0
  %v1409 = vadd.f32 %v690, %v1408
  %v1410 = vpop.f32.mrb[0].mxu0
  %v1411 = vpop.f32.mrb[0].mxu0
  %v1412 = vadd.f32 %v690, %v1411
  %v1413 = vpop.f32.mrb[0].mxu0
  %1414 = vmatprep.mubr.bf16.mxu0 0
  %1415 = vmatmul.mubr.bf16.gmra.mrb[0].mxu0 %v1325
  %v1416 = vpop.f32.mrb[0].mxu0
  %v1417 = vadd.f32 %v690, %v1416
  %v1418 = vpop.f32.mrb[0].mxu0
  %v1419 = vpop.f32.mrb[0].mxu0
  %v1420 = vadd.f32 %v690, %v1419
  %v1421 = vpop.f32.mrb[0].mxu0
  %1422 = vmatprep.mubr.bf16.mxu0 0
  %1423 = vmatmul.mubr.bf16.gmra.mrb[0].mxu0 %v1328
  %v1424 = vpop.f32.mrb[0].mxu0
  %v1425 = vadd.f32 %v690, %v1424
  %v1426 = vpop.f32.mrb[0].mxu0
  %v1427 = vpop.f32.mrb[0].mxu0
  %v1428 = vadd.f32 %v690, %v1427
  %v1429 = vpop.f32.mrb[0].mxu0
  %1430 = vmatprep.mubr.bf16.mxu0 0
  %1431 = vmatmul.mubr.bf16.gmra.mrb[0].mxu0 %v1331
  %v1432 = vpop.f32.mrb[0].mxu0
  %v1433 = vadd.f32 %v690, %v1432
  %v1434 = vpop.f32.mrb[0].mxu0
  %v1435 = vpop.f32.mrb[0].mxu0
  %v1436 = vadd.f32 %v690, %v1435
  %v1437 = vpop.f32.mrb[0].mxu0
  %1438 = vmatprep.mubr.bf16.mxu0 0
  %1439 = vmatmul.mubr.bf16.gmra.mrb[0].mxu0 %v1334
  %v1440 = vpop.f32.mrb[0].mxu0
  %v1441 = vadd.f32 %v690, %v1440
  %v1442 = vpop.f32.mrb[0].mxu0
  %v1443 = vpop.f32.mrb[0].mxu0
  %v1444 = vadd.f32 %v690, %v1443
  %v1445 = vpop.f32.mrb[0].mxu0
  %1446 = vmatprep.mubr.bf16.mxu0 0
  %1447 = vmatmul.mubr.bf16.gmra.mrb[0].mxu0 %v1337
  %v1448 = vpop.f32.mrb[0].mxu0
  %v1449 = vadd.f32 %v690, %v1448
  %v1450 = vpop.f32.mrb[0].mxu0
  %v1451 = vpop.f32.mrb[0].mxu0
  %v1452 = vadd.f32 %v690, %v1451
  %v1453 = vpop.f32.mrb[0].mxu0
  %1454 = vmatprep.mubr.bf16.mxu0 0
  %1455 = vmatmul.mubr.bf16.gmra.mrb[0].mxu0 %v1340
  %v1456 = vpop.f32.mrb[0].mxu0
  %v1457 = vadd.f32 %v690, %v1456
  %v1458 = vpop.f32.mrb[0].mxu0
  %v1459 = vpop.f32.mrb[0].mxu0
  %v1460 = vadd.f32 %v690, %v1459
  %v1461 = vpop.f32.mrb[0].mxu0
  %1462 = vdwg.mxu0
  %1463 = vmax.xlane.f32.xlu0 %v1401
  %v1464 = vpop.xlane.xlu0 %1463
  %1465 = vmax.xlane.f32.xlu0 %v1404
  %v1466 = vpop.xlane.xlu0 %1465
  %1467 = vmax.xlane.f32.xlu0 %v1409
  %v1468 = vpop.xlane.xlu0 %1467
  %1469 = vmax.xlane.f32.xlu0 %v1412
  %v1470 = vpop.xlane.xlu0 %1469
  %1471 = vmax.xlane.f32.xlu0 %v1417
  %v1472 = vpop.xlane.xlu0 %1471
  %1473 = vmax.xlane.f32.xlu0 %v1420
  %v1474 = vpop.xlane.xlu0 %1473
  %1475 = vmax.xlane.f32.xlu0 %v1425
  %v1476 = vpop.xlane.xlu0 %1475
  %1477 = vmax.xlane.f32.xlu0 %v1428
  %v1478 = vpop.xlane.xlu0 %1477
  %1479 = vmax.xlane.f32.xlu0 %v1433
  %v1480 = vpop.xlane.xlu0 %1479
  %1481 = vmax.xlane.f32.xlu0 %v1436
  %v1482 = vpop.xlane.xlu0 %1481
  %1483 = vmax.xlane.f32.xlu0 %v1441
  %v1484 = vpop.xlane.xlu0 %1483
  %1485 = vmax.xlane.f32.xlu0 %v1444
  %v1486 = vpop.xlane.xlu0 %1485
  %1487 = vmax.xlane.f32.xlu0 %v1449
  %v1488 = vpop.xlane.xlu0 %1487
  %1489 = vmax.xlane.f32.xlu0 %v1452
  %v1490 = vpop.xlane.xlu0 %1489
  %1491 = vmax.xlane.f32.xlu0 %v1457
  %v1492 = vpop.xlane.xlu0 %1491
  %1493 = vmax.xlane.f32.xlu0 %v1460
  %v1494 = vpop.xlane.xlu0 %1493
  %v1495 = vsub.f32 %v1401, %v1464
  %v1496 = vsub.f32 %v1404, %v1466
  %v1497 = vsub.f32 %v1409, %v1468
  %v1498 = vsub.f32 %v1412, %v1470
  %v1499 = vsub.f32 %v1417, %v1472
  %v1500 = vsub.f32 %v1420, %v1474
  %v1501 = vsub.f32 %v1425, %v1476
  %v1502 = vsub.f32 %v1428, %v1478
  %v1503 = vsub.f32 %v1433, %v1480
  %v1504 = vsub.f32 %v1436, %v1482
  %v1505 = vsub.f32 %v1441, %v1484
  %v1506 = vsub.f32 %v1444, %v1486
  %v1507 = vsub.f32 %v1449, %v1488
  %v1508 = vsub.f32 %v1452, %v1490
  %v1509 = vsub.f32 %v1457, %v1492
  %v1510 = vsub.f32 %v1460, %v1494
  %v1511 = vmul.f32 %v1495, 1.442695
  %v1512 = vpow.pop %v1511
  %v1513 = vmul.f32 %v1496, 1.442695
  %v1514 = vpow.pop %v1513
  %v1515 = vmul.f32 %v1497, 1.442695
  %v1516 = vpow.pop %v1515
  %v1517 = vmul.f32 %v1498, 1.442695
  %v1518 = vpow.pop %v1517
  %v1519 = vmul.f32 %v1499, 1.442695
  %v1520 = vpow.pop %v1519
  %v1521 = vmul.f32 %v1500, 1.442695
  %v1522 = vpow.pop %v1521
  %v1523 = vmul.f32 %v1501, 1.442695
  %v1524 = vpow.pop %v1523
  %v1525 = vmul.f32 %v1502, 1.442695
  %v1526 = vpow.pop %v1525
  %v1527 = vmul.f32 %v1503, 1.442695
  %v1528 = vpow.pop %v1527
  %v1529 = vmul.f32 %v1504, 1.442695
  %v1530 = vpow.pop %v1529
  %v1531 = vmul.f32 %v1505, 1.442695
  %v1532 = vpow.pop %v1531
  %v1533 = vmul.f32 %v1506, 1.442695
  %v1534 = vpow.pop %v1533
  %v1535 = vmul.f32 %v1507, 1.442695
  %v1536 = vpow.pop %v1535
  %v1537 = vmul.f32 %v1508, 1.442695
  %v1538 = vpow.pop %v1537
  %v1539 = vmul.f32 %v1509, 1.442695
  %v1540 = vpow.pop %v1539
  %v1541 = vmul.f32 %v1510, 1.442695
  %v1542 = vpow.pop %v1541
  %1543 = vadd.xlane.f32.xlu0 %v1512
  %v1544 = vpop.xlane.xlu0 %1543
  %1545 = vadd.xlane.f32.xlu0 %v1514
  %v1546 = vpop.xlane.xlu0 %1545
  %1547 = vadd.xlane.f32.xlu0 %v1516
  %v1548 = vpop.xlane.xlu0 %1547
  %1549 = vadd.xlane.f32.xlu0 %v1518
  %v1550 = vpop.xlane.xlu0 %1549
  %1551 = vadd.xlane.f32.xlu0 %v1520
  %v1552 = vpop.xlane.xlu0 %1551
  %1553 = vadd.xlane.f32.xlu0 %v1522
  %v1554 = vpop.xlane.xlu0 %1553
  %1555 = vadd.xlane.f32.xlu0 %v1524
  %v1556 = vpop.xlane.xlu0 %1555
  %1557 = vadd.xlane.f32.xlu0 %v1526
  %v1558 = vpop.xlane.xlu0 %1557
  %1559 = vadd.xlane.f32.xlu0 %v1528
  %v1560 = vpop.xlane.xlu0 %1559
  %1561 = vadd.xlane.f32.xlu0 %v1530
  %v1562 = vpop.xlane.xlu0 %1561
  %1563 = vadd.xlane.f32.xlu0 %v1532
  %v1564 = vpop.xlane.xlu0 %1563
  %1565 = vadd.xlane.f32.xlu0 %v1534
  %v1566 = vpop.xlane.xlu0 %1565
  %1567 = vadd.xlane.f32.xlu0 %v1536
  %v1568 = vpop.xlane.xlu0 %1567
  %1569 = vadd.xlane.f32.xlu0 %v1538
  %v1570 = vpop.xlane.xlu0 %1569
  %1571 = vadd.xlane.f32.xlu0 %v1540
  %v1572 = vpop.xlane.xlu0 %1571
  %1573 = vadd.xlane.f32.xlu0 %v1542
  %v1574 = vpop.xlane.xlu0 %1573
  %v1575 = vrcp.pop %v1544
  %v1576 = vrcp.pop %v1546
  %v1577 = vrcp.pop %v1548
  %v1578 = vrcp.pop %v1550
  %v1579 = vrcp.pop %v1552
  %v1580 = vrcp.pop %v1554
  %v1581 = vrcp.pop %v1556
  %v1582 = vrcp.pop %v1558
  %v1583 = vrcp.pop %v1560
  %v1584 = vrcp.pop %v1562
  %v1585 = vrcp.pop %v1564
  %v1586 = vrcp.pop %v1566
  %v1587 = vrcp.pop %v1568
  %v1588 = vrcp.pop %v1570
  %v1589 = vrcp.pop %v1572
  %v1590 = vrcp.pop %v1574
  %v1591 = vmul.f32 %v1512, %v1575
  %v1592 = vmul.f32 %v1514, %v1576
  %v1593 = vmul.f32 %v1516, %v1577
  %v1594 = vmul.f32 %v1518, %v1578
  %v1595 = vmul.f32 %v1520, %v1579
  %v1596 = vmul.f32 %v1522, %v1580
  %v1597 = vmul.f32 %v1524, %v1581
  %v1598 = vmul.f32 %v1526, %v1582
  %v1599 = vmul.f32 %v1528, %v1583
  %v1600 = vmul.f32 %v1530, %v1584
  %v1601 = vmul.f32 %v1532, %v1585
  %v1602 = vmul.f32 %v1534, %v1586
  %v1603 = vmul.f32 %v1536, %v1587
  %v1604 = vmul.f32 %v1538, %v1588
  %v1605 = vmul.f32 %v1540, %v1589
  %v1606 = vmul.f32 %v1542, %v1590
  %v1607 = vpack.c.bf16 %v1592, %v1591
  %v1608 = vpack.c.bf16 %v1594, %v1593
  %v1609 = vpack.c.bf16 %v1596, %v1595
  %v1610 = vpack.c.bf16 %v1598, %v1597
  %v1611 = vpack.c.bf16 %v1600, %v1599
  %v1612 = vpack.c.bf16 %v1602, %v1601
  %v1613 = vpack.c.bf16 %v1604, %v1603
  %v1614 = vpack.c.bf16 %v1606, %v1605
  %1623 = vrot.lane.b32.xlu0 %v678, 64
  %v1624 = vpop.permute.xlu0 %1623
  %1625 = vrot.lane.b32.xlu0 %v679, 64
  %v1626 = vpop.permute.xlu0 %1625
  %1627 = vrot.lane.b32.xlu0 %v680, 64
  %v1628 = vpop.permute.xlu0 %1627
  %1629 = vrot.lane.b32.xlu0 %v681, 64
  %v1630 = vpop.permute.xlu0 %1629
  %1631 = vrot.lane.b32.xlu0 %v682, 64
  %v1632 = vpop.permute.xlu0 %1631
  %1633 = vrot.lane.b32.xlu0 %v683, 64
  %v1634 = vpop.permute.xlu0 %1633
  %1635 = vrot.lane.b32.xlu0 %v684, 64
  %v1636 = vpop.permute.xlu0 %1635
  %1637 = vrot.lane.b32.xlu0 %v685, 64
  %v1638 = vpop.permute.xlu0 %1637
  %1647 = vmatprep.subr.bf16.mxu0 0
  %1648 = vmatpush1.bf16.msra.mxu0 %v1624
  %1649 = vmatprep.subr.bf16.mxu0 0
  %1650 = vmatpush1.bf16.msra.mxu0 %v1626
  %1651 = vmatprep.subr.bf16.mxu0 0
  %1652 = vmatpush1.bf16.msra.mxu0 %v1628
  %1653 = vmatprep.subr.bf16.mxu0 0
  %1654 = vmatpush1.bf16.msra.mxu0 %v1630
  %1655 = vmatprep.subr.bf16.mxu0 0
  %1656 = vmatpush1.bf16.msra.mxu0 %v1632
  %1657 = vmatprep.subr.bf16.mxu0 0
  %1658 = vmatpush1.bf16.msra.mxu0 %v1634
  %1659 = vmatprep.subr.bf16.mxu0 0
  %1660 = vmatpush1.bf16.msra.mxu0 %v1636
  %1661 = vmatprep.subr.bf16.mxu0 0
  %1662 = vmatpush1.bf16.msra.mxu0 %v1638
  %1663 = vmatprep.subr.bf16.mxu0 0
  %1664 = vmatpush1.bf16.msra.mxu0 0
  %1665 = vmatprep.subr.bf16.mxu0 0
  %1666 = vmatpush1.bf16.msra.mxu0 0
  %1667 = vmatprep.subr.bf16.mxu0 0
  %1668 = vmatpush1.bf16.msra.mxu0 0
  %1669 = vmatprep.subr.bf16.mxu0 0
  %1670 = vmatpush1.bf16.msra.mxu0 0
  %1671 = vmatprep.subr.bf16.mxu0 0
  %1672 = vmatpush1.bf16.msra.mxu0 0
  %1673 = vmatprep.subr.bf16.mxu0 0
  %1674 = vmatpush1.bf16.msra.mxu0 0
  %1675 = vmatprep.subr.bf16.mxu0 0
  %1676 = vmatpush1.bf16.msra.mxu0 0
  %1677 = vmatprep.subr.bf16.mxu0 0
  %1678 = vmatpush1.bf16.msra.mxu0 0
  %1679 = vmatprep.mubr.bf16.mxu0 0
  %1680 = vmatmul.mubr.bf16.gmra.mrb[0].mxu0 %v1607
  %v1681 = vpop.f32.mrb[0].mxu0
  %v1682 = vadd.f32 0.0, %v1681
  %v1683 = vpop.f32.mrb[0].mxu0
  %v1684 = vpop.f32.mrb[0].mxu0
  %v1685 = vadd.f32 0.0, %v1684
  %v1686 = vpop.f32.mrb[0].mxu0
  %1687 = vmatprep.mubr.bf16.mxu0 0
  %1688 = vmatmul.mubr.bf16.gmra.mrb[0].mxu0 %v1608
  %v1689 = vpop.f32.mrb[0].mxu0
  %v1690 = vadd.f32 0.0, %v1689
  %v1691 = vpop.f32.mrb[0].mxu0
  %v1692 = vpop.f32.mrb[0].mxu0
  %v1693 = vadd.f32 0.0, %v1692
  %v1694 = vpop.f32.mrb[0].mxu0
  %1695 = vmatprep.mubr.bf16.mxu0 0
  %1696 = vmatmul.mubr.bf16.gmra.mrb[0].mxu0 %v1609
  %v1697 = vpop.f32.mrb[0].mxu0
  %v1698 = vadd.f32 0.0, %v1697
  %v1699 = vpop.f32.mrb[0].mxu0
  %v1700 = vpop.f32.mrb[0].mxu0
  %v1701 = vadd.f32 0.0, %v1700
  %v1702 = vpop.f32.mrb[0].mxu0
  %1703 = vmatprep.mubr.bf16.mxu0 0
  %1704 = vmatmul.mubr.bf16.gmra.mrb[0].mxu0 %v1610
  %v1705 = vpop.f32.mrb[0].mxu0
  %v1706 = vadd.f32 0.0, %v1705
  %v1707 = vpop.f32.mrb[0].mxu0
  %v1708 = vpop.f32.mrb[0].mxu0
  %v1709 = vadd.f32 0.0, %v1708
  %v1710 = vpop.f32.mrb[0].mxu0
  %1711 = vmatprep.mubr.bf16.mxu0 0
  %1712 = vmatmul.mubr.bf16.gmra.mrb[0].mxu0 %v1611
  %v1713 = vpop.f32.mrb[0].mxu0
  %v1714 = vadd.f32 0.0, %v1713
  %v1715 = vpop.f32.mrb[0].mxu0
  %v1716 = vpop.f32.mrb[0].mxu0
  %v1717 = vadd.f32 0.0, %v1716
  %v1718 = vpop.f32.mrb[0].mxu0
  %1719 = vmatprep.mubr.bf16.mxu0 0
  %1720 = vmatmul.mubr.bf16.gmra.mrb[0].mxu0 %v1612
  %v1721 = vpop.f32.mrb[0].mxu0
  %v1722 = vadd.f32 0.0, %v1721
  %v1723 = vpop.f32.mrb[0].mxu0
  %v1724 = vpop.f32.mrb[0].mxu0
  %v1725 = vadd.f32 0.0, %v1724
  %v1726 = vpop.f32.mrb[0].mxu0
  %1727 = vmatprep.mubr.bf16.mxu0 0
  %1728 = vmatmul.mubr.bf16.gmra.mrb[0].mxu0 %v1613
  %v1729 = vpop.f32.mrb[0].mxu0
  %v1730 = vadd.f32 0.0, %v1729
  %v1731 = vpop.f32.mrb[0].mxu0
  %v1732 = vpop.f32.mrb[0].mxu0
  %v1733 = vadd.f32 0.0, %v1732
  %v1734 = vpop.f32.mrb[0].mxu0
  %1735 = vmatprep.mubr.bf16.mxu0 0
  %1736 = vmatmul.mubr.bf16.gmra.mrb[0].mxu0 %v1614
  %v1737 = vpop.f32.mrb[0].mxu0
  %v1738 = vadd.f32 0.0, %v1737
  %v1739 = vpop.f32.mrb[0].mxu0
  %v1740 = vpop.f32.mrb[0].mxu0
  %v1741 = vadd.f32 0.0, %v1740
  %v1742 = vpop.f32.mrb[0].mxu0
  %1743 = vdwg.mxu0
  %v1744 = vpack.c.bf16 %v1685, %v1682
  %v1745 = vpack.c.bf16 %v1693, %v1690
  %v1746 = vpack.c.bf16 %v1701, %v1698
  %v1747 = vpack.c.bf16 %v1709, %v1706
  %v1748 = vpack.c.bf16 %v1717, %v1714
  %v1749 = vpack.c.bf16 %v1725, %v1722
  %v1750 = vpack.c.bf16 %v1733, %v1730
  %v1751 = vpack.c.bf16 %v1741, %v1738
  %v1752 = vld [vmem:[%s4 + $0x20] sm:$0xf]
  %v1753 = vld [vmem:[%s4 + $0x24] sm:$0xf]
  %v1754 = vld [vmem:[%s4 + $0x28] sm:$0xf]
  %v1755 = vld [vmem:[%s4 + $0x2c] sm:$0xf]
  %v1756 = vld [vmem:[%s4 + $0x30] sm:$0xf]
  %v1757 = vld [vmem:[%s4 + $0x34] sm:$0xf]
  %v1758 = vld [vmem:[%s4 + $0x38] sm:$0xf]
  %v1759 = vld [vmem:[%s4 + $0x3c] sm:$0xf]
  %v1768 = vunpack.c.l.b16 %v1752
  %v1769 = vunpack.c.l.b16 %v1753
  %v1770 = vunpack.c.l.b16 %v1754
  %v1771 = vunpack.c.l.b16 %v1755
  %v1772 = vunpack.c.l.b16 %v1756
  %v1773 = vunpack.c.l.b16 %v1757
  %v1774 = vunpack.c.l.b16 %v1758
  %v1775 = vunpack.c.l.b16 %v1759
  %v1776 = vpack.c.b16 %v1769, %v1768
  %v1777 = vpack.c.b16 %v1771, %v1770
  %v1778 = vpack.c.b16 %v1773, %v1772
  %v1779 = vpack.c.b16 %v1775, %v1774
  %v1785 = vsel %vm692, %v1744, 0
  %v1788 = vsel %vm692, %v1745, 0
  %v1791 = vsel %vm692, %v1746, 0
  %v1794 = vsel %vm692, %v1747, 0
  %v1797 = vsel %vm692, %v1748, 0
  %v1800 = vsel %vm692, %v1749, 0
  %v1803 = vsel %vm692, %v1750, 0
  %v1806 = vsel %vm692, %v1751, 0
  %1808 = vmatprep.subr.bf16.mxu0 0
  %1809 = vmatpush1.bf16.msra.mxu0 %v1776
  %1810 = vmatprep.subr.bf16.mxu0 0
  %1811 = vmatpush1.bf16.msra.mxu0 %v1777
  %1812 = vmatprep.subr.bf16.mxu0 0
  %1813 = vmatpush1.bf16.msra.mxu0 %v1778
  %1814 = vmatprep.subr.bf16.mxu0 0
  %1815 = vmatpush1.bf16.msra.mxu0 %v1779
  %1816 = vmatprep.subr.bf16.mxu0 0
  %1817 = vmatpush1.bf16.msra.mxu0 0
  %1818 = vmatprep.subr.bf16.mxu0 0
  %1819 = vmatpush1.bf16.msra.mxu0 0
  %1820 = vmatprep.subr.bf16.mxu0 0
  %1821 = vmatpush1.bf16.msra.mxu0 0
  %1822 = vmatprep.subr.bf16.mxu0 0
  %1823 = vmatpush1.bf16.msra.mxu0 0
  %1824 = vmatprep.subr.bf16.mxu0 0
  %1825 = vmatpush1.bf16.msra.mxu0 0
  %1826 = vmatprep.subr.bf16.mxu0 0
  %1827 = vmatpush1.bf16.msra.mxu0 0
  %1828 = vmatprep.subr.bf16.mxu0 0
  %1829 = vmatpush1.bf16.msra.mxu0 0
  %1830 = vmatprep.subr.bf16.mxu0 0
  %1831 = vmatpush1.bf16.msra.mxu0 0
  %1832 = vmatprep.subr.bf16.mxu0 0
  %1833 = vmatpush1.bf16.msra.mxu0 0
  %1834 = vmatprep.subr.bf16.mxu0 0
  %1835 = vmatpush1.bf16.msra.mxu0 0
  %1836 = vmatprep.subr.bf16.mxu0 0
  %1837 = vmatpush1.bf16.msra.mxu0 0
  %1838 = vmatprep.subr.bf16.mxu0 0
  %1839 = vmatpush1.bf16.msra.mxu0 0
  %1840 = vmatprep.mubr.bf16.mxu0 0
  %1841 = vmatmul.mubr.bf16.gmra.mrb[0].mxu0 %v1785
  %v1842 = vpop.f32.mrb[0].mxu0
  %v1843 = vadd.f32 0.0, %v1842
  %v1844 = vpop.f32.mrb[0].mxu0
  %v1845 = vpop.f32.mrb[0].mxu0
  %v1846 = vadd.f32 0.0, %v1845
  %v1847 = vpop.f32.mrb[0].mxu0
  %1848 = vmatprep.mubr.bf16.mxu0 0
  %1849 = vmatmul.mubr.bf16.gmra.mrb[0].mxu0 %v1788
  %v1850 = vpop.f32.mrb[0].mxu0
  %v1851 = vadd.f32 0.0, %v1850
  %v1852 = vpop.f32.mrb[0].mxu0
  %v1853 = vpop.f32.mrb[0].mxu0
  %v1854 = vadd.f32 0.0, %v1853
  %v1855 = vpop.f32.mrb[0].mxu0
  %1856 = vmatprep.mubr.bf16.mxu0 0
  %1857 = vmatmul.mubr.bf16.gmra.mrb[0].mxu0 %v1791
  %v1858 = vpop.f32.mrb[0].mxu0
  %v1859 = vadd.f32 0.0, %v1858
  %v1860 = vpop.f32.mrb[0].mxu0
  %v1861 = vpop.f32.mrb[0].mxu0
  %v1862 = vadd.f32 0.0, %v1861
  %v1863 = vpop.f32.mrb[0].mxu0
  %1864 = vmatprep.mubr.bf16.mxu0 0
  %1865 = vmatmul.mubr.bf16.gmra.mrb[0].mxu0 %v1794
  %v1866 = vpop.f32.mrb[0].mxu0
  %v1867 = vadd.f32 0.0, %v1866
  %v1868 = vpop.f32.mrb[0].mxu0
  %v1869 = vpop.f32.mrb[0].mxu0
  %v1870 = vadd.f32 0.0, %v1869
  %v1871 = vpop.f32.mrb[0].mxu0
  %1872 = vmatprep.mubr.bf16.mxu0 0
  %1873 = vmatmul.mubr.bf16.gmra.mrb[0].mxu0 %v1797
  %v1874 = vpop.f32.mrb[0].mxu0
  %v1875 = vadd.f32 0.0, %v1874
  %v1876 = vpop.f32.mrb[0].mxu0
  %v1877 = vpop.f32.mrb[0].mxu0
  %v1878 = vadd.f32 0.0, %v1877
  %v1879 = vpop.f32.mrb[0].mxu0
  %1880 = vmatprep.mubr.bf16.mxu0 0
  %1881 = vmatmul.mubr.bf16.gmra.mrb[0].mxu0 %v1800
  %v1882 = vpop.f32.mrb[0].mxu0
  %v1883 = vadd.f32 0.0, %v1882
  %v1884 = vpop.f32.mrb[0].mxu0
  %v1885 = vpop.f32.mrb[0].mxu0
  %v1886 = vadd.f32 0.0, %v1885
  %v1887 = vpop.f32.mrb[0].mxu0
  %1888 = vmatprep.mubr.bf16.mxu0 0
  %1889 = vmatmul.mubr.bf16.gmra.mrb[0].mxu0 %v1803
  %v1890 = vpop.f32.mrb[0].mxu0
  %v1891 = vadd.f32 0.0, %v1890
  %v1892 = vpop.f32.mrb[0].mxu0
  %v1893 = vpop.f32.mrb[0].mxu0
  %v1894 = vadd.f32 0.0, %v1893
  %v1895 = vpop.f32.mrb[0].mxu0
  %1896 = vmatprep.mubr.bf16.mxu0 0
  %1897 = vmatmul.mubr.bf16.gmra.mrb[0].mxu0 %v1806
  %v1898 = vpop.f32.mrb[0].mxu0
  %v1899 = vadd.f32 0.0, %v1898
  %v1900 = vpop.f32.mrb[0].mxu0
  %v1901 = vpop.f32.mrb[0].mxu0
  %v1902 = vadd.f32 0.0, %v1901
  %v1903 = vpop.f32.mrb[0].mxu0
  %1904 = vdwg.mxu0
  %v1905 = vadd.f32 %v1254, %v1843
  %v1906 = vadd.f32 %v1255, %v1846
  %v1907 = vadd.f32 %v1256, %v1851
  %v1908 = vadd.f32 %v1257, %v1854
  %v1909 = vadd.f32 %v1258, %v1859
  %v1910 = vadd.f32 %v1259, %v1862
  %v1911 = vadd.f32 %v1260, %v1867
  %v1912 = vadd.f32 %v1261, %v1870
  %v1913 = vadd.f32 %v1262, %v1875
  %v1914 = vadd.f32 %v1263, %v1878
  %v1915 = vadd.f32 %v1264, %v1883
  %v1916 = vadd.f32 %v1265, %v1886
  %v1917 = vadd.f32 %v1266, %v1891
  %v1918 = vadd.f32 %v1267, %v1894
  %v1919 = vadd.f32 %v1268, %v1899
  %v1920 = vadd.f32 %v1269, %v1902
  %v1921 = vadd.f32 %v1905, %v250
  %v1922 = vadd.f32 %v1906, %v251
  %v1923 = vadd.f32 %v1907, %v252
  %v1924 = vadd.f32 %v1908, %v253
  %v1925 = vadd.f32 %v1909, %v254
  %v1926 = vadd.f32 %v1910, %v255
  %v1927 = vadd.f32 %v1911, %v256
  %v1928 = vadd.f32 %v1912, %v257
  %v1929 = vadd.f32 %v1913, %v258
  %v1930 = vadd.f32 %v1914, %v259
  %v1931 = vadd.f32 %v1915, %v260
  %v1932 = vadd.f32 %v1916, %v261
  %v1933 = vadd.f32 %v1917, %v262
  %v1934 = vadd.f32 %v1918, %v263
  %v1935 = vadd.f32 %v1919, %v264
  %v1936 = vadd.f32 %v1920, %v265
  %v1937 = vld [vmem:[%s7 + $0x7] sm:$0x1]
  %v1938 = vld [vmem:[%s7 + $0x8] sm:$0x1]
  %1939 = vadd.xlane.f32.xlu0 %v1921
  %v1940 = vpop.xlane.xlu0 %1939
  %1941 = vadd.xlane.f32.xlu0 %v1922
  %v1942 = vpop.xlane.xlu0 %1941
  %1943 = vadd.xlane.f32.xlu0 %v1923
  %v1944 = vpop.xlane.xlu0 %1943
  %1945 = vadd.xlane.f32.xlu0 %v1924
  %v1946 = vpop.xlane.xlu0 %1945
  %1947 = vadd.xlane.f32.xlu0 %v1925
  %v1948 = vpop.xlane.xlu0 %1947
  %1949 = vadd.xlane.f32.xlu0 %v1926
  %v1950 = vpop.xlane.xlu0 %1949
  %1951 = vadd.xlane.f32.xlu0 %v1927
  %v1952 = vpop.xlane.xlu0 %1951
  %1953 = vadd.xlane.f32.xlu0 %v1928
  %v1954 = vpop.xlane.xlu0 %1953
  %1955 = vadd.xlane.f32.xlu0 %v1929
  %v1956 = vpop.xlane.xlu0 %1955
  %1957 = vadd.xlane.f32.xlu0 %v1930
  %v1958 = vpop.xlane.xlu0 %1957
  %1959 = vadd.xlane.f32.xlu0 %v1931
  %v1960 = vpop.xlane.xlu0 %1959
  %1961 = vadd.xlane.f32.xlu0 %v1932
  %v1962 = vpop.xlane.xlu0 %1961
  %1963 = vadd.xlane.f32.xlu0 %v1933
  %v1964 = vpop.xlane.xlu0 %1963
  %1965 = vadd.xlane.f32.xlu0 %v1934
  %v1966 = vpop.xlane.xlu0 %1965
  %1967 = vadd.xlane.f32.xlu0 %v1935
  %v1968 = vpop.xlane.xlu0 %1967
  %1969 = vadd.xlane.f32.xlu0 %v1936
  %v1970 = vpop.xlane.xlu0 %1969
  %v1971 = vmul.f32 %v1940, %v81
  %v1972 = vmul.f32 %v1942, %v81
  %v1973 = vmul.f32 %v1944, %v81
  %v1974 = vmul.f32 %v1946, %v81
  %v1975 = vmul.f32 %v1948, %v81
  %v1976 = vmul.f32 %v1950, %v81
  %v1977 = vmul.f32 %v1952, %v81
  %v1978 = vmul.f32 %v1954, %v81
  %v1979 = vmul.f32 %v1956, %v81
  %v1980 = vmul.f32 %v1958, %v81
  %v1981 = vmul.f32 %v1960, %v81
  %v1982 = vmul.f32 %v1962, %v81
  %v1983 = vmul.f32 %v1964, %v81
  %v1984 = vmul.f32 %v1966, %v81
  %v1985 = vmul.f32 %v1968, %v81
  %v1986 = vmul.f32 %v1970, %v81
  %v1987 = vsub.f32 %v1921, %v1971
  %v1988 = vsub.f32 %v1922, %v1972
  %v1989 = vsub.f32 %v1923, %v1973
  %v1990 = vsub.f32 %v1924, %v1974
  %v1991 = vsub.f32 %v1925, %v1975
  %v1992 = vsub.f32 %v1926, %v1976
  %v1993 = vsub.f32 %v1927, %v1977
  %v1994 = vsub.f32 %v1928, %v1978
  %v1995 = vsub.f32 %v1929, %v1979
  %v1996 = vsub.f32 %v1930, %v1980
  %v1997 = vsub.f32 %v1931, %v1981
  %v1998 = vsub.f32 %v1932, %v1982
  %v1999 = vsub.f32 %v1933, %v1983
  %v2000 = vsub.f32 %v1934, %v1984
  %v2001 = vsub.f32 %v1935, %v1985
  %v2002 = vsub.f32 %v1936, %v1986
  %v2003 = vmul.f32 %v1987, %v1987
  %v2004 = vmul.f32 %v1988, %v1988
  %v2005 = vmul.f32 %v1989, %v1989
  %v2006 = vmul.f32 %v1990, %v1990
  %v2007 = vmul.f32 %v1991, %v1991
  %v2008 = vmul.f32 %v1992, %v1992
  %v2009 = vmul.f32 %v1993, %v1993
  %v2010 = vmul.f32 %v1994, %v1994
  %v2011 = vmul.f32 %v1995, %v1995
  %v2012 = vmul.f32 %v1996, %v1996
  %v2013 = vmul.f32 %v1997, %v1997
  %v2014 = vmul.f32 %v1998, %v1998
  %v2015 = vmul.f32 %v1999, %v1999
  %v2016 = vmul.f32 %v2000, %v2000
  %v2017 = vmul.f32 %v2001, %v2001
  %v2018 = vmul.f32 %v2002, %v2002
  %2019 = vadd.xlane.f32.xlu0 %v2003
  %v2020 = vpop.xlane.xlu0 %2019
  %2021 = vadd.xlane.f32.xlu0 %v2004
  %v2022 = vpop.xlane.xlu0 %2021
  %2023 = vadd.xlane.f32.xlu0 %v2005
  %v2024 = vpop.xlane.xlu0 %2023
  %2025 = vadd.xlane.f32.xlu0 %v2006
  %v2026 = vpop.xlane.xlu0 %2025
  %2027 = vadd.xlane.f32.xlu0 %v2007
  %v2028 = vpop.xlane.xlu0 %2027
  %2029 = vadd.xlane.f32.xlu0 %v2008
  %v2030 = vpop.xlane.xlu0 %2029
  %2031 = vadd.xlane.f32.xlu0 %v2009
  %v2032 = vpop.xlane.xlu0 %2031
  %2033 = vadd.xlane.f32.xlu0 %v2010
  %v2034 = vpop.xlane.xlu0 %2033
  %2035 = vadd.xlane.f32.xlu0 %v2011
  %v2036 = vpop.xlane.xlu0 %2035
  %2037 = vadd.xlane.f32.xlu0 %v2012
  %v2038 = vpop.xlane.xlu0 %2037
  %2039 = vadd.xlane.f32.xlu0 %v2013
  %v2040 = vpop.xlane.xlu0 %2039
  %2041 = vadd.xlane.f32.xlu0 %v2014
  %v2042 = vpop.xlane.xlu0 %2041
  %2043 = vadd.xlane.f32.xlu0 %v2015
  %v2044 = vpop.xlane.xlu0 %2043
  %2045 = vadd.xlane.f32.xlu0 %v2016
  %v2046 = vpop.xlane.xlu0 %2045
  %2047 = vadd.xlane.f32.xlu0 %v2017
  %v2048 = vpop.xlane.xlu0 %2047
  %2049 = vadd.xlane.f32.xlu0 %v2018
  %v2050 = vpop.xlane.xlu0 %2049
  %v2051 = vmul.f32 %v2020, %v81
  %v2052 = vmul.f32 %v2022, %v81
  %v2053 = vmul.f32 %v2024, %v81
  %v2054 = vmul.f32 %v2026, %v81
  %v2055 = vmul.f32 %v2028, %v81
  %v2056 = vmul.f32 %v2030, %v81
  %v2057 = vmul.f32 %v2032, %v81
  %v2058 = vmul.f32 %v2034, %v81
  %v2059 = vmul.f32 %v2036, %v81
  %v2060 = vmul.f32 %v2038, %v81
  %v2061 = vmul.f32 %v2040, %v81
  %v2062 = vmul.f32 %v2042, %v81
  %v2063 = vmul.f32 %v2044, %v81
  %v2064 = vmul.f32 %v2046, %v81
  %v2065 = vmul.f32 %v2048, %v81
  %v2066 = vmul.f32 %v2050, %v81
  %v2067 = vadd.f32 %v2051, 1e-12
  %v2068 = vadd.f32 %v2052, 1e-12
  %v2069 = vadd.f32 %v2053, 1e-12
  %v2070 = vadd.f32 %v2054, 1e-12
  %v2071 = vadd.f32 %v2055, 1e-12
  %v2072 = vadd.f32 %v2056, 1e-12
  %v2073 = vadd.f32 %v2057, 1e-12
  %v2074 = vadd.f32 %v2058, 1e-12
  %v2075 = vadd.f32 %v2059, 1e-12
  %v2076 = vadd.f32 %v2060, 1e-12
  %v2077 = vadd.f32 %v2061, 1e-12
  %v2078 = vadd.f32 %v2062, 1e-12
  %v2079 = vadd.f32 %v2063, 1e-12
  %v2080 = vadd.f32 %v2064, 1e-12
  %v2081 = vadd.f32 %v2065, 1e-12
  %v2082 = vadd.f32 %v2066, 1e-12
  %v2083 = vrsqrt.pop %v2067
  %v2084 = vrsqrt.pop %v2068
  %v2085 = vrsqrt.pop %v2069
  %v2086 = vrsqrt.pop %v2070
  %v2087 = vrsqrt.pop %v2071
  %v2088 = vrsqrt.pop %v2072
  %v2089 = vrsqrt.pop %v2073
  %v2090 = vrsqrt.pop %v2074
  %v2091 = vrsqrt.pop %v2075
  %v2092 = vrsqrt.pop %v2076
  %v2093 = vrsqrt.pop %v2077
  %v2094 = vrsqrt.pop %v2078
  %v2095 = vrsqrt.pop %v2079
  %v2096 = vrsqrt.pop %v2080
  %v2097 = vrsqrt.pop %v2081
  %v2098 = vrsqrt.pop %v2082
  %v2099 = vmul.f32 %v1987, %v2083
  %v2100 = vmul.f32 %v1988, %v2084
  %v2101 = vmul.f32 %v1989, %v2085
  %v2102 = vmul.f32 %v1990, %v2086
  %v2103 = vmul.f32 %v1991, %v2087
  %v2104 = vmul.f32 %v1992, %v2088
  %v2105 = vmul.f32 %v1993, %v2089
  %v2106 = vmul.f32 %v1994, %v2090
  %v2107 = vmul.f32 %v1995, %v2091
  %v2108 = vmul.f32 %v1996, %v2092
  %v2109 = vmul.f32 %v1997, %v2093
  %v2110 = vmul.f32 %v1998, %v2094
  %v2111 = vmul.f32 %v1999, %v2095
  %v2112 = vmul.f32 %v2000, %v2096
  %v2113 = vmul.f32 %v2001, %v2097
  %v2114 = vmul.f32 %v2002, %v2098
  %v2116 = vlaneseq
  %v2117 = vshrl.u32 %v2116, 7
  %v2118 = vsub.s32 0, %v2117
  %v2119 = vrot.slane %v1937, %v2118
  %v2121 = vmul.f32 %v2099, %v2119
  %v2122 = vmul.f32 %v2100, %v2119
  %v2123 = vmul.f32 %v2101, %v2119
  %v2124 = vmul.f32 %v2102, %v2119
  %v2125 = vmul.f32 %v2103, %v2119
  %v2126 = vmul.f32 %v2104, %v2119
  %v2127 = vmul.f32 %v2105, %v2119
  %v2128 = vmul.f32 %v2106, %v2119
  %v2129 = vmul.f32 %v2107, %v2119
  %v2130 = vmul.f32 %v2108, %v2119
  %v2131 = vmul.f32 %v2109, %v2119
  %v2132 = vmul.f32 %v2110, %v2119
  %v2133 = vmul.f32 %v2111, %v2119
  %v2134 = vmul.f32 %v2112, %v2119
  %v2135 = vmul.f32 %v2113, %v2119
  %v2136 = vmul.f32 %v2114, %v2119
  %v2138 = vlaneseq
  %v2139 = vshrl.u32 %v2138, 7
  %v2140 = vsub.s32 0, %v2139
  %v2141 = vrot.slane %v1938, %v2140
  %v2143 = vadd.f32 %v2121, %v2141
  %v2144 = vadd.f32 %v2122, %v2141
  %v2145 = vadd.f32 %v2123, %v2141
  %v2146 = vadd.f32 %v2124, %v2141
  %v2147 = vadd.f32 %v2125, %v2141
  %v2148 = vadd.f32 %v2126, %v2141
  %v2149 = vadd.f32 %v2127, %v2141
  %v2150 = vadd.f32 %v2128, %v2141
  %v2151 = vadd.f32 %v2129, %v2141
  %v2152 = vadd.f32 %v2130, %v2141
  %v2153 = vadd.f32 %v2131, %v2141
  %v2154 = vadd.f32 %v2132, %v2141
  %v2155 = vadd.f32 %v2133, %v2141
  %v2156 = vadd.f32 %v2134, %v2141
  %v2157 = vadd.f32 %v2135, %v2141
  %v2158 = vadd.f32 %v2136, %v2141
  %v2159 = vpack.c.bf16 %v2144, %v2143
  %v2160 = vpack.c.bf16 %v2146, %v2145
  %v2161 = vpack.c.bf16 %v2148, %v2147
  %v2162 = vpack.c.bf16 %v2150, %v2149
  %v2163 = vpack.c.bf16 %v2152, %v2151
  %v2164 = vpack.c.bf16 %v2154, %v2153
  %v2165 = vpack.c.bf16 %v2156, %v2155
  %v2166 = vpack.c.bf16 %v2158, %v2157
  %v2167 = vld [vmem:[%s5] sm:$0xff]
  %v2168 = vld [vmem:[%s5 + $0x8] sm:$0xff]
  %v2169 = vld [vmem:[%s5 + $0x10] sm:$0xff]
  %v2170 = vld [vmem:[%s5 + $0x18] sm:$0xff]
  %v2171 = vld [vmem:[%s5 + $0x20] sm:$0xff]
  %v2172 = vld [vmem:[%s5 + $0x28] sm:$0xff]
  %v2173 = vld [vmem:[%s5 + $0x30] sm:$0xff]
  %v2174 = vld [vmem:[%s5 + $0x38] sm:$0xff]
  %v2175 = vld [vmem:[%s5 + $0x40] sm:$0xff]
  %v2176 = vld [vmem:[%s5 + $0x48] sm:$0xff]
  %v2177 = vld [vmem:[%s5 + $0x50] sm:$0xff]
  %v2178 = vld [vmem:[%s5 + $0x58] sm:$0xff]
  %v2179 = vld [vmem:[%s5 + $0x60] sm:$0xff]
  %v2180 = vld [vmem:[%s5 + $0x68] sm:$0xff]
  %v2181 = vld [vmem:[%s5 + $0x70] sm:$0xff]
  %v2182 = vld [vmem:[%s5 + $0x78] sm:$0xff]
  %v2183 = vld [vmem:[%s7 + $0x4] sm:$0x3]
  %v2185 = vlaneseq
  %v2186 = vshrl.u32 %v2185, 7
  %v2187 = vsub.s32 0, %v2186
  %v2188 = vrot.slane %v2183, %v2187
  %v2189 = vlaneseq
  %v2190 = vshrl.u32 %v2189, 7
  %v2191 = vsub.s32 1, %v2190
  %v2192 = vrot.slane %v2183, %v2191
  %v2211 = vunpack.c.l.b16 %v2167
  %v2212 = vunpack.c.h.b16 %v2167
  %v2213 = vunpack.c.l.b16 %v2168
  %v2214 = vunpack.c.h.b16 %v2168
  %v2215 = vunpack.c.l.b16 %v2169
  %v2216 = vunpack.c.h.b16 %v2169
  %v2217 = vunpack.c.l.b16 %v2170
  %v2218 = vunpack.c.h.b16 %v2170
  %v2219 = vunpack.c.l.b16 %v2171
  %v2220 = vunpack.c.h.b16 %v2171
  %v2221 = vunpack.c.l.b16 %v2172
  %v2222 = vunpack.c.h.b16 %v2172
  %v2223 = vunpack.c.l.b16 %v2173
  %v2224 = vunpack.c.h.b16 %v2173
  %v2225 = vunpack.c.l.b16 %v2174
  %v2226 = vunpack.c.h.b16 %v2174
  %v2227 = vunpack.c.l.b16 %v2175
  %v2228 = vunpack.c.h.b16 %v2175
  %v2229 = vunpack.c.l.b16 %v2176
  %v2230 = vunpack.c.h.b16 %v2176
  %v2231 = vunpack.c.l.b16 %v2177
  %v2232 = vunpack.c.h.b16 %v2177
  %v2233 = vunpack.c.l.b16 %v2178
  %v2234 = vunpack.c.h.b16 %v2178
  %v2235 = vunpack.c.l.b16 %v2179
  %v2236 = vunpack.c.h.b16 %v2179
  %v2237 = vunpack.c.l.b16 %v2180
  %v2238 = vunpack.c.h.b16 %v2180
  %v2239 = vunpack.c.l.b16 %v2181
  %v2240 = vunpack.c.h.b16 %v2181
  %v2241 = vunpack.c.l.b16 %v2182
  %v2242 = vunpack.c.h.b16 %v2182
  %v2243 = vpack.c.b16 %v2213, %v2211
  %v2244 = vpack.c.b16 %v2214, %v2212
  %v2245 = vpack.c.b16 %v2217, %v2215
  %v2246 = vpack.c.b16 %v2218, %v2216
  %v2247 = vpack.c.b16 %v2221, %v2219
  %v2248 = vpack.c.b16 %v2222, %v2220
  %v2249 = vpack.c.b16 %v2225, %v2223
  %v2250 = vpack.c.b16 %v2226, %v2224
  %v2251 = vpack.c.b16 %v2229, %v2227
  %v2252 = vpack.c.b16 %v2230, %v2228
  %v2253 = vpack.c.b16 %v2233, %v2231
  %v2254 = vpack.c.b16 %v2234, %v2232
  %v2255 = vpack.c.b16 %v2237, %v2235
  %v2256 = vpack.c.b16 %v2238, %v2236
  %v2257 = vpack.c.b16 %v2241, %v2239
  %v2258 = vpack.c.b16 %v2242, %v2240
  %2275 = vmatprep.subr.bf16.mxu0 %v2244
  %2276 = vmatpush1.bf16.msra.mxu0 %v2243
  %2277 = vmatprep.subr.bf16.mxu0 %v2246
  %2278 = vmatpush1.bf16.msra.mxu0 %v2245
  %2279 = vmatprep.subr.bf16.mxu0 %v2248
  %2280 = vmatpush1.bf16.msra.mxu0 %v2247
  %2281 = vmatprep.subr.bf16.mxu0 %v2250
  %2282 = vmatpush1.bf16.msra.mxu0 %v2249
  %2283 = vmatprep.subr.bf16.mxu0 %v2252
  %2284 = vmatpush1.bf16.msra.mxu0 %v2251
  %2285 = vmatprep.subr.bf16.mxu0 %v2254
  %2286 = vmatpush1.bf16.msra.mxu0 %v2253
  %2287 = vmatprep.subr.bf16.mxu0 %v2256
  %2288 = vmatpush1.bf16.msra.mxu0 %v2255
  %2289 = vmatprep.subr.bf16.mxu0 %v2258
  %2290 = vmatpush1.bf16.msra.mxu0 %v2257
  %2291 = vmatprep.subr.bf16.mxu0 0
  %2292 = vmatpush1.bf16.msra.mxu0 0
  %2293 = vmatprep.subr.bf16.mxu0 0
  %2294 = vmatpush1.bf16.msra.mxu0 0
  %2295 = vmatprep.subr.bf16.mxu0 0
  %2296 = vmatpush1.bf16.msra.mxu0 0
  %2297 = vmatprep.subr.bf16.mxu0 0
  %2298 = vmatpush1.bf16.msra.mxu0 0
  %2299 = vmatprep.subr.bf16.mxu0 0
  %2300 = vmatpush1.bf16.msra.mxu0 0
  %2301 = vmatprep.subr.bf16.mxu0 0
  %2302 = vmatpush1.bf16.msra.mxu0 0
  %2303 = vmatprep.subr.bf16.mxu0 0
  %2304 = vmatpush1.bf16.msra.mxu0 0
  %2305 = vmatprep.subr.bf16.mxu0 0
  %2306 = vmatpush1.bf16.msra.mxu0 0
  %2307 = vmatprep.mubr.bf16.mxu0 0
  %2308 = vmatmul.mubr.bf16.gmra.mrb[0].mxu0 %v2159
  %v2309 = vpop.f32.mrb[0].mxu0
  %v2310 = vadd.f32 %v2188, %v2309
  %v2311 = vpop.f32.mrb[0].mxu0
  %v2312 = vadd.f32 %v2192, %v2311
  %v2313 = vpop.f32.mrb[0].mxu0
  %v2314 = vadd.f32 %v2188, %v2313
  %v2315 = vpop.f32.mrb[0].mxu0
  %v2316 = vadd.f32 %v2192, %v2315
  %2317 = vmatprep.mubr.bf16.mxu0 0
  %2318 = vmatmul.mubr.bf16.gmra.mrb[0].mxu0 %v2160
  %v2319 = vpop.f32.mrb[0].mxu0
  %v2320 = vadd.f32 %v2188, %v2319
  %v2321 = vpop.f32.mrb[0].mxu0
  %v2322 = vadd.f32 %v2192, %v2321
  %v2323 = vpop.f32.mrb[0].mxu0
  %v2324 = vadd.f32 %v2188, %v2323
  %v2325 = vpop.f32.mrb[0].mxu0
  %v2326 = vadd.f32 %v2192, %v2325
  %2327 = vmatprep.mubr.bf16.mxu0 0
  %2328 = vmatmul.mubr.bf16.gmra.mrb[0].mxu0 %v2161
  %v2329 = vpop.f32.mrb[0].mxu0
  %v2330 = vadd.f32 %v2188, %v2329
  %v2331 = vpop.f32.mrb[0].mxu0
  %v2332 = vadd.f32 %v2192, %v2331
  %v2333 = vpop.f32.mrb[0].mxu0
  %v2334 = vadd.f32 %v2188, %v2333
  %v2335 = vpop.f32.mrb[0].mxu0
  %v2336 = vadd.f32 %v2192, %v2335
  %2337 = vmatprep.mubr.bf16.mxu0 0
  %2338 = vmatmul.mubr.bf16.gmra.mrb[0].mxu0 %v2162
  %v2339 = vpop.f32.mrb[0].mxu0
  %v2340 = vadd.f32 %v2188, %v2339
  %v2341 = vpop.f32.mrb[0].mxu0
  %v2342 = vadd.f32 %v2192, %v2341
  %v2343 = vpop.f32.mrb[0].mxu0
  %v2344 = vadd.f32 %v2188, %v2343
  %v2345 = vpop.f32.mrb[0].mxu0
  %v2346 = vadd.f32 %v2192, %v2345
  %2347 = vmatprep.mubr.bf16.mxu0 0
  %2348 = vmatmul.mubr.bf16.gmra.mrb[0].mxu0 %v2163
  %v2349 = vpop.f32.mrb[0].mxu0
  %v2350 = vadd.f32 %v2188, %v2349
  %v2351 = vpop.f32.mrb[0].mxu0
  %v2352 = vadd.f32 %v2192, %v2351
  %v2353 = vpop.f32.mrb[0].mxu0
  %v2354 = vadd.f32 %v2188, %v2353
  %v2355 = vpop.f32.mrb[0].mxu0
  %v2356 = vadd.f32 %v2192, %v2355
  %2357 = vmatprep.mubr.bf16.mxu0 0
  %2358 = vmatmul.mubr.bf16.gmra.mrb[0].mxu0 %v2164
  %v2359 = vpop.f32.mrb[0].mxu0
  %v2360 = vadd.f32 %v2188, %v2359
  %v2361 = vpop.f32.mrb[0].mxu0
  %v2362 = vadd.f32 %v2192, %v2361
  %v2363 = vpop.f32.mrb[0].mxu0
  %v2364 = vadd.f32 %v2188, %v2363
  %v2365 = vpop.f32.mrb[0].mxu0
  %v2366 = vadd.f32 %v2192, %v2365
  %2367 = vmatprep.mubr.bf16.mxu0 0
  %2368 = vmatmul.mubr.bf16.gmra.mrb[0].mxu0 %v2165
  %v2369 = vpop.f32.mrb[0].mxu0
  %v2370 = vadd.f32 %v2188, %v2369
  %v2371 = vpop.f32.mrb[0].mxu0
  %v2372 = vadd.f32 %v2192, %v2371
  %v2373 = vpop.f32.mrb[0].mxu0
  %v2374 = vadd.f32 %v2188, %v2373
  %v2375 = vpop.f32.mrb[0].mxu0
  %v2376 = vadd.f32 %v2192, %v2375
  %2377 = vmatprep.mubr.bf16.mxu0 0
  %2378 = vmatmul.mubr.bf16.gmra.mrb[0].mxu0 %v2166
  %v2379 = vpop.f32.mrb[0].mxu0
  %v2380 = vadd.f32 %v2188, %v2379
  %v2381 = vpop.f32.mrb[0].mxu0
  %v2382 = vadd.f32 %v2192, %v2381
  %v2383 = vpop.f32.mrb[0].mxu0
  %v2384 = vadd.f32 %v2188, %v2383
  %v2385 = vpop.f32.mrb[0].mxu0
  %v2386 = vadd.f32 %v2192, %v2385
  %2387 = vdwg.mxu0
  %v2388 = vmul.f32 %v2310, %v2310
  %v2389 = vmul.f32 %v2312, %v2312
  %v2390 = vmul.f32 %v2314, %v2314
  %v2391 = vmul.f32 %v2316, %v2316
  %v2392 = vmul.f32 %v2320, %v2320
  %v2393 = vmul.f32 %v2322, %v2322
  %v2394 = vmul.f32 %v2324, %v2324
  %v2395 = vmul.f32 %v2326, %v2326
  %v2396 = vmul.f32 %v2330, %v2330
  %v2397 = vmul.f32 %v2332, %v2332
  %v2398 = vmul.f32 %v2334, %v2334
  %v2399 = vmul.f32 %v2336, %v2336
  %v2400 = vmul.f32 %v2340, %v2340
  %v2401 = vmul.f32 %v2342, %v2342
  %v2402 = vmul.f32 %v2344, %v2344
  %v2403 = vmul.f32 %v2346, %v2346
  %v2404 = vmul.f32 %v2350, %v2350
  %v2405 = vmul.f32 %v2352, %v2352
  %v2406 = vmul.f32 %v2354, %v2354
  %v2407 = vmul.f32 %v2356, %v2356
  %v2408 = vmul.f32 %v2360, %v2360
  %v2409 = vmul.f32 %v2362, %v2362
  %v2410 = vmul.f32 %v2364, %v2364
  %v2411 = vmul.f32 %v2366, %v2366
  %v2412 = vmul.f32 %v2370, %v2370
  %v2413 = vmul.f32 %v2372, %v2372
  %v2414 = vmul.f32 %v2374, %v2374
  %v2415 = vmul.f32 %v2376, %v2376
  %v2416 = vmul.f32 %v2380, %v2380
  %v2417 = vmul.f32 %v2382, %v2382
  %v2418 = vmul.f32 %v2384, %v2384
  %v2419 = vmul.f32 %v2386, %v2386
  %v2420 = vmul.f32 %v2310, %v2388
  %v2421 = vmul.f32 %v2312, %v2389
  %v2422 = vmul.f32 %v2314, %v2390
  %v2423 = vmul.f32 %v2316, %v2391
  %v2424 = vmul.f32 %v2320, %v2392
  %v2425 = vmul.f32 %v2322, %v2393
  %v2426 = vmul.f32 %v2324, %v2394
  %v2427 = vmul.f32 %v2326, %v2395
  %v2428 = vmul.f32 %v2330, %v2396
  %v2429 = vmul.f32 %v2332, %v2397
  %v2430 = vmul.f32 %v2334, %v2398
  %v2431 = vmul.f32 %v2336, %v2399
  %v2432 = vmul.f32 %v2340, %v2400
  %v2433 = vmul.f32 %v2342, %v2401
  %v2434 = vmul.f32 %v2344, %v2402
  %v2435 = vmul.f32 %v2346, %v2403
  %v2436 = vmul.f32 %v2350, %v2404
  %v2437 = vmul.f32 %v2352, %v2405
  %v2438 = vmul.f32 %v2354, %v2406
  %v2439 = vmul.f32 %v2356, %v2407
  %v2440 = vmul.f32 %v2360, %v2408
  %v2441 = vmul.f32 %v2362, %v2409
  %v2442 = vmul.f32 %v2364, %v2410
  %v2443 = vmul.f32 %v2366, %v2411
  %v2444 = vmul.f32 %v2370, %v2412
  %v2445 = vmul.f32 %v2372, %v2413
  %v2446 = vmul.f32 %v2374, %v2414
  %v2447 = vmul.f32 %v2376, %v2415
  %v2448 = vmul.f32 %v2380, %v2416
  %v2449 = vmul.f32 %v2382, %v2417
  %v2450 = vmul.f32 %v2384, %v2418
  %v2451 = vmul.f32 %v2386, %v2419
  %v2452 = vmul.f32 %v2420, 0.044715
  %v2453 = vmul.f32 %v2421, 0.044715
  %v2454 = vmul.f32 %v2422, 0.044715
  %v2455 = vmul.f32 %v2423, 0.044715
  %v2456 = vmul.f32 %v2424, 0.044715
  %v2457 = vmul.f32 %v2425, 0.044715
  %v2458 = vmul.f32 %v2426, 0.044715
  %v2459 = vmul.f32 %v2427, 0.044715
  %v2460 = vmul.f32 %v2428, 0.044715
  %v2461 = vmul.f32 %v2429, 0.044715
  %v2462 = vmul.f32 %v2430, 0.044715
  %v2463 = vmul.f32 %v2431, 0.044715
  %v2464 = vmul.f32 %v2432, 0.044715
  %v2465 = vmul.f32 %v2433, 0.044715
  %v2466 = vmul.f32 %v2434, 0.044715
  %v2467 = vmul.f32 %v2435, 0.044715
  %v2468 = vmul.f32 %v2436, 0.044715
  %v2469 = vmul.f32 %v2437, 0.044715
  %v2470 = vmul.f32 %v2438, 0.044715
  %v2471 = vmul.f32 %v2439, 0.044715
  %v2472 = vmul.f32 %v2440, 0.044715
  %v2473 = vmul.f32 %v2441, 0.044715
  %v2474 = vmul.f32 %v2442, 0.044715
  %v2475 = vmul.f32 %v2443, 0.044715
  %v2476 = vmul.f32 %v2444, 0.044715
  %v2477 = vmul.f32 %v2445, 0.044715
  %v2478 = vmul.f32 %v2446, 0.044715
  %v2479 = vmul.f32 %v2447, 0.044715
  %v2480 = vmul.f32 %v2448, 0.044715
  %v2481 = vmul.f32 %v2449, 0.044715
  %v2482 = vmul.f32 %v2450, 0.044715
  %v2483 = vmul.f32 %v2451, 0.044715
  %v2484 = vadd.f32 %v2310, %v2452
  %v2485 = vadd.f32 %v2312, %v2453
  %v2486 = vadd.f32 %v2314, %v2454
  %v2487 = vadd.f32 %v2316, %v2455
  %v2488 = vadd.f32 %v2320, %v2456
  %v2489 = vadd.f32 %v2322, %v2457
  %v2490 = vadd.f32 %v2324, %v2458
  %v2491 = vadd.f32 %v2326, %v2459
  %v2492 = vadd.f32 %v2330, %v2460
  %v2493 = vadd.f32 %v2332, %v2461
  %v2494 = vadd.f32 %v2334, %v2462
  %v2495 = vadd.f32 %v2336, %v2463
  %v2496 = vadd.f32 %v2340, %v2464
  %v2497 = vadd.f32 %v2342, %v2465
  %v2498 = vadd.f32 %v2344, %v2466
  %v2499 = vadd.f32 %v2346, %v2467
  %v2500 = vadd.f32 %v2350, %v2468
  %v2501 = vadd.f32 %v2352, %v2469
  %v2502 = vadd.f32 %v2354, %v2470
  %v2503 = vadd.f32 %v2356, %v2471
  %v2504 = vadd.f32 %v2360, %v2472
  %v2505 = vadd.f32 %v2362, %v2473
  %v2506 = vadd.f32 %v2364, %v2474
  %v2507 = vadd.f32 %v2366, %v2475
  %v2508 = vadd.f32 %v2370, %v2476
  %v2509 = vadd.f32 %v2372, %v2477
  %v2510 = vadd.f32 %v2374, %v2478
  %v2511 = vadd.f32 %v2376, %v2479
  %v2512 = vadd.f32 %v2380, %v2480
  %v2513 = vadd.f32 %v2382, %v2481
  %v2514 = vadd.f32 %v2384, %v2482
  %v2515 = vadd.f32 %v2386, %v2483
  %v2516 = vmul.f32 %v2484, 0.7978846
  %v2517 = vmul.f32 %v2485, 0.7978846
  %v2518 = vmul.f32 %v2486, 0.7978846
  %v2519 = vmul.f32 %v2487, 0.7978846
  %v2520 = vmul.f32 %v2488, 0.7978846
  %v2521 = vmul.f32 %v2489, 0.7978846
  %v2522 = vmul.f32 %v2490, 0.7978846
  %v2523 = vmul.f32 %v2491, 0.7978846
  %v2524 = vmul.f32 %v2492, 0.7978846
  %v2525 = vmul.f32 %v2493, 0.7978846
  %v2526 = vmul.f32 %v2494, 0.7978846
  %v2527 = vmul.f32 %v2495, 0.7978846
  %v2528 = vmul.f32 %v2496, 0.7978846
  %v2529 = vmul.f32 %v2497, 0.7978846
  %v2530 = vmul.f32 %v2498, 0.7978846
  %v2531 = vmul.f32 %v2499, 0.7978846
  %v2532 = vmul.f32 %v2500, 0.7978846
  %v2533 = vmul.f32 %v2501, 0.7978846
  %v2534 = vmul.f32 %v2502, 0.7978846
  %v2535 = vmul.f32 %v2503, 0.7978846
  %v2536 = vmul.f32 %v2504, 0.7978846
  %v2537 = vmul.f32 %v2505, 0.7978846
  %v2538 = vmul.f32 %v2506, 0.7978846
  %v2539 = vmul.f32 %v2507, 0.7978846
  %v2540 = vmul.f32 %v2508, 0.7978846
  %v2541 = vmul.f32 %v2509, 0.7978846
  %v2542 = vmul.f32 %v2510, 0.7978846
  %v2543 = vmul.f32 %v2511, 0.7978846
  %v2544 = vmul.f32 %v2512, 0.7978846
  %v2545 = vmul.f32 %v2513, 0.7978846
  %v2546 = vmul.f32 %v2514, 0.7978846
  %v2547 = vmul.f32 %v2515, 0.7978846
  %v2548 = vtanh.pop %v2516
  %v2549 = vtanh.pop %v2517
  %v2550 = vtanh.pop %v2518
  %v2551 = vtanh.pop %v2519
  %v2552 = vtanh.pop %v2520
  %v2553 = vtanh.pop %v2521
  %v2554 = vtanh.pop %v2522
  %v2555 = vtanh.pop %v2523
  %v2556 = vtanh.pop %v2524
  %v2557 = vtanh.pop %v2525
  %v2558 = vtanh.pop %v2526
  %v2559 = vtanh.pop %v2527
  %v2560 = vtanh.pop %v2528
  %v2561 = vtanh.pop %v2529
  %v2562 = vtanh.pop %v2530
  %v2563 = vtanh.pop %v2531
  %v2564 = vtanh.pop %v2532
  %v2565 = vtanh.pop %v2533
  %v2566 = vtanh.pop %v2534
  %v2567 = vtanh.pop %v2535
  %v2568 = vtanh.pop %v2536
  %v2569 = vtanh.pop %v2537
  %v2570 = vtanh.pop %v2538
  %v2571 = vtanh.pop %v2539
  %v2572 = vtanh.pop %v2540
  %v2573 = vtanh.pop %v2541
  %v2574 = vtanh.pop %v2542
  %v2575 = vtanh.pop %v2543
  %v2576 = vtanh.pop %v2544
  %v2577 = vtanh.pop %v2545
  %v2578 = vtanh.pop %v2546
  %v2579 = vtanh.pop %v2547
  %v2580 = vadd.f32 %v2548, 1.0
  %v2581 = vadd.f32 %v2549, 1.0
  %v2582 = vadd.f32 %v2550, 1.0
  %v2583 = vadd.f32 %v2551, 1.0
  %v2584 = vadd.f32 %v2552, 1.0
  %v2585 = vadd.f32 %v2553, 1.0
  %v2586 = vadd.f32 %v2554, 1.0
  %v2587 = vadd.f32 %v2555, 1.0
  %v2588 = vadd.f32 %v2556, 1.0
  %v2589 = vadd.f32 %v2557, 1.0
  %v2590 = vadd.f32 %v2558, 1.0
  %v2591 = vadd.f32 %v2559, 1.0
  %v2592 = vadd.f32 %v2560, 1.0
  %v2593 = vadd.f32 %v2561, 1.0
  %v2594 = vadd.f32 %v2562, 1.0
  %v2595 = vadd.f32 %v2563, 1.0
  %v2596 = vadd.f32 %v2564, 1.0
  %v2597 = vadd.f32 %v2565, 1.0
  %v2598 = vadd.f32 %v2566, 1.0
  %v2599 = vadd.f32 %v2567, 1.0
  %v2600 = vadd.f32 %v2568, 1.0
  %v2601 = vadd.f32 %v2569, 1.0
  %v2602 = vadd.f32 %v2570, 1.0
  %v2603 = vadd.f32 %v2571, 1.0
  %v2604 = vadd.f32 %v2572, 1.0
  %v2605 = vadd.f32 %v2573, 1.0
  %v2606 = vadd.f32 %v2574, 1.0
  %v2607 = vadd.f32 %v2575, 1.0
  %v2608 = vadd.f32 %v2576, 1.0
  %v2609 = vadd.f32 %v2577, 1.0
  %v2610 = vadd.f32 %v2578, 1.0
  %v2611 = vadd.f32 %v2579, 1.0
  %v2612 = vmul.f32 %v2580, 0.5
  %v2613 = vmul.f32 %v2581, 0.5
  %v2614 = vmul.f32 %v2582, 0.5
  %v2615 = vmul.f32 %v2583, 0.5
  %v2616 = vmul.f32 %v2584, 0.5
  %v2617 = vmul.f32 %v2585, 0.5
  %v2618 = vmul.f32 %v2586, 0.5
  %v2619 = vmul.f32 %v2587, 0.5
  %v2620 = vmul.f32 %v2588, 0.5
  %v2621 = vmul.f32 %v2589, 0.5
  %v2622 = vmul.f32 %v2590, 0.5
  %v2623 = vmul.f32 %v2591, 0.5
  %v2624 = vmul.f32 %v2592, 0.5
  %v2625 = vmul.f32 %v2593, 0.5
  %v2626 = vmul.f32 %v2594, 0.5
  %v2627 = vmul.f32 %v2595, 0.5
  %v2628 = vmul.f32 %v2596, 0.5
  %v2629 = vmul.f32 %v2597, 0.5
  %v2630 = vmul.f32 %v2598, 0.5
  %v2631 = vmul.f32 %v2599, 0.5
  %v2632 = vmul.f32 %v2600, 0.5
  %v2633 = vmul.f32 %v2601, 0.5
  %v2634 = vmul.f32 %v2602, 0.5
  %v2635 = vmul.f32 %v2603, 0.5
  %v2636 = vmul.f32 %v2604, 0.5
  %v2637 = vmul.f32 %v2605, 0.5
  %v2638 = vmul.f32 %v2606, 0.5
  %v2639 = vmul.f32 %v2607, 0.5
  %v2640 = vmul.f32 %v2608, 0.5
  %v2641 = vmul.f32 %v2609, 0.5
  %v2642 = vmul.f32 %v2610, 0.5
  %v2643 = vmul.f32 %v2611, 0.5
  %v2644 = vmul.f32 %v2310, %v2612
  %v2645 = vmul.f32 %v2312, %v2613
  %v2646 = vmul.f32 %v2314, %v2614
  %v2647 = vmul.f32 %v2316, %v2615
  %v2648 = vmul.f32 %v2320, %v2616
  %v2649 = vmul.f32 %v2322, %v2617
  %v2650 = vmul.f32 %v2324, %v2618
  %v2651 = vmul.f32 %v2326, %v2619
  %v2652 = vmul.f32 %v2330, %v2620
  %v2653 = vmul.f32 %v2332, %v2621
  %v2654 = vmul.f32 %v2334, %v2622
  %v2655 = vmul.f32 %v2336, %v2623
  %v2656 = vmul.f32 %v2340, %v2624
  %v2657 = vmul.f32 %v2342, %v2625
  %v2658 = vmul.f32 %v2344, %v2626
  %v2659 = vmul.f32 %v2346, %v2627
  %v2660 = vmul.f32 %v2350, %v2628
  %v2661 = vmul.f32 %v2352, %v2629
  %v2662 = vmul.f32 %v2354, %v2630
  %v2663 = vmul.f32 %v2356, %v2631
  %v2664 = vmul.f32 %v2360, %v2632
  %v2665 = vmul.f32 %v2362, %v2633
  %v2666 = vmul.f32 %v2364, %v2634
  %v2667 = vmul.f32 %v2366, %v2635
  %v2668 = vmul.f32 %v2370, %v2636
  %v2669 = vmul.f32 %v2372, %v2637
  %v2670 = vmul.f32 %v2374, %v2638
  %v2671 = vmul.f32 %v2376, %v2639
  %v2672 = vmul.f32 %v2380, %v2640
  %v2673 = vmul.f32 %v2382, %v2641
  %v2674 = vmul.f32 %v2384, %v2642
  %v2675 = vmul.f32 %v2386, %v2643
  %v2676 = vpack.c.bf16 %v2646, %v2644
  %v2677 = vpack.c.bf16 %v2647, %v2645
  %v2678 = vpack.c.bf16 %v2650, %v2648
  %v2679 = vpack.c.bf16 %v2651, %v2649
  %v2680 = vpack.c.bf16 %v2654, %v2652
  %v2681 = vpack.c.bf16 %v2655, %v2653
  %v2682 = vpack.c.bf16 %v2658, %v2656
  %v2683 = vpack.c.bf16 %v2659, %v2657
  %v2684 = vpack.c.bf16 %v2662, %v2660
  %v2685 = vpack.c.bf16 %v2663, %v2661
  %v2686 = vpack.c.bf16 %v2666, %v2664
  %v2687 = vpack.c.bf16 %v2667, %v2665
  %v2688 = vpack.c.bf16 %v2670, %v2668
  %v2689 = vpack.c.bf16 %v2671, %v2669
  %v2690 = vpack.c.bf16 %v2674, %v2672
  %v2691 = vpack.c.bf16 %v2675, %v2673
  %v2692 = vld [vmem:[%s6] sm:$0xf]
  %v2693 = vld [vmem:[%s6 + $0x4] sm:$0xf]
  %v2694 = vld [vmem:[%s6 + $0x8] sm:$0xf]
  %v2695 = vld [vmem:[%s6 + $0xc] sm:$0xf]
  %v2696 = vld [vmem:[%s6 + $0x10] sm:$0xf]
  %v2697 = vld [vmem:[%s6 + $0x14] sm:$0xf]
  %v2698 = vld [vmem:[%s6 + $0x18] sm:$0xf]
  %v2699 = vld [vmem:[%s6 + $0x1c] sm:$0xf]
  %v2700 = vld [vmem:[%s6 + $0x20] sm:$0xf]
  %v2701 = vld [vmem:[%s6 + $0x24] sm:$0xf]
  %v2702 = vld [vmem:[%s6 + $0x28] sm:$0xf]
  %v2703 = vld [vmem:[%s6 + $0x2c] sm:$0xf]
  %v2704 = vld [vmem:[%s6 + $0x30] sm:$0xf]
  %v2705 = vld [vmem:[%s6 + $0x34] sm:$0xf]
  %v2706 = vld [vmem:[%s6 + $0x38] sm:$0xf]
  %v2707 = vld [vmem:[%s6 + $0x3c] sm:$0xf]
  %v2708 = vld [vmem:[%s6 + $0x40] sm:$0xf]
  %v2709 = vld [vmem:[%s6 + $0x44] sm:$0xf]
  %v2710 = vld [vmem:[%s6 + $0x48] sm:$0xf]
  %v2711 = vld [vmem:[%s6 + $0x4c] sm:$0xf]
  %v2712 = vld [vmem:[%s6 + $0x50] sm:$0xf]
  %v2713 = vld [vmem:[%s6 + $0x54] sm:$0xf]
  %v2714 = vld [vmem:[%s6 + $0x58] sm:$0xf]
  %v2715 = vld [vmem:[%s6 + $0x5c] sm:$0xf]
  %v2716 = vld [vmem:[%s6 + $0x60] sm:$0xf]
  %v2717 = vld [vmem:[%s6 + $0x64] sm:$0xf]
  %v2718 = vld [vmem:[%s6 + $0x68] sm:$0xf]
  %v2719 = vld [vmem:[%s6 + $0x6c] sm:$0xf]
  %v2720 = vld [vmem:[%s6 + $0x70] sm:$0xf]
  %v2721 = vld [vmem:[%s6 + $0x74] sm:$0xf]
  %v2722 = vld [vmem:[%s6 + $0x78] sm:$0xf]
  %v2723 = vld [vmem:[%s6 + $0x7c] sm:$0xf]
  %v2724 = vld [vmem:[%s7 + $0x6] sm:$0x1]
  %v2726 = vlaneseq
  %v2727 = vshrl.u32 %v2726, 7
  %v2728 = vsub.s32 0, %v2727
  %v2729 = vrot.slane %v2724, %v2728
  %v2763 = vunpack.c.l.b16 %v2692
  %v2764 = vunpack.c.l.b16 %v2693
  %v2765 = vunpack.c.l.b16 %v2694
  %v2766 = vunpack.c.l.b16 %v2695
  %v2767 = vunpack.c.l.b16 %v2696
  %v2768 = vunpack.c.l.b16 %v2697
  %v2769 = vunpack.c.l.b16 %v2698
  %v2770 = vunpack.c.l.b16 %v2699
  %v2771 = vunpack.c.l.b16 %v2700
  %v2772 = vunpack.c.l.b16 %v2701
  %v2773 = vunpack.c.l.b16 %v2702
  %v2774 = vunpack.c.l.b16 %v2703
  %v2775 = vunpack.c.l.b16 %v2704
  %v2776 = vunpack.c.l.b16 %v2705
  %v2777 = vunpack.c.l.b16 %v2706
  %v2778 = vunpack.c.l.b16 %v2707
  %v2779 = vunpack.c.l.b16 %v2708
  %v2780 = vunpack.c.l.b16 %v2709
  %v2781 = vunpack.c.l.b16 %v2710
  %v2782 = vunpack.c.l.b16 %v2711
  %v2783 = vunpack.c.l.b16 %v2712
  %v2784 = vunpack.c.l.b16 %v2713
  %v2785 = vunpack.c.l.b16 %v2714
  %v2786 = vunpack.c.l.b16 %v2715
  %v2787 = vunpack.c.l.b16 %v2716
  %v2788 = vunpack.c.l.b16 %v2717
  %v2789 = vunpack.c.l.b16 %v2718
  %v2790 = vunpack.c.l.b16 %v2719
  %v2791 = vunpack.c.l.b16 %v2720
  %v2792 = vunpack.c.l.b16 %v2721
  %v2793 = vunpack.c.l.b16 %v2722
  %v2794 = vunpack.c.l.b16 %v2723
  %v2795 = vpack.c.b16 %v2764, %v2763
  %v2796 = vpack.c.b16 %v2766, %v2765
  %v2797 = vpack.c.b16 %v2768, %v2767
  %v2798 = vpack.c.b16 %v2770, %v2769
  %v2799 = vpack.c.b16 %v2772, %v2771
  %v2800 = vpack.c.b16 %v2774, %v2773
  %v2801 = vpack.c.b16 %v2776, %v2775
  %v2802 = vpack.c.b16 %v2778, %v2777
  %v2803 = vpack.c.b16 %v2780, %v2779
  %v2804 = vpack.c.b16 %v2782, %v2781
  %v2805 = vpack.c.b16 %v2784, %v2783
  %v2806 = vpack.c.b16 %v2786, %v2785
  %v2807 = vpack.c.b16 %v2788, %v2787
  %v2808 = vpack.c.b16 %v2790, %v2789
  %v2809 = vpack.c.b16 %v2792, %v2791
  %v2810 = vpack.c.b16 %v2794, %v2793
  %2827 = vmatprep.subr.bf16.mxu0 0
  %2828 = vmatpush1.bf16.msra.mxu0 %v2795
  %2829 = vmatprep.subr.bf16.mxu0 0
  %2830 = vmatpush1.bf16.msra.mxu0 %v2796
  %2831 = vmatprep.subr.bf16.mxu0 0
  %2832 = vmatpush1.bf16.msra.mxu0 %v2797
  %2833 = vmatprep.subr.bf16.mxu0 0
  %2834 = vmatpush1.bf16.msra.mxu0 %v2798
  %2835 = vmatprep.subr.bf16.mxu0 0
  %2836 = vmatpush1.bf16.msra.mxu0 %v2799
  %2837 = vmatprep.subr.bf16.mxu0 0
  %2838 = vmatpush1.bf16.msra.mxu0 %v2800
  %2839 = vmatprep.subr.bf16.mxu0 0
  %2840 = vmatpush1.bf16.msra.mxu0 %v2801
  %2841 = vmatprep.subr.bf16.mxu0 0
  %2842 = vmatpush1.bf16.msra.mxu0 %v2802
  %2843 = vmatprep.subr.bf16.mxu0 0
  %2844 = vmatpush1.bf16.msra.mxu0 %v2803
  %2845 = vmatprep.subr.bf16.mxu0 0
  %2846 = vmatpush1.bf16.msra.mxu0 %v2804
  %2847 = vmatprep.subr.bf16.mxu0 0
  %2848 = vmatpush1.bf16.msra.mxu0 %v2805
  %2849 = vmatprep.subr.bf16.mxu0 0
  %2850 = vmatpush1.bf16.msra.mxu0 %v2806
  %2851 = vmatprep.subr.bf16.mxu0 0
  %2852 = vmatpush1.bf16.msra.mxu0 %v2807
  %2853 = vmatprep.subr.bf16.mxu0 0
  %2854 = vmatpush1.bf16.msra.mxu0 %v2808
  %2855 = vmatprep.subr.bf16.mxu0 0
  %2856 = vmatpush1.bf16.msra.mxu0 %v2809
  %2857 = vmatprep.subr.bf16.mxu0 0
  %2858 = vmatpush1.bf16.msra.mxu0 %v2810
  %2859 = vmatprep.mubr.bf16.mxu0 %v2677
  %2860 = vmatmul.mubr.bf16.gmra.mrb[0].mxu0 %v2676
  %v2861 = vpop.f32.mrb[0].mxu0
  %v2862 = vadd.f32 %v2729, %v2861
  %v2863 = vpop.f32.mrb[0].mxu0
  %v2864 = vpop.f32.mrb[0].mxu0
  %v2865 = vadd.f32 %v2729, %v2864
  %v2866 = vpop.f32.mrb[0].mxu0
  %2867 = vmatprep.mubr.bf16.mxu0 %v2679
  %2868 = vmatmul.mubr.bf16.gmra.mrb[0].mxu0 %v2678
  %v2869 = vpop.f32.mrb[0].mxu0
  %v2870 = vadd.f32 %v2729, %v2869
  %v2871 = vpop.f32.mrb[0].mxu0
  %v2872 = vpop.f32.mrb[0].mxu0
  %v2873 = vadd.f32 %v2729, %v2872
  %v2874 = vpop.f32.mrb[0].mxu0
  %2875 = vmatprep.mubr.bf16.mxu0 %v2681
  %2876 = vmatmul.mubr.bf16.gmra.mrb[0].mxu0 %v2680
  %v2877 = vpop.f32.mrb[0].mxu0
  %v2878 = vadd.f32 %v2729, %v2877
  %v2879 = vpop.f32.mrb[0].mxu0
  %v2880 = vpop.f32.mrb[0].mxu0
  %v2881 = vadd.f32 %v2729, %v2880
  %v2882 = vpop.f32.mrb[0].mxu0
  %2883 = vmatprep.mubr.bf16.mxu0 %v2683
  %2884 = vmatmul.mubr.bf16.gmra.mrb[0].mxu0 %v2682
  %v2885 = vpop.f32.mrb[0].mxu0
  %v2886 = vadd.f32 %v2729, %v2885
  %v2887 = vpop.f32.mrb[0].mxu0
  %v2888 = vpop.f32.mrb[0].mxu0
  %v2889 = vadd.f32 %v2729, %v2888
  %v2890 = vpop.f32.mrb[0].mxu0
  %2891 = vmatprep.mubr.bf16.mxu0 %v2685
  %2892 = vmatmul.mubr.bf16.gmra.mrb[0].mxu0 %v2684
  %v2893 = vpop.f32.mrb[0].mxu0
  %v2894 = vadd.f32 %v2729, %v2893
  %v2895 = vpop.f32.mrb[0].mxu0
  %v2896 = vpop.f32.mrb[0].mxu0
  %v2897 = vadd.f32 %v2729, %v2896
  %v2898 = vpop.f32.mrb[0].mxu0
  %2899 = vmatprep.mubr.bf16.mxu0 %v2687
  %2900 = vmatmul.mubr.bf16.gmra.mrb[0].mxu0 %v2686
  %v2901 = vpop.f32.mrb[0].mxu0
  %v2902 = vadd.f32 %v2729, %v2901
  %v2903 = vpop.f32.mrb[0].mxu0
  %v2904 = vpop.f32.mrb[0].mxu0
  %v2905 = vadd.f32 %v2729, %v2904
  %v2906 = vpop.f32.mrb[0].mxu0
  %2907 = vmatprep.mubr.bf16.mxu0 %v2689
  %2908 = vmatmul.mubr.bf16.gmra.mrb[0].mxu0 %v2688
  %v2909 = vpop.f32.mrb[0].mxu0
  %v2910 = vadd.f32 %v2729, %v2909
  %v2911 = vpop.f32.mrb[0].mxu0
  %v2912 = vpop.f32.mrb[0].mxu0
  %v2913 = vadd.f32 %v2729, %v2912
  %v2914 = vpop.f32.mrb[0].mxu0
  %2915 = vmatprep.mubr.bf16.mxu0 %v2691
  %2916 = vmatmul.mubr.bf16.gmra.mrb[0].mxu0 %v2690
  %v2917 = vpop.f32.mrb[0].mxu0
  %v2918 = vadd.f32 %v2729, %v2917
  %v2919 = vpop.f32.mrb[0].mxu0
  %v2920 = vpop.f32.mrb[0].mxu0
  %v2921 = vadd.f32 %v2729, %v2920
  %v2922 = vpop.f32.mrb[0].mxu0
  %2923 = vdwg.mxu0
  %v2924 = vadd.f32 %v2862, %v2143
  %v2925 = vadd.f32 %v2865, %v2144
  %v2926 = vadd.f32 %v2870, %v2145
  %v2927 = vadd.f32 %v2873, %v2146
  %v2928 = vadd.f32 %v2878, %v2147
  %v2929 = vadd.f32 %v2881, %v2148
  %v2930 = vadd.f32 %v2886, %v2149
  %v2931 = vadd.f32 %v2889, %v2150
  %v2932 = vadd.f32 %v2894, %v2151
  %v2933 = vadd.f32 %v2897, %v2152
  %v2934 = vadd.f32 %v2902, %v2153
  %v2935 = vadd.f32 %v2905, %v2154
  %v2936 = vadd.f32 %v2910, %v2155
  %v2937 = vadd.f32 %v2913, %v2156
  %v2938 = vadd.f32 %v2918, %v2157
  %v2939 = vadd.f32 %v2921, %v2158
  %v2940 = vld [vmem:[%s7 + $0x9] sm:$0x1]
  %v2941 = vld [vmem:[%s7 + $0xa] sm:$0x1]
  %2942 = vadd.xlane.f32.xlu0 %v2924
  %v2943 = vpop.xlane.xlu0 %2942
  %2944 = vadd.xlane.f32.xlu0 %v2925
  %v2945 = vpop.xlane.xlu0 %2944
  %2946 = vadd.xlane.f32.xlu0 %v2926
  %v2947 = vpop.xlane.xlu0 %2946
  %2948 = vadd.xlane.f32.xlu0 %v2927
  %v2949 = vpop.xlane.xlu0 %2948
  %2950 = vadd.xlane.f32.xlu0 %v2928
  %v2951 = vpop.xlane.xlu0 %2950
  %2952 = vadd.xlane.f32.xlu0 %v2929
  %v2953 = vpop.xlane.xlu0 %2952
  %2954 = vadd.xlane.f32.xlu0 %v2930
  %v2955 = vpop.xlane.xlu0 %2954
  %2956 = vadd.xlane.f32.xlu0 %v2931
  %v2957 = vpop.xlane.xlu0 %2956
  %2958 = vadd.xlane.f32.xlu0 %v2932
  %v2959 = vpop.xlane.xlu0 %2958
  %2960 = vadd.xlane.f32.xlu0 %v2933
  %v2961 = vpop.xlane.xlu0 %2960
  %2962 = vadd.xlane.f32.xlu0 %v2934
  %v2963 = vpop.xlane.xlu0 %2962
  %2964 = vadd.xlane.f32.xlu0 %v2935
  %v2965 = vpop.xlane.xlu0 %2964
  %2966 = vadd.xlane.f32.xlu0 %v2936
  %v2967 = vpop.xlane.xlu0 %2966
  %2968 = vadd.xlane.f32.xlu0 %v2937
  %v2969 = vpop.xlane.xlu0 %2968
  %2970 = vadd.xlane.f32.xlu0 %v2938
  %v2971 = vpop.xlane.xlu0 %2970
  %2972 = vadd.xlane.f32.xlu0 %v2939
  %v2973 = vpop.xlane.xlu0 %2972
  %v2974 = vmul.f32 %v2943, %v81
  %v2975 = vmul.f32 %v2945, %v81
  %v2976 = vmul.f32 %v2947, %v81
  %v2977 = vmul.f32 %v2949, %v81
  %v2978 = vmul.f32 %v2951, %v81
  %v2979 = vmul.f32 %v2953, %v81
  %v2980 = vmul.f32 %v2955, %v81
  %v2981 = vmul.f32 %v2957, %v81
  %v2982 = vmul.f32 %v2959, %v81
  %v2983 = vmul.f32 %v2961, %v81
  %v2984 = vmul.f32 %v2963, %v81
  %v2985 = vmul.f32 %v2965, %v81
  %v2986 = vmul.f32 %v2967, %v81
  %v2987 = vmul.f32 %v2969, %v81
  %v2988 = vmul.f32 %v2971, %v81
  %v2989 = vmul.f32 %v2973, %v81
  %v2990 = vsub.f32 %v2924, %v2974
  %v2991 = vsub.f32 %v2925, %v2975
  %v2992 = vsub.f32 %v2926, %v2976
  %v2993 = vsub.f32 %v2927, %v2977
  %v2994 = vsub.f32 %v2928, %v2978
  %v2995 = vsub.f32 %v2929, %v2979
  %v2996 = vsub.f32 %v2930, %v2980
  %v2997 = vsub.f32 %v2931, %v2981
  %v2998 = vsub.f32 %v2932, %v2982
  %v2999 = vsub.f32 %v2933, %v2983
  %v3000 = vsub.f32 %v2934, %v2984
  %v3001 = vsub.f32 %v2935, %v2985
  %v3002 = vsub.f32 %v2936, %v2986
  %v3003 = vsub.f32 %v2937, %v2987
  %v3004 = vsub.f32 %v2938, %v2988
  %v3005 = vsub.f32 %v2939, %v2989
  %v3006 = vmul.f32 %v2990, %v2990
  %v3007 = vmul.f32 %v2991, %v2991
  %v3008 = vmul.f32 %v2992, %v2992
  %v3009 = vmul.f32 %v2993, %v2993
  %v3010 = vmul.f32 %v2994, %v2994
  %v3011 = vmul.f32 %v2995, %v2995
  %v3012 = vmul.f32 %v2996, %v2996
  %v3013 = vmul.f32 %v2997, %v2997
  %v3014 = vmul.f32 %v2998, %v2998
  %v3015 = vmul.f32 %v2999, %v2999
  %v3016 = vmul.f32 %v3000, %v3000
  %v3017 = vmul.f32 %v3001, %v3001
  %v3018 = vmul.f32 %v3002, %v3002
  %v3019 = vmul.f32 %v3003, %v3003
  %v3020 = vmul.f32 %v3004, %v3004
  %v3021 = vmul.f32 %v3005, %v3005
  %3022 = vadd.xlane.f32.xlu0 %v3006
  %v3023 = vpop.xlane.xlu0 %3022
  %3024 = vadd.xlane.f32.xlu0 %v3007
  %v3025 = vpop.xlane.xlu0 %3024
  %3026 = vadd.xlane.f32.xlu0 %v3008
  %v3027 = vpop.xlane.xlu0 %3026
  %3028 = vadd.xlane.f32.xlu0 %v3009
  %v3029 = vpop.xlane.xlu0 %3028
  %3030 = vadd.xlane.f32.xlu0 %v3010
  %v3031 = vpop.xlane.xlu0 %3030
  %3032 = vadd.xlane.f32.xlu0 %v3011
  %v3033 = vpop.xlane.xlu0 %3032
  %3034 = vadd.xlane.f32.xlu0 %v3012
  %v3035 = vpop.xlane.xlu0 %3034
  %3036 = vadd.xlane.f32.xlu0 %v3013
  %v3037 = vpop.xlane.xlu0 %3036
  %3038 = vadd.xlane.f32.xlu0 %v3014
  %v3039 = vpop.xlane.xlu0 %3038
  %3040 = vadd.xlane.f32.xlu0 %v3015
  %v3041 = vpop.xlane.xlu0 %3040
  %3042 = vadd.xlane.f32.xlu0 %v3016
  %v3043 = vpop.xlane.xlu0 %3042
  %3044 = vadd.xlane.f32.xlu0 %v3017
  %v3045 = vpop.xlane.xlu0 %3044
  %3046 = vadd.xlane.f32.xlu0 %v3018
  %v3047 = vpop.xlane.xlu0 %3046
  %3048 = vadd.xlane.f32.xlu0 %v3019
  %v3049 = vpop.xlane.xlu0 %3048
  %3050 = vadd.xlane.f32.xlu0 %v3020
  %v3051 = vpop.xlane.xlu0 %3050
  %3052 = vadd.xlane.f32.xlu0 %v3021
  %v3053 = vpop.xlane.xlu0 %3052
  %v3054 = vmul.f32 %v3023, %v81
  %v3055 = vmul.f32 %v3025, %v81
  %v3056 = vmul.f32 %v3027, %v81
  %v3057 = vmul.f32 %v3029, %v81
  %v3058 = vmul.f32 %v3031, %v81
  %v3059 = vmul.f32 %v3033, %v81
  %v3060 = vmul.f32 %v3035, %v81
  %v3061 = vmul.f32 %v3037, %v81
  %v3062 = vmul.f32 %v3039, %v81
  %v3063 = vmul.f32 %v3041, %v81
  %v3064 = vmul.f32 %v3043, %v81
  %v3065 = vmul.f32 %v3045, %v81
  %v3066 = vmul.f32 %v3047, %v81
  %v3067 = vmul.f32 %v3049, %v81
  %v3068 = vmul.f32 %v3051, %v81
  %v3069 = vmul.f32 %v3053, %v81
  %v3070 = vadd.f32 %v3054, 1e-12
  %v3071 = vadd.f32 %v3055, 1e-12
  %v3072 = vadd.f32 %v3056, 1e-12
  %v3073 = vadd.f32 %v3057, 1e-12
  %v3074 = vadd.f32 %v3058, 1e-12
  %v3075 = vadd.f32 %v3059, 1e-12
  %v3076 = vadd.f32 %v3060, 1e-12
  %v3077 = vadd.f32 %v3061, 1e-12
  %v3078 = vadd.f32 %v3062, 1e-12
  %v3079 = vadd.f32 %v3063, 1e-12
  %v3080 = vadd.f32 %v3064, 1e-12
  %v3081 = vadd.f32 %v3065, 1e-12
  %v3082 = vadd.f32 %v3066, 1e-12
  %v3083 = vadd.f32 %v3067, 1e-12
  %v3084 = vadd.f32 %v3068, 1e-12
  %v3085 = vadd.f32 %v3069, 1e-12
  %v3086 = vrsqrt.pop %v3070
  %v3087 = vrsqrt.pop %v3071
  %v3088 = vrsqrt.pop %v3072
  %v3089 = vrsqrt.pop %v3073
  %v3090 = vrsqrt.pop %v3074
  %v3091 = vrsqrt.pop %v3075
  %v3092 = vrsqrt.pop %v3076
  %v3093 = vrsqrt.pop %v3077
  %v3094 = vrsqrt.pop %v3078
  %v3095 = vrsqrt.pop %v3079
  %v3096 = vrsqrt.pop %v3080
  %v3097 = vrsqrt.pop %v3081
  %v3098 = vrsqrt.pop %v3082
  %v3099 = vrsqrt.pop %v3083
  %v3100 = vrsqrt.pop %v3084
  %v3101 = vrsqrt.pop %v3085
  %v3102 = vmul.f32 %v2990, %v3086
  %v3103 = vmul.f32 %v2991, %v3087
  %v3104 = vmul.f32 %v2992, %v3088
  %v3105 = vmul.f32 %v2993, %v3089
  %v3106 = vmul.f32 %v2994, %v3090
  %v3107 = vmul.f32 %v2995, %v3091
  %v3108 = vmul.f32 %v2996, %v3092
  %v3109 = vmul.f32 %v2997, %v3093
  %v3110 = vmul.f32 %v2998, %v3094
  %v3111 = vmul.f32 %v2999, %v3095
  %v3112 = vmul.f32 %v3000, %v3096
  %v3113 = vmul.f32 %v3001, %v3097
  %v3114 = vmul.f32 %v3002, %v3098
  %v3115 = vmul.f32 %v3003, %v3099
  %v3116 = vmul.f32 %v3004, %v3100
  %v3117 = vmul.f32 %v3005, %v3101
  %v3119 = vlaneseq
  %v3120 = vshrl.u32 %v3119, 7
  %v3121 = vsub.s32 0, %v3120
  %v3122 = vrot.slane %v2940, %v3121
  %v3124 = vmul.f32 %v3102, %v3122
  %v3125 = vmul.f32 %v3103, %v3122
  %v3126 = vmul.f32 %v3104, %v3122
  %v3127 = vmul.f32 %v3105, %v3122
  %v3128 = vmul.f32 %v3106, %v3122
  %v3129 = vmul.f32 %v3107, %v3122
  %v3130 = vmul.f32 %v3108, %v3122
  %v3131 = vmul.f32 %v3109, %v3122
  %v3132 = vmul.f32 %v3110, %v3122
  %v3133 = vmul.f32 %v3111, %v3122
  %v3134 = vmul.f32 %v3112, %v3122
  %v3135 = vmul.f32 %v3113, %v3122
  %v3136 = vmul.f32 %v3114, %v3122
  %v3137 = vmul.f32 %v3115, %v3122
  %v3138 = vmul.f32 %v3116, %v3122
  %v3139 = vmul.f32 %v3117, %v3122
  %v3141 = vlaneseq
  %v3142 = vshrl.u32 %v3141, 7
  %v3143 = vsub.s32 0, %v3142
  %v3144 = vrot.slane %v2941, %v3143
  %v3146 = vadd.f32 %v3124, %v3144
  %v3147 = vadd.f32 %v3125, %v3144
  %v3148 = vadd.f32 %v3126, %v3144
  %v3149 = vadd.f32 %v3127, %v3144
  %v3150 = vadd.f32 %v3128, %v3144
  %v3151 = vadd.f32 %v3129, %v3144
  %v3152 = vadd.f32 %v3130, %v3144
  %v3153 = vadd.f32 %v3131, %v3144
  %v3154 = vadd.f32 %v3132, %v3144
  %v3155 = vadd.f32 %v3133, %v3144
  %v3156 = vadd.f32 %v3134, %v3144
  %v3157 = vadd.f32 %v3135, %v3144
  %v3158 = vadd.f32 %v3136, %v3144
  %v3159 = vadd.f32 %v3137, %v3144
  %v3160 = vadd.f32 %v3138, %v3144
  %v3161 = vadd.f32 %v3139, %v3144
  %v3162 = vpack.c.bf16 %v3147, %v3146
  %v3163 = vpack.c.bf16 %v3149, %v3148
  %v3164 = vpack.c.bf16 %v3151, %v3150
  %v3165 = vpack.c.bf16 %v3153, %v3152
  %v3166 = vpack.c.bf16 %v3155, %v3154
  %v3167 = vpack.c.bf16 %v3157, %v3156
  %v3168 = vpack.c.bf16 %v3159, %v3158
  %v3169 = vpack.c.bf16 %v3161, %v3160
  %s3170 = scalar_lea.vmem %s3, 192
  %v3171 = vld [vmem:[%s3170] sm:$0xff]
  %v3172 = vld [vmem:[%s3170 + $0x8] sm:$0xf]
  %v3173 = vld [vmem:[%s3170 + $0xc] sm:$0xff]
  %v3174 = vld [vmem:[%s3170 + $0x14] sm:$0xf]
  %v3175 = vld [vmem:[%s3170 + $0x18] sm:$0xff]
  %v3176 = vld [vmem:[%s3170 + $0x20] sm:$0xf]
  %v3177 = vld [vmem:[%s3170 + $0x24] sm:$0xff]
  %v3178 = vld [vmem:[%s3170 + $0x2c] sm:$0xf]
  %v3179 = vld [vmem:[%s3170 + $0x30] sm:$0xff]
  %v3180 = vld [vmem:[%s3170 + $0x38] sm:$0xf]
  %v3181 = vld [vmem:[%s3170 + $0x3c] sm:$0xff]
  %v3182 = vld [vmem:[%s3170 + $0x44] sm:$0xf]
  %v3183 = vld [vmem:[%s3170 + $0x48] sm:$0xff]
  %v3184 = vld [vmem:[%s3170 + $0x50] sm:$0xf]
  %v3185 = vld [vmem:[%s3170 + $0x54] sm:$0xff]
  %v3186 = vld [vmem:[%s3170 + $0x5c] sm:$0xf]
  %v3187 = vld [vmem:[%s3170 + $0x60] sm:$0xff]
  %v3188 = vld [vmem:[%s3170 + $0x68] sm:$0xf]
  %v3189 = vld [vmem:[%s3170 + $0x6c] sm:$0xff]
  %v3190 = vld [vmem:[%s3170 + $0x74] sm:$0xf]
  %v3191 = vld [vmem:[%s3170 + $0x78] sm:$0xff]
  %v3192 = vld [vmem:[%s3170 + $0x80] sm:$0xf]
  %v3193 = vld [vmem:[%s3170 + $0x84] sm:$0xff]
  %v3194 = vld [vmem:[%s3170 + $0x8c] sm:$0xf]
  %v3195 = vld [vmem:[%s3170 + $0x90] sm:$0xff]
  %v3196 = vld [vmem:[%s3170 + $0x98] sm:$0xf]
  %v3197 = vld [vmem:[%s3170 + $0x9c] sm:$0xff]
  %v3198 = vld [vmem:[%s3170 + $0xa4] sm:$0xf]
  %v3199 = vld [vmem:[%s3170 + $0xa8] sm:$0xff]
  %v3200 = vld [vmem:[%s3170 + $0xb0] sm:$0xf]
  %v3201 = vld [vmem:[%s3170 + $0xb4] sm:$0xff]
  %v3202 = vld [vmem:[%s3170 + $0xbc] sm:$0xf]
  %s3203 = scalar_lea.vmem %s7, 11
  %v3204 = vld [vmem:[%s3203] sm:$0x7]
  %v3206 = vlaneseq
  %v3207 = vshrl.u32 %v3206, 7
  %v3208 = vsub.s32 0, %v3207
  %v3209 = vrot.slane %v3204, %v3208
  %v3210 = vlaneseq
  %v3211 = vshrl.u32 %v3210, 7
  %v3212 = vsub.s32 1, %v3211
  %v3213 = vrot.slane %v3204, %v3212
  %v3214 = vlaneseq
  %v3215 = vshrl.u32 %v3214, 7
  %v3216 = vsub.s32 2, %v3215
  %v3217 = vrot.slane %v3204, %v3216
  %v3253 = vunpack.c.l.b16 %v3171
  %v3254 = vunpack.c.h.b16 %v3171
  %v3255 = vunpack.c.l.b16 %v3172
  %v3256 = vunpack.c.l.b16 %v3173
  %v3257 = vunpack.c.h.b16 %v3173
  %v3258 = vunpack.c.l.b16 %v3174
  %v3259 = vunpack.c.l.b16 %v3175
  %v3260 = vunpack.c.h.b16 %v3175
  %v3261 = vunpack.c.l.b16 %v3176
  %v3262 = vunpack.c.l.b16 %v3177
  %v3263 = vunpack.c.h.b16 %v3177
  %v3264 = vunpack.c.l.b16 %v3178
  %v3265 = vunpack.c.l.b16 %v3179
  %v3266 = vunpack.c.h.b16 %v3179
  %v3267 = vunpack.c.l.b16 %v3180
  %v3268 = vunpack.c.l.b16 %v3181
  %v3269 = vunpack.c.h.b16 %v3181
  %v3270 = vunpack.c.l.b16 %v3182
  %v3271 = vunpack.c.l.b16 %v3183
  %v3272 = vunpack.c.h.b16 %v3183
  %v3273 = vunpack.c.l.b16 %v3184
  %v3274 = vunpack.c.l.b16 %v3185
  %v3275 = vunpack.c.h.b16 %v3185
  %v3276 = vunpack.c.l.b16 %v3186
  %v3277 = vunpack.c.l.b16 %v3187
  %v3278 = vunpack.c.h.b16 %v3187
  %v3279 = vunpack.c.l.b16 %v3188
  %v3280 = vunpack.c.l.b16 %v3189
  %v3281 = vunpack.c.h.b16 %v3189
  %v3282 = vunpack.c.l.b16 %v3190
  %v3283 = vunpack.c.l.b16 %v3191
  %v3284 = vunpack.c.h.b16 %v3191
  %v3285 = vunpack.c.l.b16 %v3192
  %v3286 = vunpack.c.l.b16 %v3193
  %v3287 = vunpack.c.h.b16 %v3193
  %v3288 = vunpack.c.l.b16 %v3194
  %v3289 = vunpack.c.l.b16 %v3195
  %v3290 = vunpack.c.h.b16 %v3195
  %v3291 = vunpack.c.l.b16 %v3196
  %v3292 = vunpack.c.l.b16 %v3197
  %v3293 = vunpack.c.h.b16 %v3197
  %v3294 = vunpack.c.l.b16 %v3198
  %v3295 = vunpack.c.l.b16 %v3199
  %v3296 = vunpack.c.h.b16 %v3199
  %v3297 = vunpack.c.l.b16 %v3200
  %v3298 = vunpack.c.l.b16 %v3201
  %v3299 = vunpack.c.h.b16 %v3201
  %v3300 = vunpack.c.l.b16 %v3202
  %v3301 = vpack.c.b16 %v3256, %v3253
  %v3302 = vpack.c.b16 %v3257, %v3254
  %v3303 = vpack.c.b16 %v3258, %v3255
  %v3304 = vpack.c.b16 %v3262, %v3259
  %v3305 = vpack.c.b16 %v3263, %v3260
  %v3306 = vpack.c.b16 %v3264, %v3261
  %v3307 = vpack.c.b16 %v3268, %v3265
  %v3308 = vpack.c.b16 %v3269, %v3266
  %v3309 = vpack.c.b16 %v3270, %v3267
  %v3310 = vpack.c.b16 %v3274, %v3271
  %v3311 = vpack.c.b16 %v3275, %v3272
  %v3312 = vpack.c.b16 %v3276, %v3273
  %v3313 = vpack.c.b16 %v3280, %v3277
  %v3314 = vpack.c.b16 %v3281, %v3278
  %v3315 = vpack.c.b16 %v3282, %v3279
  %v3316 = vpack.c.b16 %v3286, %v3283
  %v3317 = vpack.c.b16 %v3287, %v3284
  %v3318 = vpack.c.b16 %v3288, %v3285
  %v3319 = vpack.c.b16 %v3292, %v3289
  %v3320 = vpack.c.b16 %v3293, %v3290
  %v3321 = vpack.c.b16 %v3294, %v3291
  %v3322 = vpack.c.b16 %v3298, %v3295
  %v3323 = vpack.c.b16 %v3299, %v3296
  %v3324 = vpack.c.b16 %v3300, %v3297
  %3349 = vmatprep.subr.bf16.mxu0 %v3302
  %3350 = vmatpush1.bf16.msra.mxu0 %v3301
  %3351 = vmatprep.subr.bf16.mxu0 %v3305
  %3352 = vmatpush1.bf16.msra.mxu0 %v3304
  %3353 = vmatprep.subr.bf16.mxu0 %v3308
  %3354 = vmatpush1.bf16.msra.mxu0 %v3307
  %3355 = vmatprep.subr.bf16.mxu0 %v3311
  %3356 = vmatpush1.bf16.msra.mxu0 %v3310
  %3357 = vmatprep.subr.bf16.mxu0 %v3314
  %3358 = vmatpush1.bf16.msra.mxu0 %v3313
  %3359 = vmatprep.subr.bf16.mxu0 %v3317
  %3360 = vmatpush1.bf16.msra.mxu0 %v3316
  %3361 = vmatprep.subr.bf16.mxu0 %v3320
  %3362 = vmatpush1.bf16.msra.mxu0 %v3319
  %3363 = vmatprep.subr.bf16.mxu0 %v3323
  %3364 = vmatpush1.bf16.msra.mxu0 %v3322
  %3365 = vmatprep.subr.bf16.mxu0 0
  %3366 = vmatpush1.bf16.msra.mxu0 0
  %3367 = vmatprep.subr.bf16.mxu0 0
  %3368 = vmatpush1.bf16.msra.mxu0 0
  %3369 = vmatprep.subr.bf16.mxu0 0
  %3370 = vmatpush1.bf16.msra.mxu0 0
  %3371 = vmatprep.subr.bf16.mxu0 0
  %3372 = vmatpush1.bf16.msra.mxu0 0
  %3373 = vmatprep.subr.bf16.mxu0 0
  %3374 = vmatpush1.bf16.msra.mxu0 0
  %3375 = vmatprep.subr.bf16.mxu0 0
  %3376 = vmatpush1.bf16.msra.mxu0 0
  %3377 = vmatprep.subr.bf16.mxu0 0
  %3378 = vmatpush1.bf16.msra.mxu0 0
  %3379 = vmatprep.subr.bf16.mxu0 0
  %3380 = vmatpush1.bf16.msra.mxu0 0
  %3381 = vmatprep.mubr.bf16.mxu0 0
  %3382 = vmatmul.mubr.bf16.gmra.mrb[0].mxu0 %v3162
  %v3383 = vpop.f32.mrb[0].mxu0
  %v3384 = vadd.f32 %v3209, %v3383
  %v3385 = vpop.f32.mrb[0].mxu0
  %v3386 = vadd.f32 %v3213, %v3385
  %v3387 = vpop.f32.mrb[0].mxu0
  %v3388 = vadd.f32 %v3209, %v3387
  %v3389 = vpop.f32.mrb[0].mxu0
  %v3390 = vadd.f32 %v3213, %v3389
  %3391 = vmatprep.mubr.bf16.mxu0 0
  %3392 = vmatmul.mubr.bf16.gmra.mrb[0].mxu0 %v3163
  %v3393 = vpop.f32.mrb[0].mxu0
  %v3394 = vadd.f32 %v3209, %v3393
  %v3395 = vpop.f32.mrb[0].mxu0
  %v3396 = vadd.f32 %v3213, %v3395
  %v3397 = vpop.f32.mrb[0].mxu0
  %v3398 = vadd.f32 %v3209, %v3397
  %v3399 = vpop.f32.mrb[0].mxu0
  %v3400 = vadd.f32 %v3213, %v3399
  %3401 = vmatprep.mubr.bf16.mxu0 0
  %3402 = vmatmul.mubr.bf16.gmra.mrb[0].mxu0 %v3164
  %v3403 = vpop.f32.mrb[0].mxu0
  %v3404 = vadd.f32 %v3209, %v3403
  %v3405 = vpop.f32.mrb[0].mxu0
  %v3406 = vadd.f32 %v3213, %v3405
  %v3407 = vpop.f32.mrb[0].mxu0
  %v3408 = vadd.f32 %v3209, %v3407
  %v3409 = vpop.f32.mrb[0].mxu0
  %v3410 = vadd.f32 %v3213, %v3409
  %3411 = vmatprep.mubr.bf16.mxu0 0
  %3412 = vmatmul.mubr.bf16.gmra.mrb[0].mxu0 %v3165
  %v3413 = vpop.f32.mrb[0].mxu0
  %v3414 = vadd.f32 %v3209, %v3413
  %v3415 = vpop.f32.mrb[0].mxu0
  %v3416 = vadd.f32 %v3213, %v3415
  %v3417 = vpop.f32.mrb[0].mxu0
  %v3418 = vadd.f32 %v3209, %v3417
  %v3419 = vpop.f32.mrb[0].mxu0
  %v3420 = vadd.f32 %v3213, %v3419
  %3421 = vmatprep.mubr.bf16.mxu0 0
  %3422 = vmatmul.mubr.bf16.gmra.mrb[0].mxu0 %v3166
  %v3423 = vpop.f32.mrb[0].mxu0
  %v3424 = vadd.f32 %v3209, %v3423
  %v3425 = vpop.f32.mrb[0].mxu0
  %v3426 = vadd.f32 %v3213, %v3425
  %v3427 = vpop.f32.mrb[0].mxu0
  %v3428 = vadd.f32 %v3209, %v3427
  %v3429 = vpop.f32.mrb[0].mxu0
  %v3430 = vadd.f32 %v3213, %v3429
  %3431 = vmatprep.mubr.bf16.mxu0 0
  %3432 = vmatmul.mubr.bf16.gmra.mrb[0].mxu0 %v3167
  %v3433 = vpop.f32.mrb[0].mxu0
  %v3434 = vadd.f32 %v3209, %v3433
  %v3435 = vpop.f32.mrb[0].mxu0
  %v3436 = vadd.f32 %v3213, %v3435
  %v3437 = vpop.f32.mrb[0].mxu0
  %v3438 = vadd.f32 %v3209, %v3437
  %v3439 = vpop.f32.mrb[0].mxu0
  %v3440 = vadd.f32 %v3213, %v3439
  %3441 = vmatprep.mubr.bf16.mxu0 0
  %3442 = vmatmul.mubr.bf16.gmra.mrb[0].mxu0 %v3168
  %v3443 = vpop.f32.mrb[0].mxu0
  %v3444 = vadd.f32 %v3209, %v3443
  %v3445 = vpop.f32.mrb[0].mxu0
  %v3446 = vadd.f32 %v3213, %v3445
  %v3447 = vpop.f32.mrb[0].mxu0
  %v3448 = vadd.f32 %v3209, %v3447
  %v3449 = vpop.f32.mrb[0].mxu0
  %v3450 = vadd.f32 %v3213, %v3449
  %3451 = vmatprep.mubr.bf16.mxu0 0
  %3452 = vmatmul.mubr.bf16.gmra.mrb[0].mxu0 %v3169
  %v3453 = vpop.f32.mrb[0].mxu0
  %v3454 = vadd.f32 %v3209, %v3453
  %v3455 = vpop.f32.mrb[0].mxu0
  %v3456 = vadd.f32 %v3213, %v3455
  %v3457 = vpop.f32.mrb[0].mxu0
  %v3458 = vadd.f32 %v3209, %v3457
  %v3459 = vpop.f32.mrb[0].mxu0
  %v3460 = vadd.f32 %v3213, %v3459
  %3461 = vdwg.mxu0
  %3462 = vmatprep.subr.bf16.mxu0 0
  %3463 = vmatpush1.bf16.msra.mxu0 %v3303
  %3464 = vmatprep.subr.bf16.mxu0 0
  %3465 = vmatpush1.bf16.msra.mxu0 %v3306
  %3466 = vmatprep.subr.bf16.mxu0 0
  %3467 = vmatpush1.bf16.msra.mxu0 %v3309
  %3468 = vmatprep.subr.bf16.mxu0 0
  %3469 = vmatpush1.bf16.msra.mxu0 %v3312
  %3470 = vmatprep.subr.bf16.mxu0 0
  %3471 = vmatpush1.bf16.msra.mxu0 %v3315
  %3472 = vmatprep.subr.bf16.mxu0 0
  %3473 = vmatpush1.bf16.msra.mxu0 %v3318
  %3474 = vmatprep.subr.bf16.mxu0 0
  %3475 = vmatpush1.bf16.msra.mxu0 %v3321
  %3476 = vmatprep.subr.bf16.mxu0 0
  %3477 = vmatpush1.bf16.msra.mxu0 %v3324
  %3478 = vmatprep.subr.bf16.mxu0 0
  %3479 = vmatpush1.bf16.msra.mxu0 0
  %3480 = vmatprep.subr.bf16.mxu0 0
  %3481 = vmatpush1.bf16.msra.mxu0 0
  %3482 = vmatprep.subr.bf16.mxu0 0
  %3483 = vmatpush1.bf16.msra.mxu0 0
  %3484 = vmatprep.subr.bf16.mxu0 0
  %3485 = vmatpush1.bf16.msra.mxu0 0
  %3486 = vmatprep.subr.bf16.mxu0 0
  %3487 = vmatpush1.bf16.msra.mxu0 0
  %3488 = vmatprep.subr.bf16.mxu0 0
  %3489 = vmatpush1.bf16.msra.mxu0 0
  %3490 = vmatprep.subr.bf16.mxu0 0
  %3491 = vmatpush1.bf16.msra.mxu0 0
  %3492 = vmatprep.subr.bf16.mxu0 0
  %3493 = vmatpush1.bf16.msra.mxu0 0
  %3494 = vmatprep.mubr.bf16.mxu0 0
  %3495 = vmatmul.mubr.bf16.gmra.mrb[0].mxu0 %v3162
  %v3496 = vpop.f32.mrb[0].mxu0
  %v3497 = vadd.f32 %v3217, %v3496
  %v3498 = vpop.f32.mrb[0].mxu0
  %v3499 = vpop.f32.mrb[0].mxu0
  %v3500 = vadd.f32 %v3217, %v3499
  %v3501 = vpop.f32.mrb[0].mxu0
  %3502 = vmatprep.mubr.bf16.mxu0 0
  %3503 = vmatmul.mubr.bf16.gmra.mrb[0].mxu0 %v3163
  %v3504 = vpop.f32.mrb[0].mxu0
  %v3505 = vadd.f32 %v3217, %v3504
  %v3506 = vpop.f32.mrb[0].mxu0
  %v3507 = vpop.f32.mrb[0].mxu0
  %v3508 = vadd.f32 %v3217, %v3507
  %v3509 = vpop.f32.mrb[0].mxu0
  %3510 = vmatprep.mubr.bf16.mxu0 0
  %3511 = vmatmul.mubr.bf16.gmra.mrb[0].mxu0 %v3164
  %v3512 = vpop.f32.mrb[0].mxu0
  %v3513 = vadd.f32 %v3217, %v3512
  %v3514 = vpop.f32.mrb[0].mxu0
  %v3515 = vpop.f32.mrb[0].mxu0
  %v3516 = vadd.f32 %v3217, %v3515
  %v3517 = vpop.f32.mrb[0].mxu0
  %3518 = vmatprep.mubr.bf16.mxu0 0
  %3519 = vmatmul.mubr.bf16.gmra.mrb[0].mxu0 %v3165
  %v3520 = vpop.f32.mrb[0].mxu0
  %v3521 = vadd.f32 %v3217, %v3520
  %v3522 = vpop.f32.mrb[0].mxu0
  %v3523 = vpop.f32.mrb[0].mxu0
  %v3524 = vadd.f32 %v3217, %v3523
  %v3525 = vpop.f32.mrb[0].mxu0
  %3526 = vmatprep.mubr.bf16.mxu0 0
  %3527 = vmatmul.mubr.bf16.gmra.mrb[0].mxu0 %v3166
  %v3528 = vpop.f32.mrb[0].mxu0
  %v3529 = vadd.f32 %v3217, %v3528
  %v3530 = vpop.f32.mrb[0].mxu0
  %v3531 = vpop.f32.mrb[0].mxu0
  %v3532 = vadd.f32 %v3217, %v3531
  %v3533 = vpop.f32.mrb[0].mxu0
  %3534 = vmatprep.mubr.bf16.mxu0 0
  %3535 = vmatmul.mubr.bf16.gmra.mrb[0].mxu0 %v3167
  %v3536 = vpop.f32.mrb[0].mxu0
  %v3537 = vadd.f32 %v3217, %v3536
  %v3538 = vpop.f32.mrb[0].mxu0
  %v3539 = vpop.f32.mrb[0].mxu0
  %v3540 = vadd.f32 %v3217, %v3539
  %v3541 = vpop.f32.mrb[0].mxu0
  %3542 = vmatprep.mubr.bf16.mxu0 0
  %3543 = vmatmul.mubr.bf16.gmra.mrb[0].mxu0 %v3168
  %v3544 = vpop.f32.mrb[0].mxu0
  %v3545 = vadd.f32 %v3217, %v3544
  %v3546 = vpop.f32.mrb[0].mxu0
  %v3547 = vpop.f32.mrb[0].mxu0
  %v3548 = vadd.f32 %v3217, %v3547
  %v3549 = vpop.f32.mrb[0].mxu0
  %3550 = vmatprep.mubr.bf16.mxu0 0
  %3551 = vmatmul.mubr.bf16.gmra.mrb[0].mxu0 %v3169
  %v3552 = vpop.f32.mrb[0].mxu0
  %v3553 = vadd.f32 %v3217, %v3552
  %v3554 = vpop.f32.mrb[0].mxu0
  %v3555 = vpop.f32.mrb[0].mxu0
  %v3556 = vadd.f32 %v3217, %v3555
  %v3557 = vpop.f32.mrb[0].mxu0
  %3558 = vdwg.mxu0
  %v3559 = vld [vmem:[%s3203 + $0x3] sm:$0x1]
  %v3560 = vpack.c.bf16 %v3388, %v3384
  %v3561 = vpack.c.bf16 %v3398, %v3394
  %v3562 = vpack.c.bf16 %v3408, %v3404
  %v3563 = vpack.c.bf16 %v3418, %v3414
  %v3564 = vpack.c.bf16 %v3428, %v3424
  %v3565 = vpack.c.bf16 %v3438, %v3434
  %v3566 = vpack.c.bf16 %v3448, %v3444
  %v3567 = vpack.c.bf16 %v3458, %v3454
  %v3568 = vpack.c.bf16 %v3390, %v3386
  %v3569 = vpack.c.bf16 %v3400, %v3396
  %v3570 = vpack.c.bf16 %v3410, %v3406
  %v3571 = vpack.c.bf16 %v3420, %v3416
  %v3572 = vpack.c.bf16 %v3430, %v3426
  %v3573 = vpack.c.bf16 %v3440, %v3436
  %v3574 = vpack.c.bf16 %v3450, %v3446
  %v3575 = vpack.c.bf16 %v3460, %v3456
  %v3576 = vpack.c.bf16 %v3500, %v3497
  %v3577 = vpack.c.bf16 %v3508, %v3505
  %v3578 = vpack.c.bf16 %v3516, %v3513
  %v3579 = vpack.c.bf16 %v3524, %v3521
  %v3580 = vpack.c.bf16 %v3532, %v3529
  %v3581 = vpack.c.bf16 %v3540, %v3537
  %v3582 = vpack.c.bf16 %v3548, %v3545
  %v3583 = vpack.c.bf16 %v3556, %v3553
  %v3585 = vsel %vm692, %v3560, 0
  %v3588 = vsel %vm692, %v3561, 0
  %v3591 = vsel %vm692, %v3562, 0
  %v3594 = vsel %vm692, %v3563, 0
  %v3597 = vsel %vm692, %v3564, 0
  %v3600 = vsel %vm692, %v3565, 0
  %v3603 = vsel %vm692, %v3566, 0
  %v3606 = vsel %vm692, %v3567, 0
  %v3609 = vsel %vm692, %v3568, 0
  %v3612 = vsel %vm692, %v3569, 0
  %v3615 = vsel %vm692, %v3570, 0
  %v3618 = vsel %vm692, %v3571, 0
  %v3621 = vsel %vm692, %v3572, 0
  %v3624 = vsel %vm692, %v3573, 0
  %v3627 = vsel %vm692, %v3574, 0
  %v3630 = vsel %vm692, %v3575, 0
  %3632 = vmatprep.subr.bf16.mxu0 0
  %3633 = vmatpush1.bf16.xpose.msra.mxu0 %v3609
  %3634 = vmatprep.subr.bf16.mxu0 0
  %3635 = vmatpush1.bf16.xpose.msra.mxu0 %v3612
  %3636 = vmatprep.subr.bf16.mxu0 0
  %3637 = vmatpush1.bf16.xpose.msra.mxu0 %v3615
  %3638 = vmatprep.subr.bf16.mxu0 0
  %3639 = vmatpush1.bf16.xpose.msra.mxu0 %v3618
  %3640 = vmatprep.subr.bf16.mxu0 0
  %3641 = vmatpush1.bf16.xpose.msra.mxu0 %v3621
  %3642 = vmatprep.subr.bf16.mxu0 0
  %3643 = vmatpush1.bf16.xpose.msra.mxu0 %v3624
  %3644 = vmatprep.subr.bf16.mxu0 0
  %3645 = vmatpush1.bf16.xpose.msra.mxu0 %v3627
  %3646 = vmatprep.subr.bf16.mxu0 0
  %3647 = vmatpush1.bf16.xpose.msra.mxu0 %v3630
  %3648 = vmatprep.subr.bf16.mxu0 0
  %3649 = vmatpush1.bf16.xpose.msra.mxu0 0
  %3650 = vmatprep.subr.bf16.mxu0 0
  %3651 = vmatpush1.bf16.xpose.msra.mxu0 0
  %3652 = vmatprep.subr.bf16.mxu0 0
  %3653 = vmatpush1.bf16.xpose.msra.mxu0 0
  %3654 = vmatprep.subr.bf16.mxu0 0
  %3655 = vmatpush1.bf16.xpose.msra.mxu0 0
  %3656 = vmatprep.subr.bf16.mxu0 0
  %3657 = vmatpush1.bf16.xpose.msra.mxu0 0
  %3658 = vmatprep.subr.bf16.mxu0 0
  %3659 = vmatpush1.bf16.xpose.msra.mxu0 0
  %3660 = vmatprep.subr.bf16.mxu0 0
  %3661 = vmatpush1.bf16.xpose.msra.mxu0 0
  %3662 = vmatprep.subr.bf16.mxu0 0
  %3663 = vmatpush1.bf16.xpose.msra.mxu0 0
  %3664 = vmatprep.mubr.bf16.mxu0 0
  %3665 = vmatmul.mubr.bf16.gmra.mrb[0].mxu0 %v3585
  %v3666 = vpop.f32.mrb[0].mxu0
  %v3667 = vadd.f32 %v690, %v3666
  %v3668 = vpop.f32.mrb[0].mxu0
  %v3669 = vpop.f32.mrb[0].mxu0
  %v3670 = vadd.f32 %v690, %v3669
  %v3671 = vpop.f32.mrb[0].mxu0
  %3672 = vmatprep.mubr.bf16.mxu0 0
  %3673 = vmatmul.mubr.bf16.gmra.mrb[0].mxu0 %v3588
  %v3674 = vpop.f32.mrb[0].mxu0
  %v3675 = vadd.f32 %v690, %v3674
  %v3676 = vpop.f32.mrb[0].mxu0
  %v3677 = vpop.f32.mrb[0].mxu0
  %v3678 = vadd.f32 %v690, %v3677
  %v3679 = vpop.f32.mrb[0].mxu0
  %3680 = vmatprep.mubr.bf16.mxu0 0
  %3681 = vmatmul.mubr.bf16.gmra.mrb[0].mxu0 %v3591
  %v3682 = vpop.f32.mrb[0].mxu0
  %v3683 = vadd.f32 %v690, %v3682
  %v3684 = vpop.f32.mrb[0].mxu0
  %v3685 = vpop.f32.mrb[0].mxu0
  %v3686 = vadd.f32 %v690, %v3685
  %v3687 = vpop.f32.mrb[0].mxu0
  %3688 = vmatprep.mubr.bf16.mxu0 0
  %3689 = vmatmul.mubr.bf16.gmra.mrb[0].mxu0 %v3594
  %v3690 = vpop.f32.mrb[0].mxu0
  %v3691 = vadd.f32 %v690, %v3690
  %v3692 = vpop.f32.mrb[0].mxu0
  %v3693 = vpop.f32.mrb[0].mxu0
  %v3694 = vadd.f32 %v690, %v3693
  %v3695 = vpop.f32.mrb[0].mxu0
  %3696 = vmatprep.mubr.bf16.mxu0 0
  %3697 = vmatmul.mubr.bf16.gmra.mrb[0].mxu0 %v3597
  %v3698 = vpop.f32.mrb[0].mxu0
  %v3699 = vadd.f32 %v690, %v3698
  %v3700 = vpop.f32.mrb[0].mxu0
  %v3701 = vpop.f32.mrb[0].mxu0
  %v3702 = vadd.f32 %v690, %v3701
  %v3703 = vpop.f32.mrb[0].mxu0
  %3704 = vmatprep.mubr.bf16.mxu0 0
  %3705 = vmatmul.mubr.bf16.gmra.mrb[0].mxu0 %v3600
  %v3706 = vpop.f32.mrb[0].mxu0
  %v3707 = vadd.f32 %v690, %v3706
  %v3708 = vpop.f32.mrb[0].mxu0
  %v3709 = vpop.f32.mrb[0].mxu0
  %v3710 = vadd.f32 %v690, %v3709
  %v3711 = vpop.f32.mrb[0].mxu0
  %3712 = vmatprep.mubr.bf16.mxu0 0
  %3713 = vmatmul.mubr.bf16.gmra.mrb[0].mxu0 %v3603
  %v3714 = vpop.f32.mrb[0].mxu0
  %v3715 = vadd.f32 %v690, %v3714
  %v3716 = vpop.f32.mrb[0].mxu0
  %v3717 = vpop.f32.mrb[0].mxu0
  %v3718 = vadd.f32 %v690, %v3717
  %v3719 = vpop.f32.mrb[0].mxu0
  %3720 = vmatprep.mubr.bf16.mxu0 0
  %3721 = vmatmul.mubr.bf16.gmra.mrb[0].mxu0 %v3606
  %v3722 = vpop.f32.mrb[0].mxu0
  %v3723 = vadd.f32 %v690, %v3722
  %v3724 = vpop.f32.mrb[0].mxu0
  %v3725 = vpop.f32.mrb[0].mxu0
  %v3726 = vadd.f32 %v690, %v3725
  %v3727 = vpop.f32.mrb[0].mxu0
  %3728 = vdwg.mxu0
  %3729 = vmax.xlane.f32.xlu0 %v3667
  %v3730 = vpop.xlane.xlu0 %3729
  %3731 = vmax.xlane.f32.xlu0 %v3670
  %v3732 = vpop.xlane.xlu0 %3731
  %3733 = vmax.xlane.f32.xlu0 %v3675
  %v3734 = vpop.xlane.xlu0 %3733
  %3735 = vmax.xlane.f32.xlu0 %v3678
  %v3736 = vpop.xlane.xlu0 %3735
  %3737 = vmax.xlane.f32.xlu0 %v3683
  %v3738 = vpop.xlane.xlu0 %3737
  %3739 = vmax.xlane.f32.xlu0 %v3686
  %v3740 = vpop.xlane.xlu0 %3739
  %3741 = vmax.xlane.f32.xlu0 %v3691
  %v3742 = vpop.xlane.xlu0 %3741
  %3743 = vmax.xlane.f32.xlu0 %v3694
  %v3744 = vpop.xlane.xlu0 %3743
  %3745 = vmax.xlane.f32.xlu0 %v3699
  %v3746 = vpop.xlane.xlu0 %3745
  %3747 = vmax.xlane.f32.xlu0 %v3702
  %v3748 = vpop.xlane.xlu0 %3747
  %3749 = vmax.xlane.f32.xlu0 %v3707
  %v3750 = vpop.xlane.xlu0 %3749
  %3751 = vmax.xlane.f32.xlu0 %v3710
  %v3752 = vpop.xlane.xlu0 %3751
  %3753 = vmax.xlane.f32.xlu0 %v3715
  %v3754 = vpop.xlane.xlu0 %3753
  %3755 = vmax.xlane.f32.xlu0 %v3718
  %v3756 = vpop.xlane.xlu0 %3755
  %3757 = vmax.xlane.f32.xlu0 %v3723
  %v3758 = vpop.xlane.xlu0 %3757
  %3759 = vmax.xlane.f32.xlu0 %v3726
  %v3760 = vpop.xlane.xlu0 %3759
  %v3761 = vsub.f32 %v3667, %v3730
  %v3762 = vsub.f32 %v3670, %v3732
  %v3763 = vsub.f32 %v3675, %v3734
  %v3764 = vsub.f32 %v3678, %v3736
  %v3765 = vsub.f32 %v3683, %v3738
  %v3766 = vsub.f32 %v3686, %v3740
  %v3767 = vsub.f32 %v3691, %v3742
  %v3768 = vsub.f32 %v3694, %v3744
  %v3769 = vsub.f32 %v3699, %v3746
  %v3770 = vsub.f32 %v3702, %v3748
  %v3771 = vsub.f32 %v3707, %v3750
  %v3772 = vsub.f32 %v3710, %v3752
  %v3773 = vsub.f32 %v3715, %v3754
  %v3774 = vsub.f32 %v3718, %v3756
  %v3775 = vsub.f32 %v3723, %v3758
  %v3776 = vsub.f32 %v3726, %v3760
  %v3777 = vmul.f32 %v3761, 1.442695
  %v3778 = vpow.pop %v3777
  %v3779 = vmul.f32 %v3762, 1.442695
  %v3780 = vpow.pop %v3779
  %v3781 = vmul.f32 %v3763, 1.442695
  %v3782 = vpow.pop %v3781
  %v3783 = vmul.f32 %v3764, 1.442695
  %v3784 = vpow.pop %v3783
  %v3785 = vmul.f32 %v3765, 1.442695
  %v3786 = vpow.pop %v3785
  %v3787 = vmul.f32 %v3766, 1.442695
  %v3788 = vpow.pop %v3787
  %v3789 = vmul.f32 %v3767, 1.442695
  %v3790 = vpow.pop %v3789
  %v3791 = vmul.f32 %v3768, 1.442695
  %v3792 = vpow.pop %v3791
  %v3793 = vmul.f32 %v3769, 1.442695
  %v3794 = vpow.pop %v3793
  %v3795 = vmul.f32 %v3770, 1.442695
  %v3796 = vpow.pop %v3795
  %v3797 = vmul.f32 %v3771, 1.442695
  %v3798 = vpow.pop %v3797
  %v3799 = vmul.f32 %v3772, 1.442695
  %v3800 = vpow.pop %v3799
  %v3801 = vmul.f32 %v3773, 1.442695
  %v3802 = vpow.pop %v3801
  %v3803 = vmul.f32 %v3774, 1.442695
  %v3804 = vpow.pop %v3803
  %v3805 = vmul.f32 %v3775, 1.442695
  %v3806 = vpow.pop %v3805
  %v3807 = vmul.f32 %v3776, 1.442695
  %v3808 = vpow.pop %v3807
  %3809 = vadd.xlane.f32.xlu0 %v3778
  %v3810 = vpop.xlane.xlu0 %3809
  %3811 = vadd.xlane.f32.xlu0 %v3780
  %v3812 = vpop.xlane.xlu0 %3811
  %3813 = vadd.xlane.f32.xlu0 %v3782
  %v3814 = vpop.xlane.xlu0 %3813
  %3815 = vadd.xlane.f32.xlu0 %v3784
  %v3816 = vpop.xlane.xlu0 %3815
  %3817 = vadd.xlane.f32.xlu0 %v3786
  %v3818 = vpop.xlane.xlu0 %3817
  %3819 = vadd.xlane.f32.xlu0 %v3788
  %v3820 = vpop.xlane.xlu0 %3819
  %3821 = vadd.xlane.f32.xlu0 %v3790
  %v3822 = vpop.xlane.xlu0 %3821
  %3823 = vadd.xlane.f32.xlu0 %v3792
  %v3824 = vpop.xlane.xlu0 %3823
  %3825 = vadd.xlane.f32.xlu0 %v3794
  %v3826 = vpop.xlane.xlu0 %3825
  %3827 = vadd.xlane.f32.xlu0 %v3796
  %v3828 = vpop.xlane.xlu0 %3827
  %3829 = vadd.xlane.f32.xlu0 %v3798
  %v3830 = vpop.xlane.xlu0 %3829
  %3831 = vadd.xlane.f32.xlu0 %v3800
  %v3832 = vpop.xlane.xlu0 %3831
  %3833 = vadd.xlane.f32.xlu0 %v3802
  %v3834 = vpop.xlane.xlu0 %3833
  %3835 = vadd.xlane.f32.xlu0 %v3804
  %v3836 = vpop.xlane.xlu0 %3835
  %3837 = vadd.xlane.f32.xlu0 %v3806
  %v3838 = vpop.xlane.xlu0 %3837
  %3839 = vadd.xlane.f32.xlu0 %v3808
  %v3840 = vpop.xlane.xlu0 %3839
  %v3841 = vrcp.pop %v3810
  %v3842 = vrcp.pop %v3812
  %v3843 = vrcp.pop %v3814
  %v3844 = vrcp.pop %v3816
  %v3845 = vrcp.pop %v3818
  %v3846 = vrcp.pop %v3820
  %v3847 = vrcp.pop %v3822
  %v3848 = vrcp.pop %v3824
  %v3849 = vrcp.pop %v3826
  %v3850 = vrcp.pop %v3828
  %v3851 = vrcp.pop %v3830
  %v3852 = vrcp.pop %v3832
  %v3853 = vrcp.pop %v3834
  %v3854 = vrcp.pop %v3836
  %v3855 = vrcp.pop %v3838
  %v3856 = vrcp.pop %v3840
  %v3857 = vmul.f32 %v3778, %v3841
  %v3858 = vmul.f32 %v3780, %v3842
  %v3859 = vmul.f32 %v3782, %v3843
  %v3860 = vmul.f32 %v3784, %v3844
  %v3861 = vmul.f32 %v3786, %v3845
  %v3862 = vmul.f32 %v3788, %v3846
  %v3863 = vmul.f32 %v3790, %v3847
  %v3864 = vmul.f32 %v3792, %v3848
  %v3865 = vmul.f32 %v3794, %v3849
  %v3866 = vmul.f32 %v3796, %v3850
  %v3867 = vmul.f32 %v3798, %v3851
  %v3868 = vmul.f32 %v3800, %v3852
  %v3869 = vmul.f32 %v3802, %v3853
  %v3870 = vmul.f32 %v3804, %v3854
  %v3871 = vmul.f32 %v3806, %v3855
  %v3872 = vmul.f32 %v3808, %v3856
  %v3873 = vpack.c.bf16 %v3858, %v3857
  %v3874 = vpack.c.bf16 %v3860, %v3859
  %v3875 = vpack.c.bf16 %v3862, %v3861
  %v3876 = vpack.c.bf16 %v3864, %v3863
  %v3877 = vpack.c.bf16 %v3866, %v3865
  %v3878 = vpack.c.bf16 %v3868, %v3867
  %v3879 = vpack.c.bf16 %v3870, %v3869
  %v3880 = vpack.c.bf16 %v3872, %v3871
  %3881 = vmatprep.subr.bf16.mxu0 0
  %3882 = vmatpush1.bf16.msra.mxu0 %v3576
  %3883 = vmatprep.subr.bf16.mxu0 0
  %3884 = vmatpush1.bf16.msra.mxu0 %v3577
  %3885 = vmatprep.subr.bf16.mxu0 0
  %3886 = vmatpush1.bf16.msra.mxu0 %v3578
  %3887 = vmatprep.subr.bf16.mxu0 0
  %3888 = vmatpush1.bf16.msra.mxu0 %v3579
  %3889 = vmatprep.subr.bf16.mxu0 0
  %3890 = vmatpush1.bf16.msra.mxu0 %v3580
  %3891 = vmatprep.subr.bf16.mxu0 0
  %3892 = vmatpush1.bf16.msra.mxu0 %v3581
  %3893 = vmatprep.subr.bf16.mxu0 0
  %3894 = vmatpush1.bf16.msra.mxu0 %v3582
  %3895 = vmatprep.subr.bf16.mxu0 0
  %3896 = vmatpush1.bf16.msra.mxu0 %v3583
  %3897 = vmatprep.subr.bf16.mxu0 0
  %3898 = vmatpush1.bf16.msra.mxu0 0
  %3899 = vmatprep.subr.bf16.mxu0 0
  %3900 = vmatpush1.bf16.msra.mxu0 0
  %3901 = vmatprep.subr.bf16.mxu0 0
  %3902 = vmatpush1.bf16.msra.mxu0 0
  %3903 = vmatprep.subr.bf16.mxu0 0
  %3904 = vmatpush1.bf16.msra.mxu0 0
  %3905 = vmatprep.subr.bf16.mxu0 0
  %3906 = vmatpush1.bf16.msra.mxu0 0
  %3907 = vmatprep.subr.bf16.mxu0 0
  %3908 = vmatpush1.bf16.msra.mxu0 0
  %3909 = vmatprep.subr.bf16.mxu0 0
  %3910 = vmatpush1.bf16.msra.mxu0 0
  %3911 = vmatprep.subr.bf16.mxu0 0
  %3912 = vmatpush1.bf16.msra.mxu0 0
  %3913 = vmatprep.mubr.bf16.mxu0 0
  %3914 = vmatmul.mubr.bf16.gmra.mrb[0].mxu0 %v3873
  %v3915 = vpop.f32.mrb[0].mxu0
  %v3916 = vadd.f32 0.0, %v3915
  %v3917 = vpop.f32.mrb[0].mxu0
  %v3918 = vpop.f32.mrb[0].mxu0
  %v3919 = vadd.f32 0.0, %v3918
  %v3920 = vpop.f32.mrb[0].mxu0
  %3921 = vmatprep.mubr.bf16.mxu0 0
  %3922 = vmatmul.mubr.bf16.gmra.mrb[0].mxu0 %v3874
  %v3923 = vpop.f32.mrb[0].mxu0
  %v3924 = vadd.f32 0.0, %v3923
  %v3925 = vpop.f32.mrb[0].mxu0
  %v3926 = vpop.f32.mrb[0].mxu0
  %v3927 = vadd.f32 0.0, %v3926
  %v3928 = vpop.f32.mrb[0].mxu0
  %3929 = vmatprep.mubr.bf16.mxu0 0
  %3930 = vmatmul.mubr.bf16.gmra.mrb[0].mxu0 %v3875
  %v3931 = vpop.f32.mrb[0].mxu0
  %v3932 = vadd.f32 0.0, %v3931
  %v3933 = vpop.f32.mrb[0].mxu0
  %v3934 = vpop.f32.mrb[0].mxu0
  %v3935 = vadd.f32 0.0, %v3934
  %v3936 = vpop.f32.mrb[0].mxu0
  %3937 = vmatprep.mubr.bf16.mxu0 0
  %3938 = vmatmul.mubr.bf16.gmra.mrb[0].mxu0 %v3876
  %v3939 = vpop.f32.mrb[0].mxu0
  %v3940 = vadd.f32 0.0, %v3939
  %v3941 = vpop.f32.mrb[0].mxu0
  %v3942 = vpop.f32.mrb[0].mxu0
  %v3943 = vadd.f32 0.0, %v3942
  %v3944 = vpop.f32.mrb[0].mxu0
  %3945 = vmatprep.mubr.bf16.mxu0 0
  %3946 = vmatmul.mubr.bf16.gmra.mrb[0].mxu0 %v3877
  %v3947 = vpop.f32.mrb[0].mxu0
  %v3948 = vadd.f32 0.0, %v3947
  %v3949 = vpop.f32.mrb[0].mxu0
  %v3950 = vpop.f32.mrb[0].mxu0
  %v3951 = vadd.f32 0.0, %v3950
  %v3952 = vpop.f32.mrb[0].mxu0
  %3953 = vmatprep.mubr.bf16.mxu0 0
  %3954 = vmatmul.mubr.bf16.gmra.mrb[0].mxu0 %v3878
  %v3955 = vpop.f32.mrb[0].mxu0
  %v3956 = vadd.f32 0.0, %v3955
  %v3957 = vpop.f32.mrb[0].mxu0
  %v3958 = vpop.f32.mrb[0].mxu0
  %v3959 = vadd.f32 0.0, %v3958
  %v3960 = vpop.f32.mrb[0].mxu0
  %3961 = vmatprep.mubr.bf16.mxu0 0
  %3962 = vmatmul.mubr.bf16.gmra.mrb[0].mxu0 %v3879
  %v3963 = vpop.f32.mrb[0].mxu0
  %v3964 = vadd.f32 0.0, %v3963
  %v3965 = vpop.f32.mrb[0].mxu0
  %v3966 = vpop.f32.mrb[0].mxu0
  %v3967 = vadd.f32 0.0, %v3966
  %v3968 = vpop.f32.mrb[0].mxu0
  %3969 = vmatprep.mubr.bf16.mxu0 0
  %3970 = vmatmul.mubr.bf16.gmra.mrb[0].mxu0 %v3880
  %v3971 = vpop.f32.mrb[0].mxu0
  %v3972 = vadd.f32 0.0, %v3971
  %v3973 = vpop.f32.mrb[0].mxu0
  %v3974 = vpop.f32.mrb[0].mxu0
  %v3975 = vadd.f32 0.0, %v3974
  %v3976 = vpop.f32.mrb[0].mxu0
  %3977 = vdwg.mxu0
  %v3978 = vpack.c.bf16 %v3919, %v3916
  %v3979 = vpack.c.bf16 %v3927, %v3924
  %v3980 = vpack.c.bf16 %v3935, %v3932
  %v3981 = vpack.c.bf16 %v3943, %v3940
  %v3982 = vpack.c.bf16 %v3951, %v3948
  %v3983 = vpack.c.bf16 %v3959, %v3956
  %v3984 = vpack.c.bf16 %v3967, %v3964
  %v3985 = vpack.c.bf16 %v3975, %v3972
  %s3986 = scalar_lea.vmem %s4, 64
  %v3987 = vld [vmem:[%s3986] sm:$0xf]
  %v3988 = vld [vmem:[%s3986 + $0x4] sm:$0xf]
  %v3989 = vld [vmem:[%s3986 + $0x8] sm:$0xf]
  %v3990 = vld [vmem:[%s3986 + $0xc] sm:$0xf]
  %v3991 = vld [vmem:[%s3986 + $0x10] sm:$0xf]
  %v3992 = vld [vmem:[%s3986 + $0x14] sm:$0xf]
  %v3993 = vld [vmem:[%s3986 + $0x18] sm:$0xf]
  %v3994 = vld [vmem:[%s3986 + $0x1c] sm:$0xf]
  %v4003 = vunpack.c.l.b16 %v3987
  %v4004 = vunpack.c.l.b16 %v3988
  %v4005 = vunpack.c.l.b16 %v3989
  %v4006 = vunpack.c.l.b16 %v3990
  %v4007 = vunpack.c.l.b16 %v3991
  %v4008 = vunpack.c.l.b16 %v3992
  %v4009 = vunpack.c.l.b16 %v3993
  %v4010 = vunpack.c.l.b16 %v3994
  %v4011 = vpack.c.b16 %v4004, %v4003
  %v4012 = vpack.c.b16 %v4006, %v4005
  %v4013 = vpack.c.b16 %v4008, %v4007
  %v4014 = vpack.c.b16 %v4010, %v4009
  %v4020 = vsel %vm692, %v3978, 0
  %v4023 = vsel %vm692, %v3979, 0
  %v4026 = vsel %vm692, %v3980, 0
  %v4029 = vsel %vm692, %v3981, 0
  %v4032 = vsel %vm692, %v3982, 0
  %v4035 = vsel %vm692, %v3983, 0
  %v4038 = vsel %vm692, %v3984, 0
  %v4041 = vsel %vm692, %v3985, 0
  %4043 = vmatprep.subr.bf16.mxu0 0
  %4044 = vmatpush1.bf16.msra.mxu0 %v4011
  %4045 = vmatprep.subr.bf16.mxu0 0
  %4046 = vmatpush1.bf16.msra.mxu0 %v4012
  %4047 = vmatprep.subr.bf16.mxu0 0
  %4048 = vmatpush1.bf16.msra.mxu0 %v4013
  %4049 = vmatprep.subr.bf16.mxu0 0
  %4050 = vmatpush1.bf16.msra.mxu0 %v4014
  %4051 = vmatprep.subr.bf16.mxu0 0
  %4052 = vmatpush1.bf16.msra.mxu0 0
  %4053 = vmatprep.subr.bf16.mxu0 0
  %4054 = vmatpush1.bf16.msra.mxu0 0
  %4055 = vmatprep.subr.bf16.mxu0 0
  %4056 = vmatpush1.bf16.msra.mxu0 0
  %4057 = vmatprep.subr.bf16.mxu0 0
  %4058 = vmatpush1.bf16.msra.mxu0 0
  %4059 = vmatprep.subr.bf16.mxu0 0
  %4060 = vmatpush1.bf16.msra.mxu0 0
  %4061 = vmatprep.subr.bf16.mxu0 0
  %4062 = vmatpush1.bf16.msra.mxu0 0
  %4063 = vmatprep.subr.bf16.mxu0 0
  %4064 = vmatpush1.bf16.msra.mxu0 0
  %4065 = vmatprep.subr.bf16.mxu0 0
  %4066 = vmatpush1.bf16.msra.mxu0 0
  %4067 = vmatprep.subr.bf16.mxu0 0
  %4068 = vmatpush1.bf16.msra.mxu0 0
  %4069 = vmatprep.subr.bf16.mxu0 0
  %4070 = vmatpush1.bf16.msra.mxu0 0
  %4071 = vmatprep.subr.bf16.mxu0 0
  %4072 = vmatpush1.bf16.msra.mxu0 0
  %4073 = vmatprep.subr.bf16.mxu0 0
  %4074 = vmatpush1.bf16.msra.mxu0 0
  %4075 = vmatprep.mubr.bf16.mxu0 0
  %4076 = vmatmul.mubr.bf16.gmra.mrb[0].mxu0 %v4020
  %v4077 = vpop.f32.mrb[0].mxu0
  %v4078 = vadd.f32 0.0, %v4077
  %v4079 = vpop.f32.mrb[0].mxu0
  %v4080 = vpop.f32.mrb[0].mxu0
  %v4081 = vadd.f32 0.0, %v4080
  %v4082 = vpop.f32.mrb[0].mxu0
  %4083 = vmatprep.mubr.bf16.mxu0 0
  %4084 = vmatmul.mubr.bf16.gmra.mrb[0].mxu0 %v4023
  %v4085 = vpop.f32.mrb[0].mxu0
  %v4086 = vadd.f32 0.0, %v4085
  %v4087 = vpop.f32.mrb[0].mxu0
  %v4088 = vpop.f32.mrb[0].mxu0
  %v4089 = vadd.f32 0.0, %v4088
  %v4090 = vpop.f32.mrb[0].mxu0
  %4091 = vmatprep.mubr.bf16.mxu0 0
  %4092 = vmatmul.mubr.bf16.gmra.mrb[0].mxu0 %v4026
  %v4093 = vpop.f32.mrb[0].mxu0
  %v4094 = vadd.f32 0.0, %v4093
  %v4095 = vpop.f32.mrb[0].mxu0
  %v4096 = vpop.f32.mrb[0].mxu0
  %v4097 = vadd.f32 0.0, %v4096
  %v4098 = vpop.f32.mrb[0].mxu0
  %4099 = vmatprep.mubr.bf16.mxu0 0
  %4100 = vmatmul.mubr.bf16.gmra.mrb[0].mxu0 %v4029
  %v4101 = vpop.f32.mrb[0].mxu0
  %v4102 = vadd.f32 0.0, %v4101
  %v4103 = vpop.f32.mrb[0].mxu0
  %v4104 = vpop.f32.mrb[0].mxu0
  %v4105 = vadd.f32 0.0, %v4104
  %v4106 = vpop.f32.mrb[0].mxu0
  %4107 = vmatprep.mubr.bf16.mxu0 0
  %4108 = vmatmul.mubr.bf16.gmra.mrb[0].mxu0 %v4032
  %v4109 = vpop.f32.mrb[0].mxu0
  %v4110 = vadd.f32 0.0, %v4109
  %v4111 = vpop.f32.mrb[0].mxu0
  %v4112 = vpop.f32.mrb[0].mxu0
  %v4113 = vadd.f32 0.0, %v4112
  %v4114 = vpop.f32.mrb[0].mxu0
  %4115 = vmatprep.mubr.bf16.mxu0 0
  %4116 = vmatmul.mubr.bf16.gmra.mrb[0].mxu0 %v4035
  %v4117 = vpop.f32.mrb[0].mxu0
  %v4118 = vadd.f32 0.0, %v4117
  %v4119 = vpop.f32.mrb[0].mxu0
  %v4120 = vpop.f32.mrb[0].mxu0
  %v4121 = vadd.f32 0.0, %v4120
  %v4122 = vpop.f32.mrb[0].mxu0
  %4123 = vmatprep.mubr.bf16.mxu0 0
  %4124 = vmatmul.mubr.bf16.gmra.mrb[0].mxu0 %v4038
  %v4125 = vpop.f32.mrb[0].mxu0
  %v4126 = vadd.f32 0.0, %v4125
  %v4127 = vpop.f32.mrb[0].mxu0
  %v4128 = vpop.f32.mrb[0].mxu0
  %v4129 = vadd.f32 0.0, %v4128
  %v4130 = vpop.f32.mrb[0].mxu0
  %4131 = vmatprep.mubr.bf16.mxu0 0
  %4132 = vmatmul.mubr.bf16.gmra.mrb[0].mxu0 %v4041
  %v4133 = vpop.f32.mrb[0].mxu0
  %v4134 = vadd.f32 0.0, %v4133
  %v4135 = vpop.f32.mrb[0].mxu0
  %v4136 = vpop.f32.mrb[0].mxu0
  %v4137 = vadd.f32 0.0, %v4136
  %v4138 = vpop.f32.mrb[0].mxu0
  %4139 = vdwg.mxu0
  %v4141 = vlaneseq
  %v4142 = vshrl.u32 %v4141, 7
  %v4143 = vsub.s32 0, %v4142
  %v4144 = vrot.slane %v3559, %v4143
  %v4146 = vadd.f32 %v4144, %v4078
  %v4147 = vadd.f32 %v4144, %v4081
  %v4148 = vadd.f32 %v4144, %v4086
  %v4149 = vadd.f32 %v4144, %v4089
  %v4150 = vadd.f32 %v4144, %v4094
  %v4151 = vadd.f32 %v4144, %v4097
  %v4152 = vadd.f32 %v4144, %v4102
  %v4153 = vadd.f32 %v4144, %v4105
  %v4154 = vadd.f32 %v4144, %v4110
  %v4155 = vadd.f32 %v4144, %v4113
  %v4156 = vadd.f32 %v4144, %v4118
  %v4157 = vadd.f32 %v4144, %v4121
  %v4158 = vadd.f32 %v4144, %v4126
  %v4159 = vadd.f32 %v4144, %v4129
  %v4160 = vadd.f32 %v4144, %v4134
  %v4161 = vadd.f32 %v4144, %v4137
  %4170 = vrot.lane.b32.xlu0 %v3560, 64
  %v4171 = vpop.permute.xlu0 %4170
  %4172 = vrot.lane.b32.xlu0 %v3561, 64
  %v4173 = vpop.permute.xlu0 %4172
  %4174 = vrot.lane.b32.xlu0 %v3562, 64
  %v4175 = vpop.permute.xlu0 %4174
  %4176 = vrot.lane.b32.xlu0 %v3563, 64
  %v4177 = vpop.permute.xlu0 %4176
  %4178 = vrot.lane.b32.xlu0 %v3564, 64
  %v4179 = vpop.permute.xlu0 %4178
  %4180 = vrot.lane.b32.xlu0 %v3565, 64
  %v4181 = vpop.permute.xlu0 %4180
  %4182 = vrot.lane.b32.xlu0 %v3566, 64
  %v4183 = vpop.permute.xlu0 %4182
  %4184 = vrot.lane.b32.xlu0 %v3567, 64
  %v4185 = vpop.permute.xlu0 %4184
  %4194 = vrot.lane.b32.xlu0 %v3568, 64
  %v4195 = vpop.permute.xlu0 %4194
  %4196 = vrot.lane.b32.xlu0 %v3569, 64
  %v4197 = vpop.permute.xlu0 %4196
  %4198 = vrot.lane.b32.xlu0 %v3570, 64
  %v4199 = vpop.permute.xlu0 %4198
  %4200 = vrot.lane.b32.xlu0 %v3571, 64
  %v4201 = vpop.permute.xlu0 %4200
  %4202 = vrot.lane.b32.xlu0 %v3572, 64
  %v4203 = vpop.permute.xlu0 %4202
  %4204 = vrot.lane.b32.xlu0 %v3573, 64
  %v4205 = vpop.permute.xlu0 %4204
  %4206 = vrot.lane.b32.xlu0 %v3574, 64
  %v4207 = vpop.permute.xlu0 %4206
  %4208 = vrot.lane.b32.xlu0 %v3575, 64
  %v4209 = vpop.permute.xlu0 %4208
  %v4211 = vsel %vm692, %v4171, 0
  %v4214 = vsel %vm692, %v4173, 0
  %v4217 = vsel %vm692, %v4175, 0
  %v4220 = vsel %vm692, %v4177, 0
  %v4223 = vsel %vm692, %v4179, 0
  %v4226 = vsel %vm692, %v4181, 0
  %v4229 = vsel %vm692, %v4183, 0
  %v4232 = vsel %vm692, %v4185, 0
  %v4235 = vsel %vm692, %v4195, 0
  %v4238 = vsel %vm692, %v4197, 0
  %v4241 = vsel %vm692, %v4199, 0
  %v4244 = vsel %vm692, %v4201, 0
  %v4247 = vsel %vm692, %v4203, 0
  %v4250 = vsel %vm692, %v4205, 0
  %v4253 = vsel %vm692, %v4207, 0
  %v4256 = vsel %vm692, %v4209, 0
  %4258 = vmatprep.subr.bf16.mxu0 0
  %4259 = vmatpush1.bf16.xpose.msra.mxu0 %v4235
  %4260 = vmatprep.subr.bf16.mxu0 0
  %4261 = vmatpush1.bf16.xpose.msra.mxu0 %v4238
  %4262 = vmatprep.subr.bf16.mxu0 0
  %4263 = vmatpush1.bf16.xpose.msra.mxu0 %v4241
  %4264 = vmatprep.subr.bf16.mxu0 0
  %4265 = vmatpush1.bf16.xpose.msra.mxu0 %v4244
  %4266 = vmatprep.subr.bf16.mxu0 0
  %4267 = vmatpush1.bf16.xpose.msra.mxu0 %v4247
  %4268 = vmatprep.subr.bf16.mxu0 0
  %4269 = vmatpush1.bf16.xpose.msra.mxu0 %v4250
  %4270 = vmatprep.subr.bf16.mxu0 0
  %4271 = vmatpush1.bf16.xpose.msra.mxu0 %v4253
  %4272 = vmatprep.subr.bf16.mxu0 0
  %4273 = vmatpush1.bf16.xpose.msra.mxu0 %v4256
  %4274 = vmatprep.subr.bf16.mxu0 0
  %4275 = vmatpush1.bf16.xpose.msra.mxu0 0
  %4276 = vmatprep.subr.bf16.mxu0 0
  %4277 = vmatpush1.bf16.xpose.msra.mxu0 0
  %4278 = vmatprep.subr.bf16.mxu0 0
  %4279 = vmatpush1.bf16.xpose.msra.mxu0 0
  %4280 = vmatprep.subr.bf16.mxu0 0
  %4281 = vmatpush1.bf16.xpose.msra.mxu0 0
  %4282 = vmatprep.subr.bf16.mxu0 0
  %4283 = vmatpush1.bf16.xpose.msra.mxu0 0
  %4284 = vmatprep.subr.bf16.mxu0 0
  %4285 = vmatpush1.bf16.xpose.msra.mxu0 0
  %4286 = vmatprep.subr.bf16.mxu0 0
  %4287 = vmatpush1.bf16.xpose.msra.mxu0 0
  %4288 = vmatprep.subr.bf16.mxu0 0
  %4289 = vmatpush1.bf16.xpose.msra.mxu0 0
  %4290 = vmatprep.mubr.bf16.mxu0 0
  %4291 = vmatmul.mubr.bf16.gmra.mrb[0].mxu0 %v4211
  %v4292 = vpop.f32.mrb[0].mxu0
  %v4293 = vadd.f32 %v690, %v4292
  %v4294 = vpop.f32.mrb[0].mxu0
  %v4295 = vpop.f32.mrb[0].mxu0
  %v4296 = vadd.f32 %v690, %v4295
  %v4297 = vpop.f32.mrb[0].mxu0
  %4298 = vmatprep.mubr.bf16.mxu0 0
  %4299 = vmatmul.mubr.bf16.gmra.mrb[0].mxu0 %v4214
  %v4300 = vpop.f32.mrb[0].mxu0
  %v4301 = vadd.f32 %v690, %v4300
  %v4302 = vpop.f32.mrb[0].mxu0
  %v4303 = vpop.f32.mrb[0].mxu0
  %v4304 = vadd.f32 %v690, %v4303
  %v4305 = vpop.f32.mrb[0].mxu0
  %4306 = vmatprep.mubr.bf16.mxu0 0
  %4307 = vmatmul.mubr.bf16.gmra.mrb[0].mxu0 %v4217
  %v4308 = vpop.f32.mrb[0].mxu0
  %v4309 = vadd.f32 %v690, %v4308
  %v4310 = vpop.f32.mrb[0].mxu0
  %v4311 = vpop.f32.mrb[0].mxu0
  %v4312 = vadd.f32 %v690, %v4311
  %v4313 = vpop.f32.mrb[0].mxu0
  %4314 = vmatprep.mubr.bf16.mxu0 0
  %4315 = vmatmul.mubr.bf16.gmra.mrb[0].mxu0 %v4220
  %v4316 = vpop.f32.mrb[0].mxu0
  %v4317 = vadd.f32 %v690, %v4316
  %v4318 = vpop.f32.mrb[0].mxu0
  %v4319 = vpop.f32.mrb[0].mxu0
  %v4320 = vadd.f32 %v690, %v4319
  %v4321 = vpop.f32.mrb[0].mxu0
  %4322 = vmatprep.mubr.bf16.mxu0 0
  %4323 = vmatmul.mubr.bf16.gmra.mrb[0].mxu0 %v4223
  %v4324 = vpop.f32.mrb[0].mxu0
  %v4325 = vadd.f32 %v690, %v4324
  %v4326 = vpop.f32.mrb[0].mxu0
  %v4327 = vpop.f32.mrb[0].mxu0
  %v4328 = vadd.f32 %v690, %v4327
  %v4329 = vpop.f32.mrb[0].mxu0
  %4330 = vmatprep.mubr.bf16.mxu0 0
  %4331 = vmatmul.mubr.bf16.gmra.mrb[0].mxu0 %v4226
  %v4332 = vpop.f32.mrb[0].mxu0
  %v4333 = vadd.f32 %v690, %v4332
  %v4334 = vpop.f32.mrb[0].mxu0
  %v4335 = vpop.f32.mrb[0].mxu0
  %v4336 = vadd.f32 %v690, %v4335
  %v4337 = vpop.f32.mrb[0].mxu0
  %4338 = vmatprep.mubr.bf16.mxu0 0
  %4339 = vmatmul.mubr.bf16.gmra.mrb[0].mxu0 %v4229
  %v4340 = vpop.f32.mrb[0].mxu0
  %v4341 = vadd.f32 %v690, %v4340
  %v4342 = vpop.f32.mrb[0].mxu0
  %v4343 = vpop.f32.mrb[0].mxu0
  %v4344 = vadd.f32 %v690, %v4343
  %v4345 = vpop.f32.mrb[0].mxu0
  %4346 = vmatprep.mubr.bf16.mxu0 0
  %4347 = vmatmul.mubr.bf16.gmra.mrb[0].mxu0 %v4232
  %v4348 = vpop.f32.mrb[0].mxu0
  %v4349 = vadd.f32 %v690, %v4348
  %v4350 = vpop.f32.mrb[0].mxu0
  %v4351 = vpop.f32.mrb[0].mxu0
  %v4352 = vadd.f32 %v690, %v4351
  %v4353 = vpop.f32.mrb[0].mxu0
  %4354 = vdwg.mxu0
  %4355 = vmax.xlane.f32.xlu0 %v4293
  %v4356 = vpop.xlane.xlu0 %4355
  %4357 = vmax.xlane.f32.xlu0 %v4296
  %v4358 = vpop.xlane.xlu0 %4357
  %4359 = vmax.xlane.f32.xlu0 %v4301
  %v4360 = vpop.xlane.xlu0 %4359
  %4361 = vmax.xlane.f32.xlu0 %v4304
  %v4362 = vpop.xlane.xlu0 %4361
  %4363 = vmax.xlane.f32.xlu0 %v4309
  %v4364 = vpop.xlane.xlu0 %4363
  %4365 = vmax.xlane.f32.xlu0 %v4312
  %v4366 = vpop.xlane.xlu0 %4365
  %4367 = vmax.xlane.f32.xlu0 %v4317
  %v4368 = vpop.xlane.xlu0 %4367
  %4369 = vmax.xlane.f32.xlu0 %v4320
  %v4370 = vpop.xlane.xlu0 %4369
  %4371 = vmax.xlane.f32.xlu0 %v4325
  %v4372 = vpop.xlane.xlu0 %4371
  %4373 = vmax.xlane.f32.xlu0 %v4328
  %v4374 = vpop.xlane.xlu0 %4373
  %4375 = vmax.xlane.f32.xlu0 %v4333
  %v4376 = vpop.xlane.xlu0 %4375
  %4377 = vmax.xlane.f32.xlu0 %v4336
  %v4378 = vpop.xlane.xlu0 %4377
  %4379 = vmax.xlane.f32.xlu0 %v4341
  %v4380 = vpop.xlane.xlu0 %4379
  %4381 = vmax.xlane.f32.xlu0 %v4344
  %v4382 = vpop.xlane.xlu0 %4381
  %4383 = vmax.xlane.f32.xlu0 %v4349
  %v4384 = vpop.xlane.xlu0 %4383
  %4385 = vmax.xlane.f32.xlu0 %v4352
  %v4386 = vpop.xlane.xlu0 %4385
  %v4387 = vsub.f32 %v4293, %v4356
  %v4388 = vsub.f32 %v4296, %v4358
  %v4389 = vsub.f32 %v4301, %v4360
  %v4390 = vsub.f32 %v4304, %v4362
  %v4391 = vsub.f32 %v4309, %v4364
  %v4392 = vsub.f32 %v4312, %v4366
  %v4393 = vsub.f32 %v4317, %v4368
  %v4394 = vsub.f32 %v4320, %v4370
  %v4395 = vsub.f32 %v4325, %v4372
  %v4396 = vsub.f32 %v4328, %v4374
  %v4397 = vsub.f32 %v4333, %v4376
  %v4398 = vsub.f32 %v4336, %v4378
  %v4399 = vsub.f32 %v4341, %v4380
  %v4400 = vsub.f32 %v4344, %v4382
  %v4401 = vsub.f32 %v4349, %v4384
  %v4402 = vsub.f32 %v4352, %v4386
  %v4403 = vmul.f32 %v4387, 1.442695
  %v4404 = vpow.pop %v4403
  %v4405 = vmul.f32 %v4388, 1.442695
  %v4406 = vpow.pop %v4405
  %v4407 = vmul.f32 %v4389, 1.442695
  %v4408 = vpow.pop %v4407
  %v4409 = vmul.f32 %v4390, 1.442695
  %v4410 = vpow.pop %v4409
  %v4411 = vmul.f32 %v4391, 1.442695
  %v4412 = vpow.pop %v4411
  %v4413 = vmul.f32 %v4392, 1.442695
  %v4414 = vpow.pop %v4413
  %v4415 = vmul.f32 %v4393, 1.442695
  %v4416 = vpow.pop %v4415
  %v4417 = vmul.f32 %v4394, 1.442695
  %v4418 = vpow.pop %v4417
  %v4419 = vmul.f32 %v4395, 1.442695
  %v4420 = vpow.pop %v4419
  %v4421 = vmul.f32 %v4396, 1.442695
  %v4422 = vpow.pop %v4421
  %v4423 = vmul.f32 %v4397, 1.442695
  %v4424 = vpow.pop %v4423
  %v4425 = vmul.f32 %v4398, 1.442695
  %v4426 = vpow.pop %v4425
  %v4427 = vmul.f32 %v4399, 1.442695
  %v4428 = vpow.pop %v4427
  %v4429 = vmul.f32 %v4400, 1.442695
  %v4430 = vpow.pop %v4429
  %v4431 = vmul.f32 %v4401, 1.442695
  %v4432 = vpow.pop %v4431
  %v4433 = vmul.f32 %v4402, 1.442695
  %v4434 = vpow.pop %v4433
  %4435 = vadd.xlane.f32.xlu0 %v4404
  %v4436 = vpop.xlane.xlu0 %4435
  %4437 = vadd.xlane.f32.xlu0 %v4406
  %v4438 = vpop.xlane.xlu0 %4437
  %4439 = vadd.xlane.f32.xlu0 %v4408
  %v4440 = vpop.xlane.xlu0 %4439
  %4441 = vadd.xlane.f32.xlu0 %v4410
  %v4442 = vpop.xlane.xlu0 %4441
  %4443 = vadd.xlane.f32.xlu0 %v4412
  %v4444 = vpop.xlane.xlu0 %4443
  %4445 = vadd.xlane.f32.xlu0 %v4414
  %v4446 = vpop.xlane.xlu0 %4445
  %4447 = vadd.xlane.f32.xlu0 %v4416
  %v4448 = vpop.xlane.xlu0 %4447
  %4449 = vadd.xlane.f32.xlu0 %v4418
  %v4450 = vpop.xlane.xlu0 %4449
  %4451 = vadd.xlane.f32.xlu0 %v4420
  %v4452 = vpop.xlane.xlu0 %4451
  %4453 = vadd.xlane.f32.xlu0 %v4422
  %v4454 = vpop.xlane.xlu0 %4453
  %4455 = vadd.xlane.f32.xlu0 %v4424
  %v4456 = vpop.xlane.xlu0 %4455
  %4457 = vadd.xlane.f32.xlu0 %v4426
  %v4458 = vpop.xlane.xlu0 %4457
  %4459 = vadd.xlane.f32.xlu0 %v4428
  %v4460 = vpop.xlane.xlu0 %4459
  %4461 = vadd.xlane.f32.xlu0 %v4430
  %v4462 = vpop.xlane.xlu0 %4461
  %4463 = vadd.xlane.f32.xlu0 %v4432
  %v4464 = vpop.xlane.xlu0 %4463
  %4465 = vadd.xlane.f32.xlu0 %v4434
  %v4466 = vpop.xlane.xlu0 %4465
  %v4467 = vrcp.pop %v4436
  %v4468 = vrcp.pop %v4438
  %v4469 = vrcp.pop %v4440
  %v4470 = vrcp.pop %v4442
  %v4471 = vrcp.pop %v4444
  %v4472 = vrcp.pop %v4446
  %v4473 = vrcp.pop %v4448
  %v4474 = vrcp.pop %v4450
  %v4475 = vrcp.pop %v4452
  %v4476 = vrcp.pop %v4454
  %v4477 = vrcp.pop %v4456
  %v4478 = vrcp.pop %v4458
  %v4479 = vrcp.pop %v4460
  %v4480 = vrcp.pop %v4462
  %v4481 = vrcp.pop %v4464
  %v4482 = vrcp.pop %v4466
  %v4483 = vmul.f32 %v4404, %v4467
  %v4484 = vmul.f32 %v4406, %v4468
  %v4485 = vmul.f32 %v4408, %v4469
  %v4486 = vmul.f32 %v4410, %v4470
  %v4487 = vmul.f32 %v4412, %v4471
  %v4488 = vmul.f32 %v4414, %v4472
  %v4489 = vmul.f32 %v4416, %v4473
  %v4490 = vmul.f32 %v4418, %v4474
  %v4491 = vmul.f32 %v4420, %v4475
  %v4492 = vmul.f32 %v4422, %v4476
  %v4493 = vmul.f32 %v4424, %v4477
  %v4494 = vmul.f32 %v4426, %v4478
  %v4495 = vmul.f32 %v4428, %v4479
  %v4496 = vmul.f32 %v4430, %v4480
  %v4497 = vmul.f32 %v4432, %v4481
  %v4498 = vmul.f32 %v4434, %v4482
  %v4499 = vpack.c.bf16 %v4484, %v4483
  %v4500 = vpack.c.bf16 %v4486, %v4485
  %v4501 = vpack.c.bf16 %v4488, %v4487
  %v4502 = vpack.c.bf16 %v4490, %v4489
  %v4503 = vpack.c.bf16 %v4492, %v4491
  %v4504 = vpack.c.bf16 %v4494, %v4493
  %v4505 = vpack.c.bf16 %v4496, %v4495
  %v4506 = vpack.c.bf16 %v4498, %v4497
  %4515 = vrot.lane.b32.xlu0 %v3576, 64
  %v4516 = vpop.permute.xlu0 %4515
  %4517 = vrot.lane.b32.xlu0 %v3577, 64
  %v4518 = vpop.permute.xlu0 %4517
  %4519 = vrot.lane.b32.xlu0 %v3578, 64
  %v4520 = vpop.permute.xlu0 %4519
  %4521 = vrot.lane.b32.xlu0 %v3579, 64
  %v4522 = vpop.permute.xlu0 %4521
  %4523 = vrot.lane.b32.xlu0 %v3580, 64
  %v4524 = vpop.permute.xlu0 %4523
  %4525 = vrot.lane.b32.xlu0 %v3581, 64
  %v4526 = vpop.permute.xlu0 %4525
  %4527 = vrot.lane.b32.xlu0 %v3582, 64
  %v4528 = vpop.permute.xlu0 %4527
  %4529 = vrot.lane.b32.xlu0 %v3583, 64
  %v4530 = vpop.permute.xlu0 %4529
  %4539 = vmatprep.subr.bf16.mxu0 0
  %4540 = vmatpush1.bf16.msra.mxu0 %v4516
  %4541 = vmatprep.subr.bf16.mxu0 0
  %4542 = vmatpush1.bf16.msra.mxu0 %v4518
  %4543 = vmatprep.subr.bf16.mxu0 0
  %4544 = vmatpush1.bf16.msra.mxu0 %v4520
  %4545 = vmatprep.subr.bf16.mxu0 0
  %4546 = vmatpush1.bf16.msra.mxu0 %v4522
  %4547 = vmatprep.subr.bf16.mxu0 0
  %4548 = vmatpush1.bf16.msra.mxu0 %v4524
  %4549 = vmatprep.subr.bf16.mxu0 0
  %4550 = vmatpush1.bf16.msra.mxu0 %v4526
  %4551 = vmatprep.subr.bf16.mxu0 0
  %4552 = vmatpush1.bf16.msra.mxu0 %v4528
  %4553 = vmatprep.subr.bf16.mxu0 0
  %4554 = vmatpush1.bf16.msra.mxu0 %v4530
  %4555 = vmatprep.subr.bf16.mxu0 0
  %4556 = vmatpush1.bf16.msra.mxu0 0
  %4557 = vmatprep.subr.bf16.mxu0 0
  %4558 = vmatpush1.bf16.msra.mxu0 0
  %4559 = vmatprep.subr.bf16.mxu0 0
  %4560 = vmatpush1.bf16.msra.mxu0 0
  %4561 = vmatprep.subr.bf16.mxu0 0
  %4562 = vmatpush1.bf16.msra.mxu0 0
  %4563 = vmatprep.subr.bf16.mxu0 0
  %4564 = vmatpush1.bf16.msra.mxu0 0
  %4565 = vmatprep.subr.bf16.mxu0 0
  %4566 = vmatpush1.bf16.msra.mxu0 0
  %4567 = vmatprep.subr.bf16.mxu0 0
  %4568 = vmatpush1.bf16.msra.mxu0 0
  %4569 = vmatprep.subr.bf16.mxu0 0
  %4570 = vmatpush1.bf16.msra.mxu0 0
  %4571 = vmatprep.mubr.bf16.mxu0 0
  %4572 = vmatmul.mubr.bf16.gmra.mrb[0].mxu0 %v4499
  %v4573 = vpop.f32.mrb[0].mxu0
  %v4574 = vadd.f32 0.0, %v4573
  %v4575 = vpop.f32.mrb[0].mxu0
  %v4576 = vpop.f32.mrb[0].mxu0
  %v4577 = vadd.f32 0.0, %v4576
  %v4578 = vpop.f32.mrb[0].mxu0
  %4579 = vmatprep.mubr.bf16.mxu0 0
  %4580 = vmatmul.mubr.bf16.gmra.mrb[0].mxu0 %v4500
  %v4581 = vpop.f32.mrb[0].mxu0
  %v4582 = vadd.f32 0.0, %v4581
  %v4583 = vpop.f32.mrb[0].mxu0
  %v4584 = vpop.f32.mrb[0].mxu0
  %v4585 = vadd.f32 0.0, %v4584
  %v4586 = vpop.f32.mrb[0].mxu0
  %4587 = vmatprep.mubr.bf16.mxu0 0
  %4588 = vmatmul.mubr.bf16.gmra.mrb[0].mxu0 %v4501
  %v4589 = vpop.f32.mrb[0].mxu0
  %v4590 = vadd.f32 0.0, %v4589
  %v4591 = vpop.f32.mrb[0].mxu0
  %v4592 = vpop.f32.mrb[0].mxu0
  %v4593 = vadd.f32 0.0, %v4592
  %v4594 = vpop.f32.mrb[0].mxu0
  %4595 = vmatprep.mubr.bf16.mxu0 0
  %4596 = vmatmul.mubr.bf16.gmra.mrb[0].mxu0 %v4502
  %v4597 = vpop.f32.mrb[0].mxu0
  %v4598 = vadd.f32 0.0, %v4597
  %v4599 = vpop.f32.mrb[0].mxu0
  %v4600 = vpop.f32.mrb[0].mxu0
  %v4601 = vadd.f32 0.0, %v4600
  %v4602 = vpop.f32.mrb[0].mxu0
  %4603 = vmatprep.mubr.bf16.mxu0 0
  %4604 = vmatmul.mubr.bf16.gmra.mrb[0].mxu0 %v4503
  %v4605 = vpop.f32.mrb[0].mxu0
  %v4606 = vadd.f32 0.0, %v4605
  %v4607 = vpop.f32.mrb[0].mxu0
  %v4608 = vpop.f32.mrb[0].mxu0
  %v4609 = vadd.f32 0.0, %v4608
  %v4610 = vpop.f32.mrb[0].mxu0
  %4611 = vmatprep.mubr.bf16.mxu0 0
  %4612 = vmatmul.mubr.bf16.gmra.mrb[0].mxu0 %v4504
  %v4613 = vpop.f32.mrb[0].mxu0
  %v4614 = vadd.f32 0.0, %v4613
  %v4615 = vpop.f32.mrb[0].mxu0
  %v4616 = vpop.f32.mrb[0].mxu0
  %v4617 = vadd.f32 0.0, %v4616
  %v4618 = vpop.f32.mrb[0].mxu0
  %4619 = vmatprep.mubr.bf16.mxu0 0
  %4620 = vmatmul.mubr.bf16.gmra.mrb[0].mxu0 %v4505
  %v4621 = vpop.f32.mrb[0].mxu0
  %v4622 = vadd.f32 0.0, %v4621
  %v4623 = vpop.f32.mrb[0].mxu0
  %v4624 = vpop.f32.mrb[0].mxu0
  %v4625 = vadd.f32 0.0, %v4624
  %v4626 = vpop.f32.mrb[0].mxu0
  %4627 = vmatprep.mubr.bf16.mxu0 0
  %4628 = vmatmul.mubr.bf16.gmra.mrb[0].mxu0 %v4506
  %v4629 = vpop.f32.mrb[0].mxu0
  %v4630 = vadd.f32 0.0, %v4629
  %v4631 = vpop.f32.mrb[0].mxu0
  %v4632 = vpop.f32.mrb[0].mxu0
  %v4633 = vadd.f32 0.0, %v4632
  %v4634 = vpop.f32.mrb[0].mxu0
  %4635 = vdwg.mxu0
  %v4636 = vpack.c.bf16 %v4577, %v4574
  %v4637 = vpack.c.bf16 %v4585, %v4582
  %v4638 = vpack.c.bf16 %v4593, %v4590
  %v4639 = vpack.c.bf16 %v4601, %v4598
  %v4640 = vpack.c.bf16 %v4609, %v4606
  %v4641 = vpack.c.bf16 %v4617, %v4614
  %v4642 = vpack.c.bf16 %v4625, %v4622
  %v4643 = vpack.c.bf16 %v4633, %v4630
  %v4644 = vld [vmem:[%s3986 + $0x20] sm:$0xf]
  %v4645 = vld [vmem:[%s3986 + $0x24] sm:$0xf]
  %v4646 = vld [vmem:[%s3986 + $0x28] sm:$0xf]
  %v4647 = vld [vmem:[%s3986 + $0x2c] sm:$0xf]
  %v4648 = vld [vmem:[%s3986 + $0x30] sm:$0xf]
  %v4649 = vld [vmem:[%s3986 + $0x34] sm:$0xf]
  %v4650 = vld [vmem:[%s3986 + $0x38] sm:$0xf]
  %v4651 = vld [vmem:[%s3986 + $0x3c] sm:$0xf]
  %v4660 = vunpack.c.l.b16 %v4644
  %v4661 = vunpack.c.l.b16 %v4645
  %v4662 = vunpack.c.l.b16 %v4646
  %v4663 = vunpack.c.l.b16 %v4647
  %v4664 = vunpack.c.l.b16 %v4648
  %v4665 = vunpack.c.l.b16 %v4649
  %v4666 = vunpack.c.l.b16 %v4650
  %v4667 = vunpack.c.l.b16 %v4651
  %v4668 = vpack.c.b16 %v4661, %v4660
  %v4669 = vpack.c.b16 %v4663, %v4662
  %v4670 = vpack.c.b16 %v4665, %v4664
  %v4671 = vpack.c.b16 %v4667, %v4666
  %v4677 = vsel %vm692, %v4636, 0
  %v4680 = vsel %vm692, %v4637, 0
  %v4683 = vsel %vm692, %v4638, 0
  %v4686 = vsel %vm692, %v4639, 0
  %v4689 = vsel %vm692, %v4640, 0
  %v4692 = vsel %vm692, %v4641, 0
  %v4695 = vsel %vm692, %v4642, 0
  %v4698 = vsel %vm692, %v4643, 0
  %4700 = vmatprep.subr.bf16.mxu0 0
  %4701 = vmatpush1.bf16.msra.mxu0 %v4668
  %4702 = vmatprep.subr.bf16.mxu0 0
  %4703 = vmatpush1.bf16.msra.mxu0 %v4669
  %4704 = vmatprep.subr.bf16.mxu0 0
  %4705 = vmatpush1.bf16.msra.mxu0 %v4670
  %4706 = vmatprep.subr.bf16.mxu0 0
  %4707 = vmatpush1.bf16.msra.mxu0 %v4671
  %4708 = vmatprep.subr.bf16.mxu0 0
  %4709 = vmatpush1.bf16.msra.mxu0 0
  %4710 = vmatprep.subr.bf16.mxu0 0
  %4711 = vmatpush1.bf16.msra.mxu0 0
  %4712 = vmatprep.subr.bf16.mxu0 0
  %4713 = vmatpush1.bf16.msra.mxu0 0
  %4714 = vmatprep.subr.bf16.mxu0 0
  %4715 = vmatpush1.bf16.msra.mxu0 0
  %4716 = vmatprep.subr.bf16.mxu0 0
  %4717 = vmatpush1.bf16.msra.mxu0 0
  %4718 = vmatprep.subr.bf16.mxu0 0
  %4719 = vmatpush1.bf16.msra.mxu0 0
  %4720 = vmatprep.subr.bf16.mxu0 0
  %4721 = vmatpush1.bf16.msra.mxu0 0
  %4722 = vmatprep.subr.bf16.mxu0 0
  %4723 = vmatpush1.bf16.msra.mxu0 0
  %4724 = vmatprep.subr.bf16.mxu0 0
  %4725 = vmatpush1.bf16.msra.mxu0 0
  %4726 = vmatprep.subr.bf16.mxu0 0
  %4727 = vmatpush1.bf16.msra.mxu0 0
  %4728 = vmatprep.subr.bf16.mxu0 0
  %4729 = vmatpush1.bf16.msra.mxu0 0
  %4730 = vmatprep.subr.bf16.mxu0 0
  %4731 = vmatpush1.bf16.msra.mxu0 0
  %4732 = vmatprep.mubr.bf16.mxu0 0
  %4733 = vmatmul.mubr.bf16.gmra.mrb[0].mxu0 %v4677
  %v4734 = vpop.f32.mrb[0].mxu0
  %v4735 = vadd.f32 0.0, %v4734
  %v4736 = vpop.f32.mrb[0].mxu0
  %v4737 = vpop.f32.mrb[0].mxu0
  %v4738 = vadd.f32 0.0, %v4737
  %v4739 = vpop.f32.mrb[0].mxu0
  %4740 = vmatprep.mubr.bf16.mxu0 0
  %4741 = vmatmul.mubr.bf16.gmra.mrb[0].mxu0 %v4680
  %v4742 = vpop.f32.mrb[0].mxu0
  %v4743 = vadd.f32 0.0, %v4742
  %v4744 = vpop.f32.mrb[0].mxu0
  %v4745 = vpop.f32.mrb[0].mxu0
  %v4746 = vadd.f32 0.0, %v4745
  %v4747 = vpop.f32.mrb[0].mxu0
  %4748 = vmatprep.mubr.bf16.mxu0 0
  %4749 = vmatmul.mubr.bf16.gmra.mrb[0].mxu0 %v4683
  %v4750 = vpop.f32.mrb[0].mxu0
  %v4751 = vadd.f32 0.0, %v4750
  %v4752 = vpop.f32.mrb[0].mxu0
  %v4753 = vpop.f32.mrb[0].mxu0
  %v4754 = vadd.f32 0.0, %v4753
  %v4755 = vpop.f32.mrb[0].mxu0
  %4756 = vmatprep.mubr.bf16.mxu0 0
  %4757 = vmatmul.mubr.bf16.gmra.mrb[0].mxu0 %v4686
  %v4758 = vpop.f32.mrb[0].mxu0
  %v4759 = vadd.f32 0.0, %v4758
  %v4760 = vpop.f32.mrb[0].mxu0
  %v4761 = vpop.f32.mrb[0].mxu0
  %v4762 = vadd.f32 0.0, %v4761
  %v4763 = vpop.f32.mrb[0].mxu0
  %4764 = vmatprep.mubr.bf16.mxu0 0
  %4765 = vmatmul.mubr.bf16.gmra.mrb[0].mxu0 %v4689
  %v4766 = vpop.f32.mrb[0].mxu0
  %v4767 = vadd.f32 0.0, %v4766
  %v4768 = vpop.f32.mrb[0].mxu0
  %v4769 = vpop.f32.mrb[0].mxu0
  %v4770 = vadd.f32 0.0, %v4769
  %v4771 = vpop.f32.mrb[0].mxu0
  %4772 = vmatprep.mubr.bf16.mxu0 0
  %4773 = vmatmul.mubr.bf16.gmra.mrb[0].mxu0 %v4692
  %v4774 = vpop.f32.mrb[0].mxu0
  %v4775 = vadd.f32 0.0, %v4774
  %v4776 = vpop.f32.mrb[0].mxu0
  %v4777 = vpop.f32.mrb[0].mxu0
  %v4778 = vadd.f32 0.0, %v4777
  %v4779 = vpop.f32.mrb[0].mxu0
  %4780 = vmatprep.mubr.bf16.mxu0 0
  %4781 = vmatmul.mubr.bf16.gmra.mrb[0].mxu0 %v4695
  %v4782 = vpop.f32.mrb[0].mxu0
  %v4783 = vadd.f32 0.0, %v4782
  %v4784 = vpop.f32.mrb[0].mxu0
  %v4785 = vpop.f32.mrb[0].mxu0
  %v4786 = vadd.f32 0.0, %v4785
  %v4787 = vpop.f32.mrb[0].mxu0
  %4788 = vmatprep.mubr.bf16.mxu0 0
  %4789 = vmatmul.mubr.bf16.gmra.mrb[0].mxu0 %v4698
  %v4790 = vpop.f32.mrb[0].mxu0
  %v4791 = vadd.f32 0.0, %v4790
  %v4792 = vpop.f32.mrb[0].mxu0
  %v4793 = vpop.f32.mrb[0].mxu0
  %v4794 = vadd.f32 0.0, %v4793
  %v4795 = vpop.f32.mrb[0].mxu0
  %4796 = vdwg.mxu0
  %v4797 = vadd.f32 %v4146, %v4735
  %v4798 = vadd.f32 %v4147, %v4738
  %v4799 = vadd.f32 %v4148, %v4743
  %v4800 = vadd.f32 %v4149, %v4746
  %v4801 = vadd.f32 %v4150, %v4751
  %v4802 = vadd.f32 %v4151, %v4754
  %v4803 = vadd.f32 %v4152, %v4759
  %v4804 = vadd.f32 %v4153, %v4762
  %v4805 = vadd.f32 %v4154, %v4767
  %v4806 = vadd.f32 %v4155, %v4770
  %v4807 = vadd.f32 %v4156, %v4775
  %v4808 = vadd.f32 %v4157, %v4778
  %v4809 = vadd.f32 %v4158, %v4783
  %v4810 = vadd.f32 %v4159, %v4786
  %v4811 = vadd.f32 %v4160, %v4791
  %v4812 = vadd.f32 %v4161, %v4794
  %v4813 = vadd.f32 %v4797, %v3146
  %v4814 = vadd.f32 %v4798, %v3147
  %v4815 = vadd.f32 %v4799, %v3148
  %v4816 = vadd.f32 %v4800, %v3149
  %v4817 = vadd.f32 %v4801, %v3150
  %v4818 = vadd.f32 %v4802, %v3151
  %v4819 = vadd.f32 %v4803, %v3152
  %v4820 = vadd.f32 %v4804, %v3153
  %v4821 = vadd.f32 %v4805, %v3154
  %v4822 = vadd.f32 %v4806, %v3155
  %v4823 = vadd.f32 %v4807, %v3156
  %v4824 = vadd.f32 %v4808, %v3157
  %v4825 = vadd.f32 %v4809, %v3158
  %v4826 = vadd.f32 %v4810, %v3159
  %v4827 = vadd.f32 %v4811, %v3160
  %v4828 = vadd.f32 %v4812, %v3161
  %v4829 = vld [vmem:[%s3203 + $0x7] sm:$0x1]
  %v4830 = vld [vmem:[%s3203 + $0x8] sm:$0x1]
  %4831 = vadd.xlane.f32.xlu0 %v4813
  %v4832 = vpop.xlane.xlu0 %4831
  %4833 = vadd.xlane.f32.xlu0 %v4814
  %v4834 = vpop.xlane.xlu0 %4833
  %4835 = vadd.xlane.f32.xlu0 %v4815
  %v4836 = vpop.xlane.xlu0 %4835
  %4837 = vadd.xlane.f32.xlu0 %v4816
  %v4838 = vpop.xlane.xlu0 %4837
  %4839 = vadd.xlane.f32.xlu0 %v4817
  %v4840 = vpop.xlane.xlu0 %4839
  %4841 = vadd.xlane.f32.xlu0 %v4818
  %v4842 = vpop.xlane.xlu0 %4841
  %4843 = vadd.xlane.f32.xlu0 %v4819
  %v4844 = vpop.xlane.xlu0 %4843
  %4845 = vadd.xlane.f32.xlu0 %v4820
  %v4846 = vpop.xlane.xlu0 %4845
  %4847 = vadd.xlane.f32.xlu0 %v4821
  %v4848 = vpop.xlane.xlu0 %4847
  %4849 = vadd.xlane.f32.xlu0 %v4822
  %v4850 = vpop.xlane.xlu0 %4849
  %4851 = vadd.xlane.f32.xlu0 %v4823
  %v4852 = vpop.xlane.xlu0 %4851
  %4853 = vadd.xlane.f32.xlu0 %v4824
  %v4854 = vpop.xlane.xlu0 %4853
  %4855 = vadd.xlane.f32.xlu0 %v4825
  %v4856 = vpop.xlane.xlu0 %4855
  %4857 = vadd.xlane.f32.xlu0 %v4826
  %v4858 = vpop.xlane.xlu0 %4857
  %4859 = vadd.xlane.f32.xlu0 %v4827
  %v4860 = vpop.xlane.xlu0 %4859
  %4861 = vadd.xlane.f32.xlu0 %v4828
  %v4862 = vpop.xlane.xlu0 %4861
  %v4863 = vmul.f32 %v4832, %v81
  %v4864 = vmul.f32 %v4834, %v81
  %v4865 = vmul.f32 %v4836, %v81
  %v4866 = vmul.f32 %v4838, %v81
  %v4867 = vmul.f32 %v4840, %v81
  %v4868 = vmul.f32 %v4842, %v81
  %v4869 = vmul.f32 %v4844, %v81
  %v4870 = vmul.f32 %v4846, %v81
  %v4871 = vmul.f32 %v4848, %v81
  %v4872 = vmul.f32 %v4850, %v81
  %v4873 = vmul.f32 %v4852, %v81
  %v4874 = vmul.f32 %v4854, %v81
  %v4875 = vmul.f32 %v4856, %v81
  %v4876 = vmul.f32 %v4858, %v81
  %v4877 = vmul.f32 %v4860, %v81
  %v4878 = vmul.f32 %v4862, %v81
  %v4879 = vsub.f32 %v4813, %v4863
  %v4880 = vsub.f32 %v4814, %v4864
  %v4881 = vsub.f32 %v4815, %v4865
  %v4882 = vsub.f32 %v4816, %v4866
  %v4883 = vsub.f32 %v4817, %v4867
  %v4884 = vsub.f32 %v4818, %v4868
  %v4885 = vsub.f32 %v4819, %v4869
  %v4886 = vsub.f32 %v4820, %v4870
  %v4887 = vsub.f32 %v4821, %v4871
  %v4888 = vsub.f32 %v4822, %v4872
  %v4889 = vsub.f32 %v4823, %v4873
  %v4890 = vsub.f32 %v4824, %v4874
  %v4891 = vsub.f32 %v4825, %v4875
  %v4892 = vsub.f32 %v4826, %v4876
  %v4893 = vsub.f32 %v4827, %v4877
  %v4894 = vsub.f32 %v4828, %v4878
  %v4895 = vmul.f32 %v4879, %v4879
  %v4896 = vmul.f32 %v4880, %v4880
  %v4897 = vmul.f32 %v4881, %v4881
  %v4898 = vmul.f32 %v4882, %v4882
  %v4899 = vmul.f32 %v4883, %v4883
  %v4900 = vmul.f32 %v4884, %v4884
  %v4901 = vmul.f32 %v4885, %v4885
  %v4902 = vmul.f32 %v4886, %v4886
  %v4903 = vmul.f32 %v4887, %v4887
  %v4904 = vmul.f32 %v4888, %v4888
  %v4905 = vmul.f32 %v4889, %v4889
  %v4906 = vmul.f32 %v4890, %v4890
  %v4907 = vmul.f32 %v4891, %v4891
  %v4908 = vmul.f32 %v4892, %v4892
  %v4909 = vmul.f32 %v4893, %v4893
  %v4910 = vmul.f32 %v4894, %v4894
  %4911 = vadd.xlane.f32.xlu0 %v4895
  %v4912 = vpop.xlane.xlu0 %4911
  %4913 = vadd.xlane.f32.xlu0 %v4896
  %v4914 = vpop.xlane.xlu0 %4913
  %4915 = vadd.xlane.f32.xlu0 %v4897
  %v4916 = vpop.xlane.xlu0 %4915
  %4917 = vadd.xlane.f32.xlu0 %v4898
  %v4918 = vpop.xlane.xlu0 %4917
  %4919 = vadd.xlane.f32.xlu0 %v4899
  %v4920 = vpop.xlane.xlu0 %4919
  %4921 = vadd.xlane.f32.xlu0 %v4900
  %v4922 = vpop.xlane.xlu0 %4921
  %4923 = vadd.xlane.f32.xlu0 %v4901
  %v4924 = vpop.xlane.xlu0 %4923
  %4925 = vadd.xlane.f32.xlu0 %v4902
  %v4926 = vpop.xlane.xlu0 %4925
  %4927 = vadd.xlane.f32.xlu0 %v4903
  %v4928 = vpop.xlane.xlu0 %4927
  %4929 = vadd.xlane.f32.xlu0 %v4904
  %v4930 = vpop.xlane.xlu0 %4929
  %4931 = vadd.xlane.f32.xlu0 %v4905
  %v4932 = vpop.xlane.xlu0 %4931
  %4933 = vadd.xlane.f32.xlu0 %v4906
  %v4934 = vpop.xlane.xlu0 %4933
  %4935 = vadd.xlane.f32.xlu0 %v4907
  %v4936 = vpop.xlane.xlu0 %4935
  %4937 = vadd.xlane.f32.xlu0 %v4908
  %v4938 = vpop.xlane.xlu0 %4937
  %4939 = vadd.xlane.f32.xlu0 %v4909
  %v4940 = vpop.xlane.xlu0 %4939
  %4941 = vadd.xlane.f32.xlu0 %v4910
  %v4942 = vpop.xlane.xlu0 %4941
  %v4943 = vmul.f32 %v4912, %v81
  %v4944 = vmul.f32 %v4914, %v81
  %v4945 = vmul.f32 %v4916, %v81
  %v4946 = vmul.f32 %v4918, %v81
  %v4947 = vmul.f32 %v4920, %v81
  %v4948 = vmul.f32 %v4922, %v81
  %v4949 = vmul.f32 %v4924, %v81
  %v4950 = vmul.f32 %v4926, %v81
  %v4951 = vmul.f32 %v4928, %v81
  %v4952 = vmul.f32 %v4930, %v81
  %v4953 = vmul.f32 %v4932, %v81
  %v4954 = vmul.f32 %v4934, %v81
  %v4955 = vmul.f32 %v4936, %v81
  %v4956 = vmul.f32 %v4938, %v81
  %v4957 = vmul.f32 %v4940, %v81
  %v4958 = vmul.f32 %v4942, %v81
  %v4959 = vadd.f32 %v4943, 1e-12
  %v4960 = vadd.f32 %v4944, 1e-12
  %v4961 = vadd.f32 %v4945, 1e-12
  %v4962 = vadd.f32 %v4946, 1e-12
  %v4963 = vadd.f32 %v4947, 1e-12
  %v4964 = vadd.f32 %v4948, 1e-12
  %v4965 = vadd.f32 %v4949, 1e-12
  %v4966 = vadd.f32 %v4950, 1e-12
  %v4967 = vadd.f32 %v4951, 1e-12
  %v4968 = vadd.f32 %v4952, 1e-12
  %v4969 = vadd.f32 %v4953, 1e-12
  %v4970 = vadd.f32 %v4954, 1e-12
  %v4971 = vadd.f32 %v4955, 1e-12
  %v4972 = vadd.f32 %v4956, 1e-12
  %v4973 = vadd.f32 %v4957, 1e-12
  %v4974 = vadd.f32 %v4958, 1e-12
  %v4975 = vrsqrt.pop %v4959
  %v4976 = vrsqrt.pop %v4960
  %v4977 = vrsqrt.pop %v4961
  %v4978 = vrsqrt.pop %v4962
  %v4979 = vrsqrt.pop %v4963
  %v4980 = vrsqrt.pop %v4964
  %v4981 = vrsqrt.pop %v4965
  %v4982 = vrsqrt.pop %v4966
  %v4983 = vrsqrt.pop %v4967
  %v4984 = vrsqrt.pop %v4968
  %v4985 = vrsqrt.pop %v4969
  %v4986 = vrsqrt.pop %v4970
  %v4987 = vrsqrt.pop %v4971
  %v4988 = vrsqrt.pop %v4972
  %v4989 = vrsqrt.pop %v4973
  %v4990 = vrsqrt.pop %v4974
  %v4991 = vmul.f32 %v4879, %v4975
  %v4992 = vmul.f32 %v4880, %v4976
  %v4993 = vmul.f32 %v4881, %v4977
  %v4994 = vmul.f32 %v4882, %v4978
  %v4995 = vmul.f32 %v4883, %v4979
  %v4996 = vmul.f32 %v4884, %v4980
  %v4997 = vmul.f32 %v4885, %v4981
  %v4998 = vmul.f32 %v4886, %v4982
  %v4999 = vmul.f32 %v4887, %v4983
  %v5000 = vmul.f32 %v4888, %v4984
  %v5001 = vmul.f32 %v4889, %v4985
  %v5002 = vmul.f32 %v4890, %v4986
  %v5003 = vmul.f32 %v4891, %v4987
  %v5004 = vmul.f32 %v4892, %v4988
  %v5005 = vmul.f32 %v4893, %v4989
  %v5006 = vmul.f32 %v4894, %v4990
  %v5008 = vlaneseq
  %v5009 = vshrl.u32 %v5008, 7
  %v5010 = vsub.s32 0, %v5009
  %v5011 = vrot.slane %v4829, %v5010
  %v5013 = vmul.f32 %v4991, %v5011
  %v5014 = vmul.f32 %v4992, %v5011
  %v5015 = vmul.f32 %v4993, %v5011
  %v5016 = vmul.f32 %v4994, %v5011
  %v5017 = vmul.f32 %v4995, %v5011
  %v5018 = vmul.f32 %v4996, %v5011
  %v5019 = vmul.f32 %v4997, %v5011
  %v5020 = vmul.f32 %v4998, %v5011
  %v5021 = vmul.f32 %v4999, %v5011
  %v5022 = vmul.f32 %v5000, %v5011
  %v5023 = vmul.f32 %v5001, %v5011
  %v5024 = vmul.f32 %v5002, %v5011
  %v5025 = vmul.f32 %v5003, %v5011
  %v5026 = vmul.f32 %v5004, %v5011
  %v5027 = vmul.f32 %v5005, %v5011
  %v5028 = vmul.f32 %v5006, %v5011
  %v5030 = vlaneseq
  %v5031 = vshrl.u32 %v5030, 7
  %v5032 = vsub.s32 0, %v5031
  %v5033 = vrot.slane %v4830, %v5032
  %v5035 = vadd.f32 %v5013, %v5033
  %v5036 = vadd.f32 %v5014, %v5033
  %v5037 = vadd.f32 %v5015, %v5033
  %v5038 = vadd.f32 %v5016, %v5033
  %v5039 = vadd.f32 %v5017, %v5033
  %v5040 = vadd.f32 %v5018, %v5033
  %v5041 = vadd.f32 %v5019, %v5033
  %v5042 = vadd.f32 %v5020, %v5033
  %v5043 = vadd.f32 %v5021, %v5033
  %v5044 = vadd.f32 %v5022, %v5033
  %v5045 = vadd.f32 %v5023, %v5033
  %v5046 = vadd.f32 %v5024, %v5033
  %v5047 = vadd.f32 %v5025, %v5033
  %v5048 = vadd.f32 %v5026, %v5033
  %v5049 = vadd.f32 %v5027, %v5033
  %v5050 = vadd.f32 %v5028, %v5033
  %v5051 = vpack.c.bf16 %v5036, %v5035
  %v5052 = vpack.c.bf16 %v5038, %v5037
  %v5053 = vpack.c.bf16 %v5040, %v5039
  %v5054 = vpack.c.bf16 %v5042, %v5041
  %v5055 = vpack.c.bf16 %v5044, %v5043
  %v5056 = vpack.c.bf16 %v5046, %v5045
  %v5057 = vpack.c.bf16 %v5048, %v5047
  %v5058 = vpack.c.bf16 %v5050, %v5049
  %s5059 = scalar_lea.vmem %s5, 128
  %v5060 = vld [vmem:[%s5059] sm:$0xff]
  %v5061 = vld [vmem:[%s5059 + $0x8] sm:$0xff]
  %v5062 = vld [vmem:[%s5059 + $0x10] sm:$0xff]
  %v5063 = vld [vmem:[%s5059 + $0x18] sm:$0xff]
  %v5064 = vld [vmem:[%s5059 + $0x20] sm:$0xff]
  %v5065 = vld [vmem:[%s5059 + $0x28] sm:$0xff]
  %v5066 = vld [vmem:[%s5059 + $0x30] sm:$0xff]
  %v5067 = vld [vmem:[%s5059 + $0x38] sm:$0xff]
  %v5068 = vld [vmem:[%s5059 + $0x40] sm:$0xff]
  %v5069 = vld [vmem:[%s5059 + $0x48] sm:$0xff]
  %v5070 = vld [vmem:[%s5059 + $0x50] sm:$0xff]
  %v5071 = vld [vmem:[%s5059 + $0x58] sm:$0xff]
  %v5072 = vld [vmem:[%s5059 + $0x60] sm:$0xff]
  %v5073 = vld [vmem:[%s5059 + $0x68] sm:$0xff]
  %v5074 = vld [vmem:[%s5059 + $0x70] sm:$0xff]
  %v5075 = vld [vmem:[%s5059 + $0x78] sm:$0xff]
  %v5076 = vld [vmem:[%s3203 + $0x4] sm:$0x3]
  %v5078 = vlaneseq
  %v5079 = vshrl.u32 %v5078, 7
  %v5080 = vsub.s32 0, %v5079
  %v5081 = vrot.slane %v5076, %v5080
  %v5082 = vlaneseq
  %v5083 = vshrl.u32 %v5082, 7
  %v5084 = vsub.s32 1, %v5083
  %v5085 = vrot.slane %v5076, %v5084
  %v5104 = vunpack.c.l.b16 %v5060
  %v5105 = vunpack.c.h.b16 %v5060
  %v5106 = vunpack.c.l.b16 %v5061
  %v5107 = vunpack.c.h.b16 %v5061
  %v5108 = vunpack.c.l.b16 %v5062
  %v5109 = vunpack.c.h.b16 %v5062
  %v5110 = vunpack.c.l.b16 %v5063
  %v5111 = vunpack.c.h.b16 %v5063
  %v5112 = vunpack.c.l.b16 %v5064
  %v5113 = vunpack.c.h.b16 %v5064
  %v5114 = vunpack.c.l.b16 %v5065
  %v5115 = vunpack.c.h.b16 %v5065
  %v5116 = vunpack.c.l.b16 %v5066
  %v5117 = vunpack.c.h.b16 %v5066
  %v5118 = vunpack.c.l.b16 %v5067
  %v5119 = vunpack.c.h.b16 %v5067
  %v5120 = vunpack.c.l.b16 %v5068
  %v5121 = vunpack.c.h.b16 %v5068
  %v5122 = vunpack.c.l.b16 %v5069
  %v5123 = vunpack.c.h.b16 %v5069
  %v5124 = vunpack.c.l.b16 %v5070
  %v5125 = vunpack.c.h.b16 %v5070
  %v5126 = vunpack.c.l.b16 %v5071
  %v5127 = vunpack.c.h.b16 %v5071
  %v5128 = vunpack.c.l.b16 %v5072
  %v5129 = vunpack.c.h.b16 %v5072
  %v5130 = vunpack.c.l.b16 %v5073
  %v5131 = vunpack.c.h.b16 %v5073
  %v5132 = vunpack.c.l.b16 %v5074
  %v5133 = vunpack.c.h.b16 %v5074
  %v5134 = vunpack.c.l.b16 %v5075
  %v5135 = vunpack.c.h.b16 %v5075
  %v5136 = vpack.c.b16 %v5106, %v5104
  %v5137 = vpack.c.b16 %v5107, %v5105
  %v5138 = vpack.c.b16 %v5110, %v5108
  %v5139 = vpack.c.b16 %v5111, %v5109
  %v5140 = vpack.c.b16 %v5114, %v5112
  %v5141 = vpack.c.b16 %v5115, %v5113
  %v5142 = vpack.c.b16 %v5118, %v5116
  %v5143 = vpack.c.b16 %v5119, %v5117
  %v5144 = vpack.c.b16 %v5122, %v5120
  %v5145 = vpack.c.b16 %v5123, %v5121
  %v5146 = vpack.c.b16 %v5126, %v5124
  %v5147 = vpack.c.b16 %v5127, %v5125
  %v5148 = vpack.c.b16 %v5130, %v5128
  %v5149 = vpack.c.b16 %v5131, %v5129
  %v5150 = vpack.c.b16 %v5134, %v5132
  %v5151 = vpack.c.b16 %v5135, %v5133
  %5168 = vmatprep.subr.bf16.mxu0 %v5137
  %5169 = vmatpush1.bf16.msra.mxu0 %v5136
  %5170 = vmatprep.subr.bf16.mxu0 %v5139
  %5171 = vmatpush1.bf16.msra.mxu0 %v5138
  %5172 = vmatprep.subr.bf16.mxu0 %v5141
  %5173 = vmatpush1.bf16.msra.mxu0 %v5140
  %5174 = vmatprep.subr.bf16.mxu0 %v5143
  %5175 = vmatpush1.bf16.msra.mxu0 %v5142
  %5176 = vmatprep.subr.bf16.mxu0 %v5145
  %5177 = vmatpush1.bf16.msra.mxu0 %v5144
  %5178 = vmatprep.subr.bf16.mxu0 %v5147
  %5179 = vmatpush1.bf16.msra.mxu0 %v5146
  %5180 = vmatprep.subr.bf16.mxu0 %v5149
  %5181 = vmatpush1.bf16.msra.mxu0 %v5148
  %5182 = vmatprep.subr.bf16.mxu0 %v5151
  %5183 = vmatpush1.bf16.msra.mxu0 %v5150
  %5184 = vmatprep.subr.bf16.mxu0 0
  %5185 = vmatpush1.bf16.msra.mxu0 0
  %5186 = vmatprep.subr.bf16.mxu0 0
  %5187 = vmatpush1.bf16.msra.mxu0 0
  %5188 = vmatprep.subr.bf16.mxu0 0
  %5189 = vmatpush1.bf16.msra.mxu0 0
  %5190 = vmatprep.subr.bf16.mxu0 0
  %5191 = vmatpush1.bf16.msra.mxu0 0
  %5192 = vmatprep.subr.bf16.mxu0 0
  %5193 = vmatpush1.bf16.msra.mxu0 0
  %5194 = vmatprep.subr.bf16.mxu0 0
  %5195 = vmatpush1.bf16.msra.mxu0 0
  %5196 = vmatprep.subr.bf16.mxu0 0
  %5197 = vmatpush1.bf16.msra.mxu0 0
  %5198 = vmatprep.subr.bf16.mxu0 0
  %5199 = vmatpush1.bf16.msra.mxu0 0
  %5200 = vmatprep.mubr.bf16.mxu0 0
  %5201 = vmatmul.mubr.bf16.gmra.mrb[0].mxu0 %v5051
  %v5202 = vpop.f32.mrb[0].mxu0
  %v5203 = vadd.f32 %v5081, %v5202
  %v5204 = vpop.f32.mrb[0].mxu0
  %v5205 = vadd.f32 %v5085, %v5204
  %v5206 = vpop.f32.mrb[0].mxu0
  %v5207 = vadd.f32 %v5081, %v5206
  %v5208 = vpop.f32.mrb[0].mxu0
  %v5209 = vadd.f32 %v5085, %v5208
  %5210 = vmatprep.mubr.bf16.mxu0 0
  %5211 = vmatmul.mubr.bf16.gmra.mrb[0].mxu0 %v5052
  %v5212 = vpop.f32.mrb[0].mxu0
  %v5213 = vadd.f32 %v5081, %v5212
  %v5214 = vpop.f32.mrb[0].mxu0
  %v5215 = vadd.f32 %v5085, %v5214
  %v5216 = vpop.f32.mrb[0].mxu0
  %v5217 = vadd.f32 %v5081, %v5216
  %v5218 = vpop.f32.mrb[0].mxu0
  %v5219 = vadd.f32 %v5085, %v5218
  %5220 = vmatprep.mubr.bf16.mxu0 0
  %5221 = vmatmul.mubr.bf16.gmra.mrb[0].mxu0 %v5053
  %v5222 = vpop.f32.mrb[0].mxu0
  %v5223 = vadd.f32 %v5081, %v5222
  %v5224 = vpop.f32.mrb[0].mxu0
  %v5225 = vadd.f32 %v5085, %v5224
  %v5226 = vpop.f32.mrb[0].mxu0
  %v5227 = vadd.f32 %v5081, %v5226
  %v5228 = vpop.f32.mrb[0].mxu0
  %v5229 = vadd.f32 %v5085, %v5228
  %5230 = vmatprep.mubr.bf16.mxu0 0
  %5231 = vmatmul.mubr.bf16.gmra.mrb[0].mxu0 %v5054
  %v5232 = vpop.f32.mrb[0].mxu0
  %v5233 = vadd.f32 %v5081, %v5232
  %v5234 = vpop.f32.mrb[0].mxu0
  %v5235 = vadd.f32 %v5085, %v5234
  %v5236 = vpop.f32.mrb[0].mxu0
  %v5237 = vadd.f32 %v5081, %v5236
  %v5238 = vpop.f32.mrb[0].mxu0
  %v5239 = vadd.f32 %v5085, %v5238
  %5240 = vmatprep.mubr.bf16.mxu0 0
  %5241 = vmatmul.mubr.bf16.gmra.mrb[0].mxu0 %v5055
  %v5242 = vpop.f32.mrb[0].mxu0
  %v5243 = vadd.f32 %v5081, %v5242
  %v5244 = vpop.f32.mrb[0].mxu0
  %v5245 = vadd.f32 %v5085, %v5244
  %v5246 = vpop.f32.mrb[0].mxu0
  %v5247 = vadd.f32 %v5081, %v5246
  %v5248 = vpop.f32.mrb[0].mxu0
  %v5249 = vadd.f32 %v5085, %v5248
  %5250 = vmatprep.mubr.bf16.mxu0 0
  %5251 = vmatmul.mubr.bf16.gmra.mrb[0].mxu0 %v5056
  %v5252 = vpop.f32.mrb[0].mxu0
  %v5253 = vadd.f32 %v5081, %v5252
  %v5254 = vpop.f32.mrb[0].mxu0
  %v5255 = vadd.f32 %v5085, %v5254
  %v5256 = vpop.f32.mrb[0].mxu0
  %v5257 = vadd.f32 %v5081, %v5256
  %v5258 = vpop.f32.mrb[0].mxu0
  %v5259 = vadd.f32 %v5085, %v5258
  %5260 = vmatprep.mubr.bf16.mxu0 0
  %5261 = vmatmul.mubr.bf16.gmra.mrb[0].mxu0 %v5057
  %v5262 = vpop.f32.mrb[0].mxu0
  %v5263 = vadd.f32 %v5081, %v5262
  %v5264 = vpop.f32.mrb[0].mxu0
  %v5265 = vadd.f32 %v5085, %v5264
  %v5266 = vpop.f32.mrb[0].mxu0
  %v5267 = vadd.f32 %v5081, %v5266
  %v5268 = vpop.f32.mrb[0].mxu0
  %v5269 = vadd.f32 %v5085, %v5268
  %5270 = vmatprep.mubr.bf16.mxu0 0
  %5271 = vmatmul.mubr.bf16.gmra.mrb[0].mxu0 %v5058
  %v5272 = vpop.f32.mrb[0].mxu0
  %v5273 = vadd.f32 %v5081, %v5272
  %v5274 = vpop.f32.mrb[0].mxu0
  %v5275 = vadd.f32 %v5085, %v5274
  %v5276 = vpop.f32.mrb[0].mxu0
  %v5277 = vadd.f32 %v5081, %v5276
  %v5278 = vpop.f32.mrb[0].mxu0
  %v5279 = vadd.f32 %v5085, %v5278
  %5280 = vdwg.mxu0
  %v5281 = vmul.f32 %v5203, %v5203
  %v5282 = vmul.f32 %v5205, %v5205
  %v5283 = vmul.f32 %v5207, %v5207
  %v5284 = vmul.f32 %v5209, %v5209
  %v5285 = vmul.f32 %v5213, %v5213
  %v5286 = vmul.f32 %v5215, %v5215
  %v5287 = vmul.f32 %v5217, %v5217
  %v5288 = vmul.f32 %v5219, %v5219
  %v5289 = vmul.f32 %v5223, %v5223
  %v5290 = vmul.f32 %v5225, %v5225
  %v5291 = vmul.f32 %v5227, %v5227
  %v5292 = vmul.f32 %v5229, %v5229
  %v5293 = vmul.f32 %v5233, %v5233
  %v5294 = vmul.f32 %v5235, %v5235
  %v5295 = vmul.f32 %v5237, %v5237
  %v5296 = vmul.f32 %v5239, %v5239
  %v5297 = vmul.f32 %v5243, %v5243
  %v5298 = vmul.f32 %v5245, %v5245
  %v5299 = vmul.f32 %v5247, %v5247
  %v5300 = vmul.f32 %v5249, %v5249
  %v5301 = vmul.f32 %v5253, %v5253
  %v5302 = vmul.f32 %v5255, %v5255
  %v5303 = vmul.f32 %v5257, %v5257
  %v5304 = vmul.f32 %v5259, %v5259
  %v5305 = vmul.f32 %v5263, %v5263
  %v5306 = vmul.f32 %v5265, %v5265
  %v5307 = vmul.f32 %v5267, %v5267
  %v5308 = vmul.f32 %v5269, %v5269
  %v5309 = vmul.f32 %v5273, %v5273
  %v5310 = vmul.f32 %v5275, %v5275
  %v5311 = vmul.f32 %v5277, %v5277
  %v5312 = vmul.f32 %v5279, %v5279
  %v5313 = vmul.f32 %v5203, %v5281
  %v5314 = vmul.f32 %v5205, %v5282
  %v5315 = vmul.f32 %v5207, %v5283
  %v5316 = vmul.f32 %v5209, %v5284
  %v5317 = vmul.f32 %v5213, %v5285
  %v5318 = vmul.f32 %v5215, %v5286
  %v5319 = vmul.f32 %v5217, %v5287
  %v5320 = vmul.f32 %v5219, %v5288
  %v5321 = vmul.f32 %v5223, %v5289
  %v5322 = vmul.f32 %v5225, %v5290
  %v5323 = vmul.f32 %v5227, %v5291
  %v5324 = vmul.f32 %v5229, %v5292
  %v5325 = vmul.f32 %v5233, %v5293
  %v5326 = vmul.f32 %v5235, %v5294
  %v5327 = vmul.f32 %v5237, %v5295
  %v5328 = vmul.f32 %v5239, %v5296
  %v5329 = vmul.f32 %v5243, %v5297
  %v5330 = vmul.f32 %v5245, %v5298
  %v5331 = vmul.f32 %v5247, %v5299
  %v5332 = vmul.f32 %v5249, %v5300
  %v5333 = vmul.f32 %v5253, %v5301
  %v5334 = vmul.f32 %v5255, %v5302
  %v5335 = vmul.f32 %v5257, %v5303
  %v5336 = vmul.f32 %v5259, %v5304
  %v5337 = vmul.f32 %v5263, %v5305
  %v5338 = vmul.f32 %v5265, %v5306
  %v5339 = vmul.f32 %v5267, %v5307
  %v5340 = vmul.f32 %v5269, %v5308
  %v5341 = vmul.f32 %v5273, %v5309
  %v5342 = vmul.f32 %v5275, %v5310
  %v5343 = vmul.f32 %v5277, %v5311
  %v5344 = vmul.f32 %v5279, %v5312
  %v5345 = vmul.f32 %v5313, 0.044715
  %v5346 = vmul.f32 %v5314, 0.044715
  %v5347 = vmul.f32 %v5315, 0.044715
  %v5348 = vmul.f32 %v5316, 0.044715
  %v5349 = vmul.f32 %v5317, 0.044715
  %v5350 = vmul.f32 %v5318, 0.044715
  %v5351 = vmul.f32 %v5319, 0.044715
  %v5352 = vmul.f32 %v5320, 0.044715
  %v5353 = vmul.f32 %v5321, 0.044715
  %v5354 = vmul.f32 %v5322, 0.044715
  %v5355 = vmul.f32 %v5323, 0.044715
  %v5356 = vmul.f32 %v5324, 0.044715
  %v5357 = vmul.f32 %v5325, 0.044715
  %v5358 = vmul.f32 %v5326, 0.044715
  %v5359 = vmul.f32 %v5327, 0.044715
  %v5360 = vmul.f32 %v5328, 0.044715
  %v5361 = vmul.f32 %v5329, 0.044715
  %v5362 = vmul.f32 %v5330, 0.044715
  %v5363 = vmul.f32 %v5331, 0.044715
  %v5364 = vmul.f32 %v5332, 0.044715
  %v5365 = vmul.f32 %v5333, 0.044715
  %v5366 = vmul.f32 %v5334, 0.044715
  %v5367 = vmul.f32 %v5335, 0.044715
  %v5368 = vmul.f32 %v5336, 0.044715
  %v5369 = vmul.f32 %v5337, 0.044715
  %v5370 = vmul.f32 %v5338, 0.044715
  %v5371 = vmul.f32 %v5339, 0.044715
  %v5372 = vmul.f32 %v5340, 0.044715
  %v5373 = vmul.f32 %v5341, 0.044715
  %v5374 = vmul.f32 %v5342, 0.044715
  %v5375 = vmul.f32 %v5343, 0.044715
  %v5376 = vmul.f32 %v5344, 0.044715
  %v5377 = vadd.f32 %v5203, %v5345
  %v5378 = vadd.f32 %v5205, %v5346
  %v5379 = vadd.f32 %v5207, %v5347
  %v5380 = vadd.f32 %v5209, %v5348
  %v5381 = vadd.f32 %v5213, %v5349
  %v5382 = vadd.f32 %v5215, %v5350
  %v5383 = vadd.f32 %v5217, %v5351
  %v5384 = vadd.f32 %v5219, %v5352
  %v5385 = vadd.f32 %v5223, %v5353
  %v5386 = vadd.f32 %v5225, %v5354
  %v5387 = vadd.f32 %v5227, %v5355
  %v5388 = vadd.f32 %v5229, %v5356
  %v5389 = vadd.f32 %v5233, %v5357
  %v5390 = vadd.f32 %v5235, %v5358
  %v5391 = vadd.f32 %v5237, %v5359
  %v5392 = vadd.f32 %v5239, %v5360
  %v5393 = vadd.f32 %v5243, %v5361
  %v5394 = vadd.f32 %v5245, %v5362
  %v5395 = vadd.f32 %v5247, %v5363
  %v5396 = vadd.f32 %v5249, %v5364
  %v5397 = vadd.f32 %v5253, %v5365
  %v5398 = vadd.f32 %v5255, %v5366
  %v5399 = vadd.f32 %v5257, %v5367
  %v5400 = vadd.f32 %v5259, %v5368
  %v5401 = vadd.f32 %v5263, %v5369
  %v5402 = vadd.f32 %v5265, %v5370
  %v5403 = vadd.f32 %v5267, %v5371
  %v5404 = vadd.f32 %v5269, %v5372
  %v5405 = vadd.f32 %v5273, %v5373
  %v5406 = vadd.f32 %v5275, %v5374
  %v5407 = vadd.f32 %v5277, %v5375
  %v5408 = vadd.f32 %v5279, %v5376
  %v5409 = vmul.f32 %v5377, 0.7978846
  %v5410 = vmul.f32 %v5378, 0.7978846
  %v5411 = vmul.f32 %v5379, 0.7978846
  %v5412 = vmul.f32 %v5380, 0.7978846
  %v5413 = vmul.f32 %v5381, 0.7978846
  %v5414 = vmul.f32 %v5382, 0.7978846
  %v5415 = vmul.f32 %v5383, 0.7978846
  %v5416 = vmul.f32 %v5384, 0.7978846
  %v5417 = vmul.f32 %v5385, 0.7978846
  %v5418 = vmul.f32 %v5386, 0.7978846
  %v5419 = vmul.f32 %v5387, 0.7978846
  %v5420 = vmul.f32 %v5388, 0.7978846
  %v5421 = vmul.f32 %v5389, 0.7978846
  %v5422 = vmul.f32 %v5390, 0.7978846
  %v5423 = vmul.f32 %v5391, 0.7978846
  %v5424 = vmul.f32 %v5392, 0.7978846
  %v5425 = vmul.f32 %v5393, 0.7978846
  %v5426 = vmul.f32 %v5394, 0.7978846
  %v5427 = vmul.f32 %v5395, 0.7978846
  %v5428 = vmul.f32 %v5396, 0.7978846
  %v5429 = vmul.f32 %v5397, 0.7978846
  %v5430 = vmul.f32 %v5398, 0.7978846
  %v5431 = vmul.f32 %v5399, 0.7978846
  %v5432 = vmul.f32 %v5400, 0.7978846
  %v5433 = vmul.f32 %v5401, 0.7978846
  %v5434 = vmul.f32 %v5402, 0.7978846
  %v5435 = vmul.f32 %v5403, 0.7978846
  %v5436 = vmul.f32 %v5404, 0.7978846
  %v5437 = vmul.f32 %v5405, 0.7978846
  %v5438 = vmul.f32 %v5406, 0.7978846
  %v5439 = vmul.f32 %v5407, 0.7978846
  %v5440 = vmul.f32 %v5408, 0.7978846
  %v5441 = vtanh.pop %v5409
  %v5442 = vtanh.pop %v5410
  %v5443 = vtanh.pop %v5411
  %v5444 = vtanh.pop %v5412
  %v5445 = vtanh.pop %v5413
  %v5446 = vtanh.pop %v5414
  %v5447 = vtanh.pop %v5415
  %v5448 = vtanh.pop %v5416
  %v5449 = vtanh.pop %v5417
  %v5450 = vtanh.pop %v5418
  %v5451 = vtanh.pop %v5419
  %v5452 = vtanh.pop %v5420
  %v5453 = vtanh.pop %v5421
  %v5454 = vtanh.pop %v5422
  %v5455 = vtanh.pop %v5423
  %v5456 = vtanh.pop %v5424
  %v5457 = vtanh.pop %v5425
  %v5458 = vtanh.pop %v5426
  %v5459 = vtanh.pop %v5427
  %v5460 = vtanh.pop %v5428
  %v5461 = vtanh.pop %v5429
  %v5462 = vtanh.pop %v5430
  %v5463 = vtanh.pop %v5431
  %v5464 = vtanh.pop %v5432
  %v5465 = vtanh.pop %v5433
  %v5466 = vtanh.pop %v5434
  %v5467 = vtanh.pop %v5435
  %v5468 = vtanh.pop %v5436
  %v5469 = vtanh.pop %v5437
  %v5470 = vtanh.pop %v5438
  %v5471 = vtanh.pop %v5439
  %v5472 = vtanh.pop %v5440
  %v5473 = vadd.f32 %v5441, 1.0
  %v5474 = vadd.f32 %v5442, 1.0
  %v5475 = vadd.f32 %v5443, 1.0
  %v5476 = vadd.f32 %v5444, 1.0
  %v5477 = vadd.f32 %v5445, 1.0
  %v5478 = vadd.f32 %v5446, 1.0
  %v5479 = vadd.f32 %v5447, 1.0
  %v5480 = vadd.f32 %v5448, 1.0
  %v5481 = vadd.f32 %v5449, 1.0
  %v5482 = vadd.f32 %v5450, 1.0
  %v5483 = vadd.f32 %v5451, 1.0
  %v5484 = vadd.f32 %v5452, 1.0
  %v5485 = vadd.f32 %v5453, 1.0
  %v5486 = vadd.f32 %v5454, 1.0
  %v5487 = vadd.f32 %v5455, 1.0
  %v5488 = vadd.f32 %v5456, 1.0
  %v5489 = vadd.f32 %v5457, 1.0
  %v5490 = vadd.f32 %v5458, 1.0
  %v5491 = vadd.f32 %v5459, 1.0
  %v5492 = vadd.f32 %v5460, 1.0
  %v5493 = vadd.f32 %v5461, 1.0
  %v5494 = vadd.f32 %v5462, 1.0
  %v5495 = vadd.f32 %v5463, 1.0
  %v5496 = vadd.f32 %v5464, 1.0
  %v5497 = vadd.f32 %v5465, 1.0
  %v5498 = vadd.f32 %v5466, 1.0
  %v5499 = vadd.f32 %v5467, 1.0
  %v5500 = vadd.f32 %v5468, 1.0
  %v5501 = vadd.f32 %v5469, 1.0
  %v5502 = vadd.f32 %v5470, 1.0
  %v5503 = vadd.f32 %v5471, 1.0
  %v5504 = vadd.f32 %v5472, 1.0
  %v5505 = vmul.f32 %v5473, 0.5
  %v5506 = vmul.f32 %v5474, 0.5
  %v5507 = vmul.f32 %v5475, 0.5
  %v5508 = vmul.f32 %v5476, 0.5
  %v5509 = vmul.f32 %v5477, 0.5
  %v5510 = vmul.f32 %v5478, 0.5
  %v5511 = vmul.f32 %v5479, 0.5
  %v5512 = vmul.f32 %v5480, 0.5
  %v5513 = vmul.f32 %v5481, 0.5
  %v5514 = vmul.f32 %v5482, 0.5
  %v5515 = vmul.f32 %v5483, 0.5
  %v5516 = vmul.f32 %v5484, 0.5
  %v5517 = vmul.f32 %v5485, 0.5
  %v5518 = vmul.f32 %v5486, 0.5
  %v5519 = vmul.f32 %v5487, 0.5
  %v5520 = vmul.f32 %v5488, 0.5
  %v5521 = vmul.f32 %v5489, 0.5
  %v5522 = vmul.f32 %v5490, 0.5
  %v5523 = vmul.f32 %v5491, 0.5
  %v5524 = vmul.f32 %v5492, 0.5
  %v5525 = vmul.f32 %v5493, 0.5
  %v5526 = vmul.f32 %v5494, 0.5
  %v5527 = vmul.f32 %v5495, 0.5
  %v5528 = vmul.f32 %v5496, 0.5
  %v5529 = vmul.f32 %v5497, 0.5
  %v5530 = vmul.f32 %v5498, 0.5
  %v5531 = vmul.f32 %v5499, 0.5
  %v5532 = vmul.f32 %v5500, 0.5
  %v5533 = vmul.f32 %v5501, 0.5
  %v5534 = vmul.f32 %v5502, 0.5
  %v5535 = vmul.f32 %v5503, 0.5
  %v5536 = vmul.f32 %v5504, 0.5
  %v5537 = vmul.f32 %v5203, %v5505
  %v5538 = vmul.f32 %v5205, %v5506
  %v5539 = vmul.f32 %v5207, %v5507
  %v5540 = vmul.f32 %v5209, %v5508
  %v5541 = vmul.f32 %v5213, %v5509
  %v5542 = vmul.f32 %v5215, %v5510
  %v5543 = vmul.f32 %v5217, %v5511
  %v5544 = vmul.f32 %v5219, %v5512
  %v5545 = vmul.f32 %v5223, %v5513
  %v5546 = vmul.f32 %v5225, %v5514
  %v5547 = vmul.f32 %v5227, %v5515
  %v5548 = vmul.f32 %v5229, %v5516
  %v5549 = vmul.f32 %v5233, %v5517
  %v5550 = vmul.f32 %v5235, %v5518
  %v5551 = vmul.f32 %v5237, %v5519
  %v5552 = vmul.f32 %v5239, %v5520
  %v5553 = vmul.f32 %v5243, %v5521
  %v5554 = vmul.f32 %v5245, %v5522
  %v5555 = vmul.f32 %v5247, %v5523
  %v5556 = vmul.f32 %v5249, %v5524
  %v5557 = vmul.f32 %v5253, %v5525
  %v5558 = vmul.f32 %v5255, %v5526
  %v5559 = vmul.f32 %v5257, %v5527
  %v5560 = vmul.f32 %v5259, %v5528
  %v5561 = vmul.f32 %v5263, %v5529
  %v5562 = vmul.f32 %v5265, %v5530
  %v5563 = vmul.f32 %v5267, %v5531
  %v5564 = vmul.f32 %v5269, %v5532
  %v5565 = vmul.f32 %v5273, %v5533
  %v5566 = vmul.f32 %v5275, %v5534
  %v5567 = vmul.f32 %v5277, %v5535
  %v5568 = vmul.f32 %v5279, %v5536
  %v5569 = vpack.c.bf16 %v5539, %v5537
  %v5570 = vpack.c.bf16 %v5540, %v5538
  %v5571 = vpack.c.bf16 %v5543, %v5541
  %v5572 = vpack.c.bf16 %v5544, %v5542
  %v5573 = vpack.c.bf16 %v5547, %v5545
  %v5574 = vpack.c.bf16 %v5548, %v5546
  %v5575 = vpack.c.bf16 %v5551, %v5549
  %v5576 = vpack.c.bf16 %v5552, %v5550
  %v5577 = vpack.c.bf16 %v5555, %v5553
  %v5578 = vpack.c.bf16 %v5556, %v5554
  %v5579 = vpack.c.bf16 %v5559, %v5557
  %v5580 = vpack.c.bf16 %v5560, %v5558
  %v5581 = vpack.c.bf16 %v5563, %v5561
  %v5582 = vpack.c.bf16 %v5564, %v5562
  %v5583 = vpack.c.bf16 %v5567, %v5565
  %v5584 = vpack.c.bf16 %v5568, %v5566
  %s5585 = scalar_lea.vmem %s6, 128
  %v5586 = vld [vmem:[%s5585] sm:$0xf]
  %v5587 = vld [vmem:[%s5585 + $0x4] sm:$0xf]
  %v5588 = vld [vmem:[%s5585 + $0x8] sm:$0xf]
  %v5589 = vld [vmem:[%s5585 + $0xc] sm:$0xf]
  %v5590 = vld [vmem:[%s5585 + $0x10] sm:$0xf]
  %v5591 = vld [vmem:[%s5585 + $0x14] sm:$0xf]
  %v5592 = vld [vmem:[%s5585 + $0x18] sm:$0xf]
  %v5593 = vld [vmem:[%s5585 + $0x1c] sm:$0xf]
  %v5594 = vld [vmem:[%s5585 + $0x20] sm:$0xf]
  %v5595 = vld [vmem:[%s5585 + $0x24] sm:$0xf]
  %v5596 = vld [vmem:[%s5585 + $0x28] sm:$0xf]
  %v5597 = vld [vmem:[%s5585 + $0x2c] sm:$0xf]
  %v5598 = vld [vmem:[%s5585 + $0x30] sm:$0xf]
  %v5599 = vld [vmem:[%s5585 + $0x34] sm:$0xf]
  %v5600 = vld [vmem:[%s5585 + $0x38] sm:$0xf]
  %v5601 = vld [vmem:[%s5585 + $0x3c] sm:$0xf]
  %v5602 = vld [vmem:[%s5585 + $0x40] sm:$0xf]
  %v5603 = vld [vmem:[%s5585 + $0x44] sm:$0xf]
  %v5604 = vld [vmem:[%s5585 + $0x48] sm:$0xf]
  %v5605 = vld [vmem:[%s5585 + $0x4c] sm:$0xf]
  %v5606 = vld [vmem:[%s5585 + $0x50] sm:$0xf]
  %v5607 = vld [vmem:[%s5585 + $0x54] sm:$0xf]
  %v5608 = vld [vmem:[%s5585 + $0x58] sm:$0xf]
  %v5609 = vld [vmem:[%s5585 + $0x5c] sm:$0xf]
  %v5610 = vld [vmem:[%s5585 + $0x60] sm:$0xf]
  %v5611 = vld [vmem:[%s5585 + $0x64] sm:$0xf]
  %v5612 = vld [vmem:[%s5585 + $0x68] sm:$0xf]
  %v5613 = vld [vmem:[%s5585 + $0x6c] sm:$0xf]
  %v5614 = vld [vmem:[%s5585 + $0x70] sm:$0xf]
  %v5615 = vld [vmem:[%s5585 + $0x74] sm:$0xf]
  %v5616 = vld [vmem:[%s5585 + $0x78] sm:$0xf]
  %v5617 = vld [vmem:[%s5585 + $0x7c] sm:$0xf]
  %v5618 = vld [vmem:[%s3203 + $0x6] sm:$0x1]
  %v5620 = vlaneseq
  %v5621 = vshrl.u32 %v5620, 7
  %v5622 = vsub.s32 0, %v5621
  %v5623 = vrot.slane %v5618, %v5622
  %v5657 = vunpack.c.l.b16 %v5586
  %v5658 = vunpack.c.l.b16 %v5587
  %v5659 = vunpack.c.l.b16 %v5588
  %v5660 = vunpack.c.l.b16 %v5589
  %v5661 = vunpack.c.l.b16 %v5590
  %v5662 = vunpack.c.l.b16 %v5591
  %v5663 = vunpack.c.l.b16 %v5592
  %v5664 = vunpack.c.l.b16 %v5593
  %v5665 = vunpack.c.l.b16 %v5594
  %v5666 = vunpack.c.l.b16 %v5595
  %v5667 = vunpack.c.l.b16 %v5596
  %v5668 = vunpack.c.l.b16 %v5597
  %v5669 = vunpack.c.l.b16 %v5598
  %v5670 = vunpack.c.l.b16 %v5599
  %v5671 = vunpack.c.l.b16 %v5600
  %v5672 = vunpack.c.l.b16 %v5601
  %v5673 = vunpack.c.l.b16 %v5602
  %v5674 = vunpack.c.l.b16 %v5603
  %v5675 = vunpack.c.l.b16 %v5604
  %v5676 = vunpack.c.l.b16 %v5605
  %v5677 = vunpack.c.l.b16 %v5606
  %v5678 = vunpack.c.l.b16 %v5607
  %v5679 = vunpack.c.l.b16 %v5608
  %v5680 = vunpack.c.l.b16 %v5609
  %v5681 = vunpack.c.l.b16 %v5610
  %v5682 = vunpack.c.l.b16 %v5611
  %v5683 = vunpack.c.l.b16 %v5612
  %v5684 = vunpack.c.l.b16 %v5613
  %v5685 = vunpack.c.l.b16 %v5614
  %v5686 = vunpack.c.l.b16 %v5615
  %v5687 = vunpack.c.l.b16 %v5616
  %v5688 = vunpack.c.l.b16 %v5617
  %v5689 = vpack.c.b16 %v5658, %v5657
  %v5690 = vpack.c.b16 %v5660, %v5659
  %v5691 = vpack.c.b16 %v5662, %v5661
  %v5692 = vpack.c.b16 %v5664, %v5663
  %v5693 = vpack.c.b16 %v5666, %v5665
  %v5694 = vpack.c.b16 %v5668, %v5667
  %v5695 = vpack.c.b16 %v5670, %v5669
  %v5696 = vpack.c.b16 %v5672, %v5671
  %v5697 = vpack.c.b16 %v5674, %v5673
  %v5698 = vpack.c.b16 %v5676, %v5675
  %v5699 = vpack.c.b16 %v5678, %v5677
  %v5700 = vpack.c.b16 %v5680, %v5679
  %v5701 = vpack.c.b16 %v5682, %v5681
  %v5702 = vpack.c.b16 %v5684, %v5683
  %v5703 = vpack.c.b16 %v5686, %v5685
  %v5704 = vpack.c.b16 %v5688, %v5687
  %5721 = vmatprep.subr.bf16.mxu0 0
  %5722 = vmatpush1.bf16.msra.mxu0 %v5689
  %5723 = vmatprep.subr.bf16.mxu0 0
  %5724 = vmatpush1.bf16.msra.mxu0 %v5690
  %5725 = vmatprep.subr.bf16.mxu0 0
  %5726 = vmatpush1.bf16.msra.mxu0 %v5691
  %5727 = vmatprep.subr.bf16.mxu0 0
  %5728 = vmatpush1.bf16.msra.mxu0 %v5692
  %5729 = vmatprep.subr.bf16.mxu0 0
  %5730 = vmatpush1.bf16.msra.mxu0 %v5693
  %5731 = vmatprep.subr.bf16.mxu0 0
  %5732 = vmatpush1.bf16.msra.mxu0 %v5694
  %5733 = vmatprep.subr.bf16.mxu0 0
  %5734 = vmatpush1.bf16.msra.mxu0 %v5695
  %5735 = vmatprep.subr.bf16.mxu0 0
  %5736 = vmatpush1.bf16.msra.mxu0 %v5696
  %5737 = vmatprep.subr.bf16.mxu0 0
  %5738 = vmatpush1.bf16.msra.mxu0 %v5697
  %5739 = vmatprep.subr.bf16.mxu0 0
  %5740 = vmatpush1.bf16.msra.mxu0 %v5698
  %5741 = vmatprep.subr.bf16.mxu0 0
  %5742 = vmatpush1.bf16.msra.mxu0 %v5699
  %5743 = vmatprep.subr.bf16.mxu0 0
  %5744 = vmatpush1.bf16.msra.mxu0 %v5700
  %5745 = vmatprep.subr.bf16.mxu0 0
  %5746 = vmatpush1.bf16.msra.mxu0 %v5701
  %5747 = vmatprep.subr.bf16.mxu0 0
  %5748 = vmatpush1.bf16.msra.mxu0 %v5702
  %5749 = vmatprep.subr.bf16.mxu0 0
  %5750 = vmatpush1.bf16.msra.mxu0 %v5703
  %5751 = vmatprep.subr.bf16.mxu0 0
  %5752 = vmatpush1.bf16.msra.mxu0 %v5704
  %5753 = vmatprep.mubr.bf16.mxu0 %v5570
  %5754 = vmatmul.mubr.bf16.gmra.mrb[0].mxu0 %v5569
  %v5755 = vpop.f32.mrb[0].mxu0
  %v5756 = vadd.f32 %v5623, %v5755
  %v5757 = vpop.f32.mrb[0].mxu0
  %v5758 = vpop.f32.mrb[0].mxu0
  %v5759 = vadd.f32 %v5623, %v5758
  %v5760 = vpop.f32.mrb[0].mxu0
  %5761 = vmatprep.mubr.bf16.mxu0 %v5572
  %5762 = vmatmul.mubr.bf16.gmra.mrb[0].mxu0 %v5571
  %v5763 = vpop.f32.mrb[0].mxu0
  %v5764 = vadd.f32 %v5623, %v5763
  %v5765 = vpop.f32.mrb[0].mxu0
  %v5766 = vpop.f32.mrb[0].mxu0
  %v5767 = vadd.f32 %v5623, %v5766
  %v5768 = vpop.f32.mrb[0].mxu0
  %5769 = vmatprep.mubr.bf16.mxu0 %v5574
  %5770 = vmatmul.mubr.bf16.gmra.mrb[0].mxu0 %v5573
  %v5771 = vpop.f32.mrb[0].mxu0
  %v5772 = vadd.f32 %v5623, %v5771
  %v5773 = vpop.f32.mrb[0].mxu0
  %v5774 = vpop.f32.mrb[0].mxu0
  %v5775 = vadd.f32 %v5623, %v5774
  %v5776 = vpop.f32.mrb[0].mxu0
  %5777 = vmatprep.mubr.bf16.mxu0 %v5576
  %5778 = vmatmul.mubr.bf16.gmra.mrb[0].mxu0 %v5575
  %v5779 = vpop.f32.mrb[0].mxu0
  %v5780 = vadd.f32 %v5623, %v5779
  %v5781 = vpop.f32.mrb[0].mxu0
  %v5782 = vpop.f32.mrb[0].mxu0
  %v5783 = vadd.f32 %v5623, %v5782
  %v5784 = vpop.f32.mrb[0].mxu0
  %5785 = vmatprep.mubr.bf16.mxu0 %v5578
  %5786 = vmatmul.mubr.bf16.gmra.mrb[0].mxu0 %v5577
  %v5787 = vpop.f32.mrb[0].mxu0
  %v5788 = vadd.f32 %v5623, %v5787
  %v5789 = vpop.f32.mrb[0].mxu0
  %v5790 = vpop.f32.mrb[0].mxu0
  %v5791 = vadd.f32 %v5623, %v5790
  %v5792 = vpop.f32.mrb[0].mxu0
  %5793 = vmatprep.mubr.bf16.mxu0 %v5580
  %5794 = vmatmul.mubr.bf16.gmra.mrb[0].mxu0 %v5579
  %v5795 = vpop.f32.mrb[0].mxu0
  %v5796 = vadd.f32 %v5623, %v5795
  %v5797 = vpop.f32.mrb[0].mxu0
  %v5798 = vpop.f32.mrb[0].mxu0
  %v5799 = vadd.f32 %v5623, %v5798
  %v5800 = vpop.f32.mrb[0].mxu0
  %5801 = vmatprep.mubr.bf16.mxu0 %v5582
  %5802 = vmatmul.mubr.bf16.gmra.mrb[0].mxu0 %v5581
  %v5803 = vpop.f32.mrb[0].mxu0
  %v5804 = vadd.f32 %v5623, %v5803
  %v5805 = vpop.f32.mrb[0].mxu0
  %v5806 = vpop.f32.mrb[0].mxu0
  %v5807 = vadd.f32 %v5623, %v5806
  %v5808 = vpop.f32.mrb[0].mxu0
  %5809 = vmatprep.mubr.bf16.mxu0 %v5584
  %5810 = vmatmul.mubr.bf16.gmra.mrb[0].mxu0 %v5583
  %v5811 = vpop.f32.mrb[0].mxu0
  %v5812 = vadd.f32 %v5623, %v5811
  %v5813 = vpop.f32.mrb[0].mxu0
  %v5814 = vpop.f32.mrb[0].mxu0
  %v5815 = vadd.f32 %v5623, %v5814
  %v5816 = vpop.f32.mrb[0].mxu0
  %5817 = vdwg.mxu0
  %v5818 = vadd.f32 %v5756, %v5035
  %v5819 = vadd.f32 %v5759, %v5036
  %v5820 = vadd.f32 %v5764, %v5037
  %v5821 = vadd.f32 %v5767, %v5038
  %v5822 = vadd.f32 %v5772, %v5039
  %v5823 = vadd.f32 %v5775, %v5040
  %v5824 = vadd.f32 %v5780, %v5041
  %v5825 = vadd.f32 %v5783, %v5042
  %v5826 = vadd.f32 %v5788, %v5043
  %v5827 = vadd.f32 %v5791, %v5044
  %v5828 = vadd.f32 %v5796, %v5045
  %v5829 = vadd.f32 %v5799, %v5046
  %v5830 = vadd.f32 %v5804, %v5047
  %v5831 = vadd.f32 %v5807, %v5048
  %v5832 = vadd.f32 %v5812, %v5049
  %v5833 = vadd.f32 %v5815, %v5050
  %v5834 = vld [vmem:[%s3203 + $0x9] sm:$0x1]
  %v5835 = vld [vmem:[%s3203 + $0xa] sm:$0x1]
  %5836 = vadd.xlane.f32.xlu0 %v5818
  %v5837 = vpop.xlane.xlu0 %5836
  %5838 = vadd.xlane.f32.xlu0 %v5819
  %v5839 = vpop.xlane.xlu0 %5838
  %5840 = vadd.xlane.f32.xlu0 %v5820
  %v5841 = vpop.xlane.xlu0 %5840
  %5842 = vadd.xlane.f32.xlu0 %v5821
  %v5843 = vpop.xlane.xlu0 %5842
  %5844 = vadd.xlane.f32.xlu0 %v5822
  %v5845 = vpop.xlane.xlu0 %5844
  %5846 = vadd.xlane.f32.xlu0 %v5823
  %v5847 = vpop.xlane.xlu0 %5846
  %5848 = vadd.xlane.f32.xlu0 %v5824
  %v5849 = vpop.xlane.xlu0 %5848
  %5850 = vadd.xlane.f32.xlu0 %v5825
  %v5851 = vpop.xlane.xlu0 %5850
  %5852 = vadd.xlane.f32.xlu0 %v5826
  %v5853 = vpop.xlane.xlu0 %5852
  %5854 = vadd.xlane.f32.xlu0 %v5827
  %v5855 = vpop.xlane.xlu0 %5854
  %5856 = vadd.xlane.f32.xlu0 %v5828
  %v5857 = vpop.xlane.xlu0 %5856
  %5858 = vadd.xlane.f32.xlu0 %v5829
  %v5859 = vpop.xlane.xlu0 %5858
  %5860 = vadd.xlane.f32.xlu0 %v5830
  %v5861 = vpop.xlane.xlu0 %5860
  %5862 = vadd.xlane.f32.xlu0 %v5831
  %v5863 = vpop.xlane.xlu0 %5862
  %5864 = vadd.xlane.f32.xlu0 %v5832
  %v5865 = vpop.xlane.xlu0 %5864
  %5866 = vadd.xlane.f32.xlu0 %v5833
  %v5867 = vpop.xlane.xlu0 %5866
  %v5868 = vmul.f32 %v5837, %v81
  %v5869 = vmul.f32 %v5839, %v81
  %v5870 = vmul.f32 %v5841, %v81
  %v5871 = vmul.f32 %v5843, %v81
  %v5872 = vmul.f32 %v5845, %v81
  %v5873 = vmul.f32 %v5847, %v81
  %v5874 = vmul.f32 %v5849, %v81
  %v5875 = vmul.f32 %v5851, %v81
  %v5876 = vmul.f32 %v5853, %v81
  %v5877 = vmul.f32 %v5855, %v81
  %v5878 = vmul.f32 %v5857, %v81
  %v5879 = vmul.f32 %v5859, %v81
  %v5880 = vmul.f32 %v5861, %v81
  %v5881 = vmul.f32 %v5863, %v81
  %v5882 = vmul.f32 %v5865, %v81
  %v5883 = vmul.f32 %v5867, %v81
  %v5884 = vsub.f32 %v5818, %v5868
  %v5885 = vsub.f32 %v5819, %v5869
  %v5886 = vsub.f32 %v5820, %v5870
  %v5887 = vsub.f32 %v5821, %v5871
  %v5888 = vsub.f32 %v5822, %v5872
  %v5889 = vsub.f32 %v5823, %v5873
  %v5890 = vsub.f32 %v5824, %v5874
  %v5891 = vsub.f32 %v5825, %v5875
  %v5892 = vsub.f32 %v5826, %v5876
  %v5893 = vsub.f32 %v5827, %v5877
  %v5894 = vsub.f32 %v5828, %v5878
  %v5895 = vsub.f32 %v5829, %v5879
  %v5896 = vsub.f32 %v5830, %v5880
  %v5897 = vsub.f32 %v5831, %v5881
  %v5898 = vsub.f32 %v5832, %v5882
  %v5899 = vsub.f32 %v5833, %v5883
  %v5900 = vmul.f32 %v5884, %v5884
  %v5901 = vmul.f32 %v5885, %v5885
  %v5902 = vmul.f32 %v5886, %v5886
  %v5903 = vmul.f32 %v5887, %v5887
  %v5904 = vmul.f32 %v5888, %v5888
  %v5905 = vmul.f32 %v5889, %v5889
  %v5906 = vmul.f32 %v5890, %v5890
  %v5907 = vmul.f32 %v5891, %v5891
  %v5908 = vmul.f32 %v5892, %v5892
  %v5909 = vmul.f32 %v5893, %v5893
  %v5910 = vmul.f32 %v5894, %v5894
  %v5911 = vmul.f32 %v5895, %v5895
  %v5912 = vmul.f32 %v5896, %v5896
  %v5913 = vmul.f32 %v5897, %v5897
  %v5914 = vmul.f32 %v5898, %v5898
  %v5915 = vmul.f32 %v5899, %v5899
  %5916 = vadd.xlane.f32.xlu0 %v5900
  %v5917 = vpop.xlane.xlu0 %5916
  %5918 = vadd.xlane.f32.xlu0 %v5901
  %v5919 = vpop.xlane.xlu0 %5918
  %5920 = vadd.xlane.f32.xlu0 %v5902
  %v5921 = vpop.xlane.xlu0 %5920
  %5922 = vadd.xlane.f32.xlu0 %v5903
  %v5923 = vpop.xlane.xlu0 %5922
  %5924 = vadd.xlane.f32.xlu0 %v5904
  %v5925 = vpop.xlane.xlu0 %5924
  %5926 = vadd.xlane.f32.xlu0 %v5905
  %v5927 = vpop.xlane.xlu0 %5926
  %5928 = vadd.xlane.f32.xlu0 %v5906
  %v5929 = vpop.xlane.xlu0 %5928
  %5930 = vadd.xlane.f32.xlu0 %v5907
  %v5931 = vpop.xlane.xlu0 %5930
  %5932 = vadd.xlane.f32.xlu0 %v5908
  %v5933 = vpop.xlane.xlu0 %5932
  %5934 = vadd.xlane.f32.xlu0 %v5909
  %v5935 = vpop.xlane.xlu0 %5934
  %5936 = vadd.xlane.f32.xlu0 %v5910
  %v5937 = vpop.xlane.xlu0 %5936
  %5938 = vadd.xlane.f32.xlu0 %v5911
  %v5939 = vpop.xlane.xlu0 %5938
  %5940 = vadd.xlane.f32.xlu0 %v5912
  %v5941 = vpop.xlane.xlu0 %5940
  %5942 = vadd.xlane.f32.xlu0 %v5913
  %v5943 = vpop.xlane.xlu0 %5942
  %5944 = vadd.xlane.f32.xlu0 %v5914
  %v5945 = vpop.xlane.xlu0 %5944
  %5946 = vadd.xlane.f32.xlu0 %v5915
  %v5947 = vpop.xlane.xlu0 %5946
  %v5948 = vmul.f32 %v5917, %v81
  %v5949 = vmul.f32 %v5919, %v81
  %v5950 = vmul.f32 %v5921, %v81
  %v5951 = vmul.f32 %v5923, %v81
  %v5952 = vmul.f32 %v5925, %v81
  %v5953 = vmul.f32 %v5927, %v81
  %v5954 = vmul.f32 %v5929, %v81
  %v5955 = vmul.f32 %v5931, %v81
  %v5956 = vmul.f32 %v5933, %v81
  %v5957 = vmul.f32 %v5935, %v81
  %v5958 = vmul.f32 %v5937, %v81
  %v5959 = vmul.f32 %v5939, %v81
  %v5960 = vmul.f32 %v5941, %v81
  %v5961 = vmul.f32 %v5943, %v81
  %v5962 = vmul.f32 %v5945, %v81
  %v5963 = vmul.f32 %v5947, %v81
  %v5964 = vadd.f32 %v5948, 1e-12
  %v5965 = vadd.f32 %v5949, 1e-12
  %v5966 = vadd.f32 %v5950, 1e-12
  %v5967 = vadd.f32 %v5951, 1e-12
  %v5968 = vadd.f32 %v5952, 1e-12
  %v5969 = vadd.f32 %v5953, 1e-12
  %v5970 = vadd.f32 %v5954, 1e-12
  %v5971 = vadd.f32 %v5955, 1e-12
  %v5972 = vadd.f32 %v5956, 1e-12
  %v5973 = vadd.f32 %v5957, 1e-12
  %v5974 = vadd.f32 %v5958, 1e-12
  %v5975 = vadd.f32 %v5959, 1e-12
  %v5976 = vadd.f32 %v5960, 1e-12
  %v5977 = vadd.f32 %v5961, 1e-12
  %v5978 = vadd.f32 %v5962, 1e-12
  %v5979 = vadd.f32 %v5963, 1e-12
  %v5980 = vrsqrt.pop %v5964
  %v5981 = vrsqrt.pop %v5965
  %v5982 = vrsqrt.pop %v5966
  %v5983 = vrsqrt.pop %v5967
  %v5984 = vrsqrt.pop %v5968
  %v5985 = vrsqrt.pop %v5969
  %v5986 = vrsqrt.pop %v5970
  %v5987 = vrsqrt.pop %v5971
  %v5988 = vrsqrt.pop %v5972
  %v5989 = vrsqrt.pop %v5973
  %v5990 = vrsqrt.pop %v5974
  %v5991 = vrsqrt.pop %v5975
  %v5992 = vrsqrt.pop %v5976
  %v5993 = vrsqrt.pop %v5977
  %v5994 = vrsqrt.pop %v5978
  %v5995 = vrsqrt.pop %v5979
  %v5996 = vmul.f32 %v5884, %v5980
  %v5997 = vmul.f32 %v5885, %v5981
  %v5998 = vmul.f32 %v5886, %v5982
  %v5999 = vmul.f32 %v5887, %v5983
  %v6000 = vmul.f32 %v5888, %v5984
  %v6001 = vmul.f32 %v5889, %v5985
  %v6002 = vmul.f32 %v5890, %v5986
  %v6003 = vmul.f32 %v5891, %v5987
  %v6004 = vmul.f32 %v5892, %v5988
  %v6005 = vmul.f32 %v5893, %v5989
  %v6006 = vmul.f32 %v5894, %v5990
  %v6007 = vmul.f32 %v5895, %v5991
  %v6008 = vmul.f32 %v5896, %v5992
  %v6009 = vmul.f32 %v5897, %v5993
  %v6010 = vmul.f32 %v5898, %v5994
  %v6011 = vmul.f32 %v5899, %v5995
  %v6013 = vlaneseq
  %v6014 = vshrl.u32 %v6013, 7
  %v6015 = vsub.s32 0, %v6014
  %v6016 = vrot.slane %v5834, %v6015
  %v6018 = vmul.f32 %v5996, %v6016
  %v6019 = vmul.f32 %v5997, %v6016
  %v6020 = vmul.f32 %v5998, %v6016
  %v6021 = vmul.f32 %v5999, %v6016
  %v6022 = vmul.f32 %v6000, %v6016
  %v6023 = vmul.f32 %v6001, %v6016
  %v6024 = vmul.f32 %v6002, %v6016
  %v6025 = vmul.f32 %v6003, %v6016
  %v6026 = vmul.f32 %v6004, %v6016
  %v6027 = vmul.f32 %v6005, %v6016
  %v6028 = vmul.f32 %v6006, %v6016
  %v6029 = vmul.f32 %v6007, %v6016
  %v6030 = vmul.f32 %v6008, %v6016
  %v6031 = vmul.f32 %v6009, %v6016
  %v6032 = vmul.f32 %v6010, %v6016
  %v6033 = vmul.f32 %v6011, %v6016
  %v6035 = vlaneseq
  %v6036 = vshrl.u32 %v6035, 7
  %v6037 = vsub.s32 0, %v6036
  %v6038 = vrot.slane %v5835, %v6037
  %v6040 = vadd.f32 %v6018, %v6038
  %v6041 = vadd.f32 %v6019, %v6038
  %v6042 = vadd.f32 %v6020, %v6038
  %v6043 = vadd.f32 %v6021, %v6038
  %v6044 = vadd.f32 %v6022, %v6038
  %v6045 = vadd.f32 %v6023, %v6038
  %v6046 = vadd.f32 %v6024, %v6038
  %v6047 = vadd.f32 %v6025, %v6038
  %v6048 = vadd.f32 %v6026, %v6038
  %v6049 = vadd.f32 %v6027, %v6038
  %v6050 = vadd.f32 %v6028, %v6038
  %v6051 = vadd.f32 %v6029, %v6038
  %v6052 = vadd.f32 %v6030, %v6038
  %v6053 = vadd.f32 %v6031, %v6038
  %v6054 = vadd.f32 %v6032, %v6038
  %v6055 = vadd.f32 %v6033, %v6038
  %6056 = vst [vmem:[%s8] sm:$0xff] %v6040
  %6057 = vst [vmem:[%s8 + $0x8] sm:$0xff] %v6041
  %6058 = vst [vmem:[%s8 + $0x10] sm:$0xff] %v6042
  %6059 = vst [vmem:[%s8 + $0x18] sm:$0xff] %v6043
  %6060 = vst [vmem:[%s8 + $0x20] sm:$0xff] %v6044
  %6061 = vst [vmem:[%s8 + $0x28] sm:$0xff] %v6045
  %6062 = vst [vmem:[%s8 + $0x30] sm:$0xff] %v6046
  %6063 = vst [vmem:[%s8 + $0x38] sm:$0xff] %v6047
  %6064 = vst [vmem:[%s8 + $0x40] sm:$0xff] %v6048
  %6065 = vst [vmem:[%s8 + $0x48] sm:$0xff] %v6049
  %6066 = vst [vmem:[%s8 + $0x50] sm:$0xff] %v6050
  %6067 = vst [vmem:[%s8 + $0x58] sm:$0xff] %v6051
  %6068 = vst [vmem:[%s8 + $0x60] sm:$0xff] %v6052
  %6069 = vst [vmem:[%s8 + $0x68] sm:$0xff] %v6053
  %6070 = vst [vmem:[%s8 + $0x70] sm:$0xff] %v6054
  %6071 = vst [vmem:[%s8 + $0x78] sm:$0xff] %v6055
  // Predicated region
  $region34: #{spider_encoder_forward.1} parent=0 // pred_check
    _
  $region35: #{spider_encoder_forward.1} parent=0 // pred_check_branch
    %6073 = sbr.rel (0) target = $region37
  $region36: #{spider_encoder_forward.1} parent=0 // pred_region
    _
  $region37: #{spider_encoder_forward.1} parent=0 // pred_fallthru
    _
  // Predicated region
  $region38: #{spider_encoder_forward.1} parent=0 // pred_check
    _
  $region39: #{spider_encoder_forward.1} parent=0 // pred_check_branch
    %6075 = sbr.rel (0) target = $region41
  $region40: #{spider_encoder_forward.1} parent=0 // pred_region
    _
  $region41: #{spider_encoder_forward.1} parent=0 // pred_fallthru
    _

</llo_original>
